<compile_context>
chip_gen: v5e
topology: v5e:2x2
jax: 0.10.0
libtpu: 0.0.40
codegen_flags: <defaults>
</compile_context>

<pallas_src>
import numpy as np
import jax
import jax.numpy as jnp
from jax import lax
from jax.experimental import pallas as pl
from jax.experimental.pallas import tpu as pltpu

MAX_LOOKBACK = 128     # max_lookback_size
BN_EPS = 1e-5
VMEM_LIMIT_BYTES = 32 * 1024 * 1024   # safe scoped-VMEM request on v5e/v6e/v7x


# ------------------------------- Pallas kernels ------------------------------ #
def feature_stats_kernel(lbt_ref, w_ref, feat_ref, stat_ref):
    """Pass 1: sliding-window features + fused BN partial stats for ONE batch item.

    Layout: time on LANES, (feature, channel) on sublanes -> lane-dense compute and
    stores, lane-parallel reductions, no in-kernel reshapes.

      lbt_ref  : (1, C, L+T)   compact lookback, transposed (NO host im2col)
      w_ref    : (F, C, L)     normalized per-feature/per-channel lookback weights
      feat_ref : (1, F, C, T)  raw (pre-BatchNorm) feature values
      stat_ref : (1, 2, F, C)  per-batch-item partial [sum, sum-of-squares] over time
    """
    F, C, L = w_ref.shape
    T = feat_ref.shape[-1]

    lbt = lbt_ref[0]          # (C, L+T)  -- loaded once, sliced in-register below
    w = w_ref[...]            # (F, C, L)

    # Sliding-window weighted sum: feat[f, c, t] = sum_a lbt[c, t + a] * w[f, c, a].
    # Statically unrolled over the L lookback taps; each tap is a full-lane VPU
    # multiply-add on a (F, C, T) tile.  Compact lookback means HBM reads per item are
    # O((L+T)*C) instead of the previous im2col's O(T*L*C).
    # TODO(synk): for very large L switch to lax.fori_loop with a roll-carried window;
    #             for large F*C switch to a banded block-diagonal MXU formulation.
    acc = jnp.zeros((F, C, T), dtype=jnp.float32)
    for a in range(L):
        acc = acc + lbt[None, :, a:a + T] * w[:, :, a:a + 1]

    feat_ref[0] = acc

    # BatchNorm statistics fused into the epilogue (lane-axis reductions, per (f, c)).
    # The wrapper combines the per-item partials into exact whole-batch statistics, so
    # tiling never silently degrades batch stats into per-tile stats.
    stat_ref[0, 0] = jnp.sum(acc, axis=-1)
    stat_ref[0, 1] = jnp.sum(acc * acc, axis=-1)


def bn_normalize_kernel(feat_ref, mean_ref, rstd_ref, out_ref):
    """Pass 2: apply BatchNorm1d (batch stats, weight=1, bias=0); parallel over B.

      feat_ref : (1, F, C, T)   raw features for one batch item
      mean_ref : (F, C, 1)      whole-batch mean per (feature, channel)
      rstd_ref : (F, C, 1)      1 / sqrt(var + eps) per (feature, channel)
      out_ref  : (1, F, C, T)   normalized features (lane-dense store)
    """
    out_ref[0] = (feat_ref[0] - mean_ref[...]) * rstd_ref[...]


# --------------------------------- wrapper ----------------------------------- #
def feature_layer_forward(x, lookback, weights):
    """x: (B,T,C); lookback: (B, L+T, C); weights: (F, L, C) -> (B, T, C*(1+F))."""
    B, T, C = x.shape
    F, L, _ = weights.shape

    # One-off XLA transposes into the lane-dense, time-on-lanes operand layouts.
    lbt = jnp.transpose(lookback, (0, 2, 1))      # (B, C, L+T)
    wt = jnp.transpose(weights, (0, 2, 1))        # (F, C, L)
    # TODO(synk): for production, stream lbt in bfloat16 (halves lookback bytes) while
    #             keeping all feature/BN math in f32; kept f32 here for a tight check.

    compiler_params = pltpu.CompilerParams(
        dimension_semantics=("parallel",),        # no cross-step accumulator -> both v7x TCs busy
        vmem_limit_bytes=VMEM_LIMIT_BYTES,
    )

    # ---- Pass 1: features + fused per-item BN partial statistics ----
    feat, stats = pl.pallas_call(
        feature_stats_kernel,
        grid=(B,),
        in_specs=[
            pl.BlockSpec((1, C, L + T), lambda b: (b, 0, 0)),   # streamed / double-buffered
            pl.BlockSpec((F, C, L), lambda b: (0, 0, 0)),       # resident (same block every step)
        ],
        out_specs=[
            pl.BlockSpec((1, F, C, T), lambda b: (b, 0, 0, 0)),
            pl.BlockSpec((1, 2, F, C), lambda b: (b, 0, 0, 0)),
        ],
        out_shape=(
            jax.ShapeDtypeStruct((B, F, C, T), jnp.float32),
            jax.ShapeDtypeStruct((B, 2, F, C), jnp.float32),
        ),
        compiler_params=compiler_params,
    )(lbt, wt)

    # Combine per-item partials into exact whole-batch BatchNorm statistics (16 numbers).
    # NOTE: E[x^2] - mean^2 can cancel for large-mean features; fine here (standardized
    # data, f32 accumulation) -- switch to a two-sweep variance if that ever changes.
    n = float(B * T)
    tot = jnp.sum(stats, axis=0)                  # (2, F, C)
    mean = tot[0] / n                             # (F, C)
    var = jnp.maximum(tot[1] / n - mean * mean, 0.0)
    rstd = lax.rsqrt(var + BN_EPS)

    # ---- Pass 2: normalize (training-mode BatchNorm1d, weight=1 / bias=0) ----
    normed = pl.pallas_call(
        bn_normalize_kernel,
        grid=(B,),
        in_specs=[
            pl.BlockSpec((1, F, C, T), lambda b: (b, 0, 0, 0)),
            pl.BlockSpec((F, C, 1), lambda b: (0, 0, 0)),
            pl.BlockSpec((F, C, 1), lambda b: (0, 0, 0)),
        ],
        out_specs=pl.BlockSpec((1, F, C, T), lambda b: (b, 0, 0, 0)),
        out_shape=jax.ShapeDtypeStruct((B, F, C, T), jnp.float32),
        compiler_params=compiler_params,
    )(feat, mean[..., None], rstd[..., None])

    # Final (B, T, C*(1+F)) assembly in the wrapper: lane-dense kernels, x never copied
    # through the kernel.  Column order matches torch: [x | feat_0 chans | feat_1 chans].
    feat_btd = jnp.transpose(normed, (0, 3, 1, 2)).reshape(B, T, F * C)
    return jnp.concatenate([x, feat_btd], axis=-1)


feature_layer_forward_jit = jax.jit(feature_layer_forward)


# -------------------------------- glue / setup ------------------------------- #
def init_constrained_param(key, c, lo, hi):
    """Match torch init: init = lo + (hi-lo)*U(0,1); store logit((init-lo)/(hi-lo))."""
    u = jax.random.uniform(key, (c,), dtype=jnp.float32, minval=1e-4, maxval=1.0 - 1e-4)
    raw = jnp.log(u / (1.0 - u))                       # the nn.Parameter value
    value = lo + jax.nn.sigmoid(raw) * (hi - lo)       # _get_param() recovery
    return value


def build_feature_weights(window_size, alpha, L):
    """Normalized per-channel lookback weights (ordered oldest->newest, ages L..1)."""
    pos = jnp.arange(L, dtype=jnp.float32)             # 0 .. L-1
    age = (L - pos)[:, None]                           # L .. 1; age 1 == most recent sample

    # feature 0: differentiable soft rolling mean over ~window_size most recent samples
    w_roll = jax.nn.sigmoid(window_size[None, :] - age)        # (L, C)
    w_roll = w_roll / (jnp.sum(w_roll, axis=0, keepdims=True) + 1e-8)

    # feature 1: exponentially-weighted mean with per-channel alpha
    w_ewm = alpha[None, :] * (1.0 - alpha[None, :]) ** (age - 1.0)
    w_ewm = w_ewm / (jnp.sum(w_ewm, axis=0, keepdims=True) + 1e-8)

    return jnp.stack([w_roll, w_ewm], axis=0)          # (F=2, L, C)


def build_lookback(full_series_np, indices_np, L):
    """Replicates _get_batch_lookback (pad_mode='zeros'): compact (B, L+T, C) lookback.
    Kept host-side, mirroring the torch module's python/.item() indexing loop."""
    B = indices_np.shape[0]
    C = full_series_np.shape[1]
    T = int(indices_np[0, 1] - indices_np[0, 0])
    lb = np.zeros((B, L + T, C), dtype=np.float32)
    for b in range(B):
        s = int(indices_np[b, 0])
        e = int(indices_np[b, 1])
        win_start = max(0, s - L)
        pad = abs(min(s - L, 0))
        lb[b, pad:, :] = full_series_np[win_start:e]
    return jnp.asarray(lb)


def reference_forward(x, lookback_batch, weights):
    """Pure numpy reference of the same semantics (computed from the compact lookback)."""
    x = np.asarray(x); lb = np.asarray(lookback_batch); w = np.asarray(weights)
    B, T, C = x.shape
    F, L, _ = w.shape
    outs = [x]
    for f in range(F):
        feat = np.zeros((B, T, C), np.float32)
        for t in range(T):
            feat[:, t, :] = (lb[:, t:t + L, :] * w[f][None]).sum(1)
        mean = feat.mean(axis=(0, 1), keepdims=True)
        var = feat.var(axis=(0, 1), keepdims=True)     # biased, like BatchNorm batch stats
        outs.append((feat - mean) / np.sqrt(var + BN_EPS))
    return np.concatenate(outs, axis=-1)


# ----------------------------------- main ------------------------------------ #
if __name__ == "__main__":
    key = jax.random.PRNGKey(0)
    k_ws, k_alpha, k_series = jax.random.split(key, 3)

    B, T, C = 2, 8, 4          # batch, seq_len, input_dim
    S = 48                     # full series length
    L = MAX_LOOKBACK
    F = 2                      # number of feature configs -> output_dim = C * (1 + F) = 12

    # Deterministic learnable parameters (shapes: (input_dim,) each, as in __init__).
    window_size = init_constrained_param(k_ws, C, 1.0, 64.0)      # 'rollmean_window_size'
    alpha = init_constrained_param(k_alpha, C, 0.01, 0.99)        # 'ewm_alpha'
    weights = build_feature_weights(window_size, alpha, L)        # (F, L, C)

    # Deterministic data.
    full_series = jax.random.normal(k_series, (S, C), dtype=jnp.float32)
    indices = jnp.array([[10, 18], [40, 48]], dtype=jnp.int32)    # (B, 2), both windows len T
    fs_np = np.asarray(full_series)
    idx_np = np.asarray(indices)
    x = jnp.stack([full_series[int(idx_np[b, 0]):int(idx_np[b, 1])] for b in range(B)], axis=0)

    lookback_batch = build_lookback(fs_np, idx_np, L)             # (B, L+T, C)

    out = feature_layer_forward_jit(x, lookback_batch, weights)
    out = jax.block_until_ready(out)

    assert out.shape == (B, T, C * (1 + F)), out.shape

    ref = reference_forward(x, lookback_batch, weights)
    np.testing.assert_allclose(np.asarray(out), ref, rtol=5e-3, atol=5e-3)

    print("KERNEL_OK")
</pallas_src>

<mosaic_0001>
module attributes {stable_mosaic.version = 11 : i64} {
  func.func @feature_stats_kernel(%arg0: i32, %arg1: memref<1x4x136xf32, #tpu.memory_space<vmem>>, %arg2: memref<2x4x128xf32, #tpu.memory_space<vmem>>, %arg3: memref<1x2x4x8xf32, #tpu.memory_space<vmem>>, %arg4: memref<1x2x2x4xf32, #tpu.memory_space<vmem>>) attributes {dimension_semantics = [#tpu.dimension_semantics<parallel>], iteration_bounds = array<i64: 2>, scalar_prefetch = 0 : i64, scratch_operands = 0 : i64, tpu.core_type = #tpu.core_type<tc>, window_params = [{transform_indices = @transform_0, window_bounds = array<i64: 1, 4, 136>}, {pipeline_mode = #tpu.pipeline_mode<synchronous>, transform_indices = @transform_1, window_bounds = array<i64: 2, 4, 128>}, {transform_indices = @transform_2, window_bounds = array<i64: 1, 2, 4, 8>}, {transform_indices = @transform_3, window_bounds = array<i64: 1, 2, 2, 4>}]} {
    %c0 = arith.constant 0 : index
    %c0_0 = arith.constant 0 : index
    %c0_1 = arith.constant 0 : index
    %0 = vector.load %arg1[%c0, %c0_0, %c0_1] : memref<1x4x136xf32, #tpu.memory_space<vmem>>, vector<1x4x136xf32>
    %1 = vector.shape_cast %0 : vector<1x4x136xf32> to vector<4x136xf32>
    %c0_2 = arith.constant 0 : index
    %c0_3 = arith.constant 0 : index
    %c0_4 = arith.constant 0 : index
    %2 = vector.load %arg2[%c0_2, %c0_3, %c0_4] : memref<2x4x128xf32, #tpu.memory_space<vmem>>, vector<2x4x128xf32>
    %cst = arith.constant 0.000000e+00 : f32
    %3 = vector.broadcast %cst : f32 to vector<2x4x8xf32>
    %4 = vector.extract_strided_slice %1 {offsets = [0, 0], sizes = [4, 8], strides = [1, 1]} : vector<4x136xf32> to vector<4x8xf32>
    %5 = vector.shape_cast %4 : vector<4x8xf32> to vector<1x4x8xf32>
    %6 = vector.extract_strided_slice %2 {offsets = [0, 0, 0], sizes = [2, 4, 1], strides = [1, 1, 1]} : vector<2x4x128xf32> to vector<2x4x1xf32>
    %7 = vector.broadcast %5 : vector<1x4x8xf32> to vector<2x4x8xf32>
    %8 = vector.broadcast %6 : vector<2x4x1xf32> to vector<2x4x8xf32>
    %9 = arith.mulf %7, %8 : vector<2x4x8xf32>
    %10 = arith.addf %3, %9 : vector<2x4x8xf32>
    %11 = vector.extract_strided_slice %1 {offsets = [0, 1], sizes = [4, 8], strides = [1, 1]} : vector<4x136xf32> to vector<4x8xf32>
    %12 = vector.shape_cast %11 : vector<4x8xf32> to vector<1x4x8xf32>
    %13 = vector.extract_strided_slice %2 {offsets = [0, 0, 1], sizes = [2, 4, 1], strides = [1, 1, 1]} : vector<2x4x128xf32> to vector<2x4x1xf32>
    %14 = vector.broadcast %12 : vector<1x4x8xf32> to vector<2x4x8xf32>
    %15 = vector.broadcast %13 : vector<2x4x1xf32> to vector<2x4x8xf32>
    %16 = arith.mulf %14, %15 : vector<2x4x8xf32>
    %17 = arith.addf %10, %16 : vector<2x4x8xf32>
    %18 = vector.extract_strided_slice %1 {offsets = [0, 2], sizes = [4, 8], strides = [1, 1]} : vector<4x136xf32> to vector<4x8xf32>
    %19 = vector.shape_cast %18 : vector<4x8xf32> to vector<1x4x8xf32>
    %20 = vector.extract_strided_slice %2 {offsets = [0, 0, 2], sizes = [2, 4, 1], strides = [1, 1, 1]} : vector<2x4x128xf32> to vector<2x4x1xf32>
    %21 = vector.broadcast %19 : vector<1x4x8xf32> to vector<2x4x8xf32>
    %22 = vector.broadcast %20 : vector<2x4x1xf32> to vector<2x4x8xf32>
    %23 = arith.mulf %21, %22 : vector<2x4x8xf32>
    %24 = arith.addf %17, %23 : vector<2x4x8xf32>
    %25 = vector.extract_strided_slice %1 {offsets = [0, 3], sizes = [4, 8], strides = [1, 1]} : vector<4x136xf32> to vector<4x8xf32>
    %26 = vector.shape_cast %25 : vector<4x8xf32> to vector<1x4x8xf32>
    %27 = vector.extract_strided_slice %2 {offsets = [0, 0, 3], sizes = [2, 4, 1], strides = [1, 1, 1]} : vector<2x4x128xf32> to vector<2x4x1xf32>
    %28 = vector.broadcast %26 : vector<1x4x8xf32> to vector<2x4x8xf32>
    %29 = vector.broadcast %27 : vector<2x4x1xf32> to vector<2x4x8xf32>
    %30 = arith.mulf %28, %29 : vector<2x4x8xf32>
    %31 = arith.addf %24, %30 : vector<2x4x8xf32>
    %32 = vector.extract_strided_slice %1 {offsets = [0, 4], sizes = [4, 8], strides = [1, 1]} : vector<4x136xf32> to vector<4x8xf32>
    %33 = vector.shape_cast %32 : vector<4x8xf32> to vector<1x4x8xf32>
    %34 = vector.extract_strided_slice %2 {offsets = [0, 0, 4], sizes = [2, 4, 1], strides = [1, 1, 1]} : vector<2x4x128xf32> to vector<2x4x1xf32>
    %35 = vector.broadcast %33 : vector<1x4x8xf32> to vector<2x4x8xf32>
    %36 = vector.broadcast %34 : vector<2x4x1xf32> to vector<2x4x8xf32>
    %37 = arith.mulf %35, %36 : vector<2x4x8xf32>
    %38 = arith.addf %31, %37 : vector<2x4x8xf32>
    %39 = vector.extract_strided_slice %1 {offsets = [0, 5], sizes = [4, 8], strides = [1, 1]} : vector<4x136xf32> to vector<4x8xf32>
    %40 = vector.shape_cast %39 : vector<4x8xf32> to vector<1x4x8xf32>
    %41 = vector.extract_strided_slice %2 {offsets = [0, 0, 5], sizes = [2, 4, 1], strides = [1, 1, 1]} : vector<2x4x128xf32> to vector<2x4x1xf32>
    %42 = vector.broadcast %40 : vector<1x4x8xf32> to vector<2x4x8xf32>
    %43 = vector.broadcast %41 : vector<2x4x1xf32> to vector<2x4x8xf32>
    %44 = arith.mulf %42, %43 : vector<2x4x8xf32>
    %45 = arith.addf %38, %44 : vector<2x4x8xf32>
    %46 = vector.extract_strided_slice %1 {offsets = [0, 6], sizes = [4, 8], strides = [1, 1]} : vector<4x136xf32> to vector<4x8xf32>
    %47 = vector.shape_cast %46 : vector<4x8xf32> to vector<1x4x8xf32>
    %48 = vector.extract_strided_slice %2 {offsets = [0, 0, 6], sizes = [2, 4, 1], strides = [1, 1, 1]} : vector<2x4x128xf32> to vector<2x4x1xf32>
    %49 = vector.broadcast %47 : vector<1x4x8xf32> to vector<2x4x8xf32>
    %50 = vector.broadcast %48 : vector<2x4x1xf32> to vector<2x4x8xf32>
    %51 = arith.mulf %49, %50 : vector<2x4x8xf32>
    %52 = arith.addf %45, %51 : vector<2x4x8xf32>
    %53 = vector.extract_strided_slice %1 {offsets = [0, 7], sizes = [4, 8], strides = [1, 1]} : vector<4x136xf32> to vector<4x8xf32>
    %54 = vector.shape_cast %53 : vector<4x8xf32> to vector<1x4x8xf32>
    %55 = vector.extract_strided_slice %2 {offsets = [0, 0, 7], sizes = [2, 4, 1], strides = [1, 1, 1]} : vector<2x4x128xf32> to vector<2x4x1xf32>
    %56 = vector.broadcast %54 : vector<1x4x8xf32> to vector<2x4x8xf32>
    %57 = vector.broadcast %55 : vector<2x4x1xf32> to vector<2x4x8xf32>
    %58 = arith.mulf %56, %57 : vector<2x4x8xf32>
    %59 = arith.addf %52, %58 : vector<2x4x8xf32>
    %60 = vector.extract_strided_slice %1 {offsets = [0, 8], sizes = [4, 8], strides = [1, 1]} : vector<4x136xf32> to vector<4x8xf32>
    %61 = vector.shape_cast %60 : vector<4x8xf32> to vector<1x4x8xf32>
    %62 = vector.extract_strided_slice %2 {offsets = [0, 0, 8], sizes = [2, 4, 1], strides = [1, 1, 1]} : vector<2x4x128xf32> to vector<2x4x1xf32>
    %63 = vector.broadcast %61 : vector<1x4x8xf32> to vector<2x4x8xf32>
    %64 = vector.broadcast %62 : vector<2x4x1xf32> to vector<2x4x8xf32>
    %65 = arith.mulf %63, %64 : vector<2x4x8xf32>
    %66 = arith.addf %59, %65 : vector<2x4x8xf32>
    %67 = vector.extract_strided_slice %1 {offsets = [0, 9], sizes = [4, 8], strides = [1, 1]} : vector<4x136xf32> to vector<4x8xf32>
    %68 = vector.shape_cast %67 : vector<4x8xf32> to vector<1x4x8xf32>
    %69 = vector.extract_strided_slice %2 {offsets = [0, 0, 9], sizes = [2, 4, 1], strides = [1, 1, 1]} : vector<2x4x128xf32> to vector<2x4x1xf32>
    %70 = vector.broadcast %68 : vector<1x4x8xf32> to vector<2x4x8xf32>
    %71 = vector.broadcast %69 : vector<2x4x1xf32> to vector<2x4x8xf32>
    %72 = arith.mulf %70, %71 : vector<2x4x8xf32>
    %73 = arith.addf %66, %72 : vector<2x4x8xf32>
    %74 = vector.extract_strided_slice %1 {offsets = [0, 10], sizes = [4, 8], strides = [1, 1]} : vector<4x136xf32> to vector<4x8xf32>
    %75 = vector.shape_cast %74 : vector<4x8xf32> to vector<1x4x8xf32>
    %76 = vector.extract_strided_slice %2 {offsets = [0, 0, 10], sizes = [2, 4, 1], strides = [1, 1, 1]} : vector<2x4x128xf32> to vector<2x4x1xf32>
    %77 = vector.broadcast %75 : vector<1x4x8xf32> to vector<2x4x8xf32>
    %78 = vector.broadcast %76 : vector<2x4x1xf32> to vector<2x4x8xf32>
    %79 = arith.mulf %77, %78 : vector<2x4x8xf32>
    %80 = arith.addf %73, %79 : vector<2x4x8xf32>
    %81 = vector.extract_strided_slice %1 {offsets = [0, 11], sizes = [4, 8], strides = [1, 1]} : vector<4x136xf32> to vector<4x8xf32>
    %82 = vector.shape_cast %81 : vector<4x8xf32> to vector<1x4x8xf32>
    %83 = vector.extract_strided_slice %2 {offsets = [0, 0, 11], sizes = [2, 4, 1], strides = [1, 1, 1]} : vector<2x4x128xf32> to vector<2x4x1xf32>
    %84 = vector.broadcast %82 : vector<1x4x8xf32> to vector<2x4x8xf32>
    %85 = vector.broadcast %83 : vector<2x4x1xf32> to vector<2x4x8xf32>
    %86 = arith.mulf %84, %85 : vector<2x4x8xf32>
    %87 = arith.addf %80, %86 : vector<2x4x8xf32>
    %88 = vector.extract_strided_slice %1 {offsets = [0, 12], sizes = [4, 8], strides = [1, 1]} : vector<4x136xf32> to vector<4x8xf32>
    %89 = vector.shape_cast %88 : vector<4x8xf32> to vector<1x4x8xf32>
    %90 = vector.extract_strided_slice %2 {offsets = [0, 0, 12], sizes = [2, 4, 1], strides = [1, 1, 1]} : vector<2x4x128xf32> to vector<2x4x1xf32>
    %91 = vector.broadcast %89 : vector<1x4x8xf32> to vector<2x4x8xf32>
    %92 = vector.broadcast %90 : vector<2x4x1xf32> to vector<2x4x8xf32>
    %93 = arith.mulf %91, %92 : vector<2x4x8xf32>
    %94 = arith.addf %87, %93 : vector<2x4x8xf32>
    %95 = vector.extract_strided_slice %1 {offsets = [0, 13], sizes = [4, 8], strides = [1, 1]} : vector<4x136xf32> to vector<4x8xf32>
    %96 = vector.shape_cast %95 : vector<4x8xf32> to vector<1x4x8xf32>
    %97 = vector.extract_strided_slice %2 {offsets = [0, 0, 13], sizes = [2, 4, 1], strides = [1, 1, 1]} : vector<2x4x128xf32> to vector<2x4x1xf32>
    %98 = vector.broadcast %96 : vector<1x4x8xf32> to vector<2x4x8xf32>
    %99 = vector.broadcast %97 : vector<2x4x1xf32> to vector<2x4x8xf32>
    %100 = arith.mulf %98, %99 : vector<2x4x8xf32>
    %101 = arith.addf %94, %100 : vector<2x4x8xf32>
    %102 = vector.extract_strided_slice %1 {offsets = [0, 14], sizes = [4, 8], strides = [1, 1]} : vector<4x136xf32> to vector<4x8xf32>
    %103 = vector.shape_cast %102 : vector<4x8xf32> to vector<1x4x8xf32>
    %104 = vector.extract_strided_slice %2 {offsets = [0, 0, 14], sizes = [2, 4, 1], strides = [1, 1, 1]} : vector<2x4x128xf32> to vector<2x4x1xf32>
    %105 = vector.broadcast %103 : vector<1x4x8xf32> to vector<2x4x8xf32>
    %106 = vector.broadcast %104 : vector<2x4x1xf32> to vector<2x4x8xf32>
    %107 = arith.mulf %105, %106 : vector<2x4x8xf32>
    %108 = arith.addf %101, %107 : vector<2x4x8xf32>
    %109 = vector.extract_strided_slice %1 {offsets = [0, 15], sizes = [4, 8], strides = [1, 1]} : vector<4x136xf32> to vector<4x8xf32>
    %110 = vector.shape_cast %109 : vector<4x8xf32> to vector<1x4x8xf32>
    %111 = vector.extract_strided_slice %2 {offsets = [0, 0, 15], sizes = [2, 4, 1], strides = [1, 1, 1]} : vector<2x4x128xf32> to vector<2x4x1xf32>
    %112 = vector.broadcast %110 : vector<1x4x8xf32> to vector<2x4x8xf32>
    %113 = vector.broadcast %111 : vector<2x4x1xf32> to vector<2x4x8xf32>
    %114 = arith.mulf %112, %113 : vector<2x4x8xf32>
    %115 = arith.addf %108, %114 : vector<2x4x8xf32>
    %116 = vector.extract_strided_slice %1 {offsets = [0, 16], sizes = [4, 8], strides = [1, 1]} : vector<4x136xf32> to vector<4x8xf32>
    %117 = vector.shape_cast %116 : vector<4x8xf32> to vector<1x4x8xf32>
    %118 = vector.extract_strided_slice %2 {offsets = [0, 0, 16], sizes = [2, 4, 1], strides = [1, 1, 1]} : vector<2x4x128xf32> to vector<2x4x1xf32>
    %119 = vector.broadcast %117 : vector<1x4x8xf32> to vector<2x4x8xf32>
    %120 = vector.broadcast %118 : vector<2x4x1xf32> to vector<2x4x8xf32>
    %121 = arith.mulf %119, %120 : vector<2x4x8xf32>
    %122 = arith.addf %115, %121 : vector<2x4x8xf32>
    %123 = vector.extract_strided_slice %1 {offsets = [0, 17], sizes = [4, 8], strides = [1, 1]} : vector<4x136xf32> to vector<4x8xf32>
    %124 = vector.shape_cast %123 : vector<4x8xf32> to vector<1x4x8xf32>
    %125 = vector.extract_strided_slice %2 {offsets = [0, 0, 17], sizes = [2, 4, 1], strides = [1, 1, 1]} : vector<2x4x128xf32> to vector<2x4x1xf32>
    %126 = vector.broadcast %124 : vector<1x4x8xf32> to vector<2x4x8xf32>
    %127 = vector.broadcast %125 : vector<2x4x1xf32> to vector<2x4x8xf32>
    %128 = arith.mulf %126, %127 : vector<2x4x8xf32>
    %129 = arith.addf %122, %128 : vector<2x4x8xf32>
    %130 = vector.extract_strided_slice %1 {offsets = [0, 18], sizes = [4, 8], strides = [1, 1]} : vector<4x136xf32> to vector<4x8xf32>
    %131 = vector.shape_cast %130 : vector<4x8xf32> to vector<1x4x8xf32>
    %132 = vector.extract_strided_slice %2 {offsets = [0, 0, 18], sizes = [2, 4, 1], strides = [1, 1, 1]} : vector<2x4x128xf32> to vector<2x4x1xf32>
    %133 = vector.broadcast %131 : vector<1x4x8xf32> to vector<2x4x8xf32>
    %134 = vector.broadcast %132 : vector<2x4x1xf32> to vector<2x4x8xf32>
    %135 = arith.mulf %133, %134 : vector<2x4x8xf32>
    %136 = arith.addf %129, %135 : vector<2x4x8xf32>
    %137 = vector.extract_strided_slice %1 {offsets = [0, 19], sizes = [4, 8], strides = [1, 1]} : vector<4x136xf32> to vector<4x8xf32>
    %138 = vector.shape_cast %137 : vector<4x8xf32> to vector<1x4x8xf32>
    %139 = vector.extract_strided_slice %2 {offsets = [0, 0, 19], sizes = [2, 4, 1], strides = [1, 1, 1]} : vector<2x4x128xf32> to vector<2x4x1xf32>
    %140 = vector.broadcast %138 : vector<1x4x8xf32> to vector<2x4x8xf32>
    %141 = vector.broadcast %139 : vector<2x4x1xf32> to vector<2x4x8xf32>
    %142 = arith.mulf %140, %141 : vector<2x4x8xf32>
    %143 = arith.addf %136, %142 : vector<2x4x8xf32>
    %144 = vector.extract_strided_slice %1 {offsets = [0, 20], sizes = [4, 8], strides = [1, 1]} : vector<4x136xf32> to vector<4x8xf32>
    %145 = vector.shape_cast %144 : vector<4x8xf32> to vector<1x4x8xf32>
    %146 = vector.extract_strided_slice %2 {offsets = [0, 0, 20], sizes = [2, 4, 1], strides = [1, 1, 1]} : vector<2x4x128xf32> to vector<2x4x1xf32>
    %147 = vector.broadcast %145 : vector<1x4x8xf32> to vector<2x4x8xf32>
    %148 = vector.broadcast %146 : vector<2x4x1xf32> to vector<2x4x8xf32>
    %149 = arith.mulf %147, %148 : vector<2x4x8xf32>
    %150 = arith.addf %143, %149 : vector<2x4x8xf32>
    %151 = vector.extract_strided_slice %1 {offsets = [0, 21], sizes = [4, 8], strides = [1, 1]} : vector<4x136xf32> to vector<4x8xf32>
    %152 = vector.shape_cast %151 : vector<4x8xf32> to vector<1x4x8xf32>
    %153 = vector.extract_strided_slice %2 {offsets = [0, 0, 21], sizes = [2, 4, 1], strides = [1, 1, 1]} : vector<2x4x128xf32> to vector<2x4x1xf32>
    %154 = vector.broadcast %152 : vector<1x4x8xf32> to vector<2x4x8xf32>
    %155 = vector.broadcast %153 : vector<2x4x1xf32> to vector<2x4x8xf32>
    %156 = arith.mulf %154, %155 : vector<2x4x8xf32>
    %157 = arith.addf %150, %156 : vector<2x4x8xf32>
    %158 = vector.extract_strided_slice %1 {offsets = [0, 22], sizes = [4, 8], strides = [1, 1]} : vector<4x136xf32> to vector<4x8xf32>
    %159 = vector.shape_cast %158 : vector<4x8xf32> to vector<1x4x8xf32>
    %160 = vector.extract_strided_slice %2 {offsets = [0, 0, 22], sizes = [2, 4, 1], strides = [1, 1, 1]} : vector<2x4x128xf32> to vector<2x4x1xf32>
    %161 = vector.broadcast %159 : vector<1x4x8xf32> to vector<2x4x8xf32>
    %162 = vector.broadcast %160 : vector<2x4x1xf32> to vector<2x4x8xf32>
    %163 = arith.mulf %161, %162 : vector<2x4x8xf32>
    %164 = arith.addf %157, %163 : vector<2x4x8xf32>
    %165 = vector.extract_strided_slice %1 {offsets = [0, 23], sizes = [4, 8], strides = [1, 1]} : vector<4x136xf32> to vector<4x8xf32>
    %166 = vector.shape_cast %165 : vector<4x8xf32> to vector<1x4x8xf32>
    %167 = vector.extract_strided_slice %2 {offsets = [0, 0, 23], sizes = [2, 4, 1], strides = [1, 1, 1]} : vector<2x4x128xf32> to vector<2x4x1xf32>
    %168 = vector.broadcast %166 : vector<1x4x8xf32> to vector<2x4x8xf32>
    %169 = vector.broadcast %167 : vector<2x4x1xf32> to vector<2x4x8xf32>
    %170 = arith.mulf %168, %169 : vector<2x4x8xf32>
    %171 = arith.addf %164, %170 : vector<2x4x8xf32>
    %172 = vector.extract_strided_slice %1 {offsets = [0, 24], sizes = [4, 8], strides = [1, 1]} : vector<4x136xf32> to vector<4x8xf32>
    %173 = vector.shape_cast %172 : vector<4x8xf32> to vector<1x4x8xf32>
    %174 = vector.extract_strided_slice %2 {offsets = [0, 0, 24], sizes = [2, 4, 1], strides = [1, 1, 1]} : vector<2x4x128xf32> to vector<2x4x1xf32>
    %175 = vector.broadcast %173 : vector<1x4x8xf32> to vector<2x4x8xf32>
    %176 = vector.broadcast %174 : vector<2x4x1xf32> to vector<2x4x8xf32>
    %177 = arith.mulf %175, %176 : vector<2x4x8xf32>
    %178 = arith.addf %171, %177 : vector<2x4x8xf32>
    %179 = vector.extract_strided_slice %1 {offsets = [0, 25], sizes = [4, 8], strides = [1, 1]} : vector<4x136xf32> to vector<4x8xf32>
    %180 = vector.shape_cast %179 : vector<4x8xf32> to vector<1x4x8xf32>
    %181 = vector.extract_strided_slice %2 {offsets = [0, 0, 25], sizes = [2, 4, 1], strides = [1, 1, 1]} : vector<2x4x128xf32> to vector<2x4x1xf32>
    %182 = vector.broadcast %180 : vector<1x4x8xf32> to vector<2x4x8xf32>
    %183 = vector.broadcast %181 : vector<2x4x1xf32> to vector<2x4x8xf32>
    %184 = arith.mulf %182, %183 : vector<2x4x8xf32>
    %185 = arith.addf %178, %184 : vector<2x4x8xf32>
    %186 = vector.extract_strided_slice %1 {offsets = [0, 26], sizes = [4, 8], strides = [1, 1]} : vector<4x136xf32> to vector<4x8xf32>
    %187 = vector.shape_cast %186 : vector<4x8xf32> to vector<1x4x8xf32>
    %188 = vector.extract_strided_slice %2 {offsets = [0, 0, 26], sizes = [2, 4, 1], strides = [1, 1, 1]} : vector<2x4x128xf32> to vector<2x4x1xf32>
    %189 = vector.broadcast %187 : vector<1x4x8xf32> to vector<2x4x8xf32>
    %190 = vector.broadcast %188 : vector<2x4x1xf32> to vector<2x4x8xf32>
    %191 = arith.mulf %189, %190 : vector<2x4x8xf32>
    %192 = arith.addf %185, %191 : vector<2x4x8xf32>
    %193 = vector.extract_strided_slice %1 {offsets = [0, 27], sizes = [4, 8], strides = [1, 1]} : vector<4x136xf32> to vector<4x8xf32>
    %194 = vector.shape_cast %193 : vector<4x8xf32> to vector<1x4x8xf32>
    %195 = vector.extract_strided_slice %2 {offsets = [0, 0, 27], sizes = [2, 4, 1], strides = [1, 1, 1]} : vector<2x4x128xf32> to vector<2x4x1xf32>
    %196 = vector.broadcast %194 : vector<1x4x8xf32> to vector<2x4x8xf32>
    %197 = vector.broadcast %195 : vector<2x4x1xf32> to vector<2x4x8xf32>
    %198 = arith.mulf %196, %197 : vector<2x4x8xf32>
    %199 = arith.addf %192, %198 : vector<2x4x8xf32>
    %200 = vector.extract_strided_slice %1 {offsets = [0, 28], sizes = [4, 8], strides = [1, 1]} : vector<4x136xf32> to vector<4x8xf32>
    %201 = vector.shape_cast %200 : vector<4x8xf32> to vector<1x4x8xf32>
    %202 = vector.extract_strided_slice %2 {offsets = [0, 0, 28], sizes = [2, 4, 1], strides = [1, 1, 1]} : vector<2x4x128xf32> to vector<2x4x1xf32>
    %203 = vector.broadcast %201 : vector<1x4x8xf32> to vector<2x4x8xf32>
    %204 = vector.broadcast %202 : vector<2x4x1xf32> to vector<2x4x8xf32>
    %205 = arith.mulf %203, %204 : vector<2x4x8xf32>
    %206 = arith.addf %199, %205 : vector<2x4x8xf32>
    %207 = vector.extract_strided_slice %1 {offsets = [0, 29], sizes = [4, 8], strides = [1, 1]} : vector<4x136xf32> to vector<4x8xf32>
    %208 = vector.shape_cast %207 : vector<4x8xf32> to vector<1x4x8xf32>
    %209 = vector.extract_strided_slice %2 {offsets = [0, 0, 29], sizes = [2, 4, 1], strides = [1, 1, 1]} : vector<2x4x128xf32> to vector<2x4x1xf32>
    %210 = vector.broadcast %208 : vector<1x4x8xf32> to vector<2x4x8xf32>
    %211 = vector.broadcast %209 : vector<2x4x1xf32> to vector<2x4x8xf32>
    %212 = arith.mulf %210, %211 : vector<2x4x8xf32>
    %213 = arith.addf %206, %212 : vector<2x4x8xf32>
    %214 = vector.extract_strided_slice %1 {offsets = [0, 30], sizes = [4, 8], strides = [1, 1]} : vector<4x136xf32> to vector<4x8xf32>
    %215 = vector.shape_cast %214 : vector<4x8xf32> to vector<1x4x8xf32>
    %216 = vector.extract_strided_slice %2 {offsets = [0, 0, 30], sizes = [2, 4, 1], strides = [1, 1, 1]} : vector<2x4x128xf32> to vector<2x4x1xf32>
    %217 = vector.broadcast %215 : vector<1x4x8xf32> to vector<2x4x8xf32>
    %218 = vector.broadcast %216 : vector<2x4x1xf32> to vector<2x4x8xf32>
    %219 = arith.mulf %217, %218 : vector<2x4x8xf32>
    %220 = arith.addf %213, %219 : vector<2x4x8xf32>
    %221 = vector.extract_strided_slice %1 {offsets = [0, 31], sizes = [4, 8], strides = [1, 1]} : vector<4x136xf32> to vector<4x8xf32>
    %222 = vector.shape_cast %221 : vector<4x8xf32> to vector<1x4x8xf32>
    %223 = vector.extract_strided_slice %2 {offsets = [0, 0, 31], sizes = [2, 4, 1], strides = [1, 1, 1]} : vector<2x4x128xf32> to vector<2x4x1xf32>
    %224 = vector.broadcast %222 : vector<1x4x8xf32> to vector<2x4x8xf32>
    %225 = vector.broadcast %223 : vector<2x4x1xf32> to vector<2x4x8xf32>
    %226 = arith.mulf %224, %225 : vector<2x4x8xf32>
    %227 = arith.addf %220, %226 : vector<2x4x8xf32>
    %228 = vector.extract_strided_slice %1 {offsets = [0, 32], sizes = [4, 8], strides = [1, 1]} : vector<4x136xf32> to vector<4x8xf32>
    %229 = vector.shape_cast %228 : vector<4x8xf32> to vector<1x4x8xf32>
    %230 = vector.extract_strided_slice %2 {offsets = [0, 0, 32], sizes = [2, 4, 1], strides = [1, 1, 1]} : vector<2x4x128xf32> to vector<2x4x1xf32>
    %231 = vector.broadcast %229 : vector<1x4x8xf32> to vector<2x4x8xf32>
    %232 = vector.broadcast %230 : vector<2x4x1xf32> to vector<2x4x8xf32>
    %233 = arith.mulf %231, %232 : vector<2x4x8xf32>
    %234 = arith.addf %227, %233 : vector<2x4x8xf32>
    %235 = vector.extract_strided_slice %1 {offsets = [0, 33], sizes = [4, 8], strides = [1, 1]} : vector<4x136xf32> to vector<4x8xf32>
    %236 = vector.shape_cast %235 : vector<4x8xf32> to vector<1x4x8xf32>
    %237 = vector.extract_strided_slice %2 {offsets = [0, 0, 33], sizes = [2, 4, 1], strides = [1, 1, 1]} : vector<2x4x128xf32> to vector<2x4x1xf32>
    %238 = vector.broadcast %236 : vector<1x4x8xf32> to vector<2x4x8xf32>
    %239 = vector.broadcast %237 : vector<2x4x1xf32> to vector<2x4x8xf32>
    %240 = arith.mulf %238, %239 : vector<2x4x8xf32>
    %241 = arith.addf %234, %240 : vector<2x4x8xf32>
    %242 = vector.extract_strided_slice %1 {offsets = [0, 34], sizes = [4, 8], strides = [1, 1]} : vector<4x136xf32> to vector<4x8xf32>
    %243 = vector.shape_cast %242 : vector<4x8xf32> to vector<1x4x8xf32>
    %244 = vector.extract_strided_slice %2 {offsets = [0, 0, 34], sizes = [2, 4, 1], strides = [1, 1, 1]} : vector<2x4x128xf32> to vector<2x4x1xf32>
    %245 = vector.broadcast %243 : vector<1x4x8xf32> to vector<2x4x8xf32>
    %246 = vector.broadcast %244 : vector<2x4x1xf32> to vector<2x4x8xf32>
    %247 = arith.mulf %245, %246 : vector<2x4x8xf32>
    %248 = arith.addf %241, %247 : vector<2x4x8xf32>
    %249 = vector.extract_strided_slice %1 {offsets = [0, 35], sizes = [4, 8], strides = [1, 1]} : vector<4x136xf32> to vector<4x8xf32>
    %250 = vector.shape_cast %249 : vector<4x8xf32> to vector<1x4x8xf32>
    %251 = vector.extract_strided_slice %2 {offsets = [0, 0, 35], sizes = [2, 4, 1], strides = [1, 1, 1]} : vector<2x4x128xf32> to vector<2x4x1xf32>
    %252 = vector.broadcast %250 : vector<1x4x8xf32> to vector<2x4x8xf32>
    %253 = vector.broadcast %251 : vector<2x4x1xf32> to vector<2x4x8xf32>
    %254 = arith.mulf %252, %253 : vector<2x4x8xf32>
    %255 = arith.addf %248, %254 : vector<2x4x8xf32>
    %256 = vector.extract_strided_slice %1 {offsets = [0, 36], sizes = [4, 8], strides = [1, 1]} : vector<4x136xf32> to vector<4x8xf32>
    %257 = vector.shape_cast %256 : vector<4x8xf32> to vector<1x4x8xf32>
    %258 = vector.extract_strided_slice %2 {offsets = [0, 0, 36], sizes = [2, 4, 1], strides = [1, 1, 1]} : vector<2x4x128xf32> to vector<2x4x1xf32>
    %259 = vector.broadcast %257 : vector<1x4x8xf32> to vector<2x4x8xf32>
    %260 = vector.broadcast %258 : vector<2x4x1xf32> to vector<2x4x8xf32>
    %261 = arith.mulf %259, %260 : vector<2x4x8xf32>
    %262 = arith.addf %255, %261 : vector<2x4x8xf32>
    %263 = vector.extract_strided_slice %1 {offsets = [0, 37], sizes = [4, 8], strides = [1, 1]} : vector<4x136xf32> to vector<4x8xf32>
    %264 = vector.shape_cast %263 : vector<4x8xf32> to vector<1x4x8xf32>
    %265 = vector.extract_strided_slice %2 {offsets = [0, 0, 37], sizes = [2, 4, 1], strides = [1, 1, 1]} : vector<2x4x128xf32> to vector<2x4x1xf32>
    %266 = vector.broadcast %264 : vector<1x4x8xf32> to vector<2x4x8xf32>
    %267 = vector.broadcast %265 : vector<2x4x1xf32> to vector<2x4x8xf32>
    %268 = arith.mulf %266, %267 : vector<2x4x8xf32>
    %269 = arith.addf %262, %268 : vector<2x4x8xf32>
    %270 = vector.extract_strided_slice %1 {offsets = [0, 38], sizes = [4, 8], strides = [1, 1]} : vector<4x136xf32> to vector<4x8xf32>
    %271 = vector.shape_cast %270 : vector<4x8xf32> to vector<1x4x8xf32>
    %272 = vector.extract_strided_slice %2 {offsets = [0, 0, 38], sizes = [2, 4, 1], strides = [1, 1, 1]} : vector<2x4x128xf32> to vector<2x4x1xf32>
    %273 = vector.broadcast %271 : vector<1x4x8xf32> to vector<2x4x8xf32>
    %274 = vector.broadcast %272 : vector<2x4x1xf32> to vector<2x4x8xf32>
    %275 = arith.mulf %273, %274 : vector<2x4x8xf32>
    %276 = arith.addf %269, %275 : vector<2x4x8xf32>
    %277 = vector.extract_strided_slice %1 {offsets = [0, 39], sizes = [4, 8], strides = [1, 1]} : vector<4x136xf32> to vector<4x8xf32>
    %278 = vector.shape_cast %277 : vector<4x8xf32> to vector<1x4x8xf32>
    %279 = vector.extract_strided_slice %2 {offsets = [0, 0, 39], sizes = [2, 4, 1], strides = [1, 1, 1]} : vector<2x4x128xf32> to vector<2x4x1xf32>
    %280 = vector.broadcast %278 : vector<1x4x8xf32> to vector<2x4x8xf32>
    %281 = vector.broadcast %279 : vector<2x4x1xf32> to vector<2x4x8xf32>
    %282 = arith.mulf %280, %281 : vector<2x4x8xf32>
    %283 = arith.addf %276, %282 : vector<2x4x8xf32>
    %284 = vector.extract_strided_slice %1 {offsets = [0, 40], sizes = [4, 8], strides = [1, 1]} : vector<4x136xf32> to vector<4x8xf32>
    %285 = vector.shape_cast %284 : vector<4x8xf32> to vector<1x4x8xf32>
    %286 = vector.extract_strided_slice %2 {offsets = [0, 0, 40], sizes = [2, 4, 1], strides = [1, 1, 1]} : vector<2x4x128xf32> to vector<2x4x1xf32>
    %287 = vector.broadcast %285 : vector<1x4x8xf32> to vector<2x4x8xf32>
    %288 = vector.broadcast %286 : vector<2x4x1xf32> to vector<2x4x8xf32>
    %289 = arith.mulf %287, %288 : vector<2x4x8xf32>
    %290 = arith.addf %283, %289 : vector<2x4x8xf32>
    %291 = vector.extract_strided_slice %1 {offsets = [0, 41], sizes = [4, 8], strides = [1, 1]} : vector<4x136xf32> to vector<4x8xf32>
    %292 = vector.shape_cast %291 : vector<4x8xf32> to vector<1x4x8xf32>
    %293 = vector.extract_strided_slice %2 {offsets = [0, 0, 41], sizes = [2, 4, 1], strides = [1, 1, 1]} : vector<2x4x128xf32> to vector<2x4x1xf32>
    %294 = vector.broadcast %292 : vector<1x4x8xf32> to vector<2x4x8xf32>
    %295 = vector.broadcast %293 : vector<2x4x1xf32> to vector<2x4x8xf32>
    %296 = arith.mulf %294, %295 : vector<2x4x8xf32>
    %297 = arith.addf %290, %296 : vector<2x4x8xf32>
    %298 = vector.extract_strided_slice %1 {offsets = [0, 42], sizes = [4, 8], strides = [1, 1]} : vector<4x136xf32> to vector<4x8xf32>
    %299 = vector.shape_cast %298 : vector<4x8xf32> to vector<1x4x8xf32>
    %300 = vector.extract_strided_slice %2 {offsets = [0, 0, 42], sizes = [2, 4, 1], strides = [1, 1, 1]} : vector<2x4x128xf32> to vector<2x4x1xf32>
    %301 = vector.broadcast %299 : vector<1x4x8xf32> to vector<2x4x8xf32>
    %302 = vector.broadcast %300 : vector<2x4x1xf32> to vector<2x4x8xf32>
    %303 = arith.mulf %301, %302 : vector<2x4x8xf32>
    %304 = arith.addf %297, %303 : vector<2x4x8xf32>
    %305 = vector.extract_strided_slice %1 {offsets = [0, 43], sizes = [4, 8], strides = [1, 1]} : vector<4x136xf32> to vector<4x8xf32>
    %306 = vector.shape_cast %305 : vector<4x8xf32> to vector<1x4x8xf32>
    %307 = vector.extract_strided_slice %2 {offsets = [0, 0, 43], sizes = [2, 4, 1], strides = [1, 1, 1]} : vector<2x4x128xf32> to vector<2x4x1xf32>
    %308 = vector.broadcast %306 : vector<1x4x8xf32> to vector<2x4x8xf32>
    %309 = vector.broadcast %307 : vector<2x4x1xf32> to vector<2x4x8xf32>
    %310 = arith.mulf %308, %309 : vector<2x4x8xf32>
    %311 = arith.addf %304, %310 : vector<2x4x8xf32>
    %312 = vector.extract_strided_slice %1 {offsets = [0, 44], sizes = [4, 8], strides = [1, 1]} : vector<4x136xf32> to vector<4x8xf32>
    %313 = vector.shape_cast %312 : vector<4x8xf32> to vector<1x4x8xf32>
    %314 = vector.extract_strided_slice %2 {offsets = [0, 0, 44], sizes = [2, 4, 1], strides = [1, 1, 1]} : vector<2x4x128xf32> to vector<2x4x1xf32>
    %315 = vector.broadcast %313 : vector<1x4x8xf32> to vector<2x4x8xf32>
    %316 = vector.broadcast %314 : vector<2x4x1xf32> to vector<2x4x8xf32>
    %317 = arith.mulf %315, %316 : vector<2x4x8xf32>
    %318 = arith.addf %311, %317 : vector<2x4x8xf32>
    %319 = vector.extract_strided_slice %1 {offsets = [0, 45], sizes = [4, 8], strides = [1, 1]} : vector<4x136xf32> to vector<4x8xf32>
    %320 = vector.shape_cast %319 : vector<4x8xf32> to vector<1x4x8xf32>
    %321 = vector.extract_strided_slice %2 {offsets = [0, 0, 45], sizes = [2, 4, 1], strides = [1, 1, 1]} : vector<2x4x128xf32> to vector<2x4x1xf32>
    %322 = vector.broadcast %320 : vector<1x4x8xf32> to vector<2x4x8xf32>
    %323 = vector.broadcast %321 : vector<2x4x1xf32> to vector<2x4x8xf32>
    %324 = arith.mulf %322, %323 : vector<2x4x8xf32>
    %325 = arith.addf %318, %324 : vector<2x4x8xf32>
    %326 = vector.extract_strided_slice %1 {offsets = [0, 46], sizes = [4, 8], strides = [1, 1]} : vector<4x136xf32> to vector<4x8xf32>
    %327 = vector.shape_cast %326 : vector<4x8xf32> to vector<1x4x8xf32>
    %328 = vector.extract_strided_slice %2 {offsets = [0, 0, 46], sizes = [2, 4, 1], strides = [1, 1, 1]} : vector<2x4x128xf32> to vector<2x4x1xf32>
    %329 = vector.broadcast %327 : vector<1x4x8xf32> to vector<2x4x8xf32>
    %330 = vector.broadcast %328 : vector<2x4x1xf32> to vector<2x4x8xf32>
    %331 = arith.mulf %329, %330 : vector<2x4x8xf32>
    %332 = arith.addf %325, %331 : vector<2x4x8xf32>
    %333 = vector.extract_strided_slice %1 {offsets = [0, 47], sizes = [4, 8], strides = [1, 1]} : vector<4x136xf32> to vector<4x8xf32>
    %334 = vector.shape_cast %333 : vector<4x8xf32> to vector<1x4x8xf32>
    %335 = vector.extract_strided_slice %2 {offsets = [0, 0, 47], sizes = [2, 4, 1], strides = [1, 1, 1]} : vector<2x4x128xf32> to vector<2x4x1xf32>
    %336 = vector.broadcast %334 : vector<1x4x8xf32> to vector<2x4x8xf32>
    %337 = vector.broadcast %335 : vector<2x4x1xf32> to vector<2x4x8xf32>
    %338 = arith.mulf %336, %337 : vector<2x4x8xf32>
    %339 = arith.addf %332, %338 : vector<2x4x8xf32>
    %340 = vector.extract_strided_slice %1 {offsets = [0, 48], sizes = [4, 8], strides = [1, 1]} : vector<4x136xf32> to vector<4x8xf32>
    %341 = vector.shape_cast %340 : vector<4x8xf32> to vector<1x4x8xf32>
    %342 = vector.extract_strided_slice %2 {offsets = [0, 0, 48], sizes = [2, 4, 1], strides = [1, 1, 1]} : vector<2x4x128xf32> to vector<2x4x1xf32>
    %343 = vector.broadcast %341 : vector<1x4x8xf32> to vector<2x4x8xf32>
    %344 = vector.broadcast %342 : vector<2x4x1xf32> to vector<2x4x8xf32>
    %345 = arith.mulf %343, %344 : vector<2x4x8xf32>
    %346 = arith.addf %339, %345 : vector<2x4x8xf32>
    %347 = vector.extract_strided_slice %1 {offsets = [0, 49], sizes = [4, 8], strides = [1, 1]} : vector<4x136xf32> to vector<4x8xf32>
    %348 = vector.shape_cast %347 : vector<4x8xf32> to vector<1x4x8xf32>
    %349 = vector.extract_strided_slice %2 {offsets = [0, 0, 49], sizes = [2, 4, 1], strides = [1, 1, 1]} : vector<2x4x128xf32> to vector<2x4x1xf32>
    %350 = vector.broadcast %348 : vector<1x4x8xf32> to vector<2x4x8xf32>
    %351 = vector.broadcast %349 : vector<2x4x1xf32> to vector<2x4x8xf32>
    %352 = arith.mulf %350, %351 : vector<2x4x8xf32>
    %353 = arith.addf %346, %352 : vector<2x4x8xf32>
    %354 = vector.extract_strided_slice %1 {offsets = [0, 50], sizes = [4, 8], strides = [1, 1]} : vector<4x136xf32> to vector<4x8xf32>
    %355 = vector.shape_cast %354 : vector<4x8xf32> to vector<1x4x8xf32>
    %356 = vector.extract_strided_slice %2 {offsets = [0, 0, 50], sizes = [2, 4, 1], strides = [1, 1, 1]} : vector<2x4x128xf32> to vector<2x4x1xf32>
    %357 = vector.broadcast %355 : vector<1x4x8xf32> to vector<2x4x8xf32>
    %358 = vector.broadcast %356 : vector<2x4x1xf32> to vector<2x4x8xf32>
    %359 = arith.mulf %357, %358 : vector<2x4x8xf32>
    %360 = arith.addf %353, %359 : vector<2x4x8xf32>
    %361 = vector.extract_strided_slice %1 {offsets = [0, 51], sizes = [4, 8], strides = [1, 1]} : vector<4x136xf32> to vector<4x8xf32>
    %362 = vector.shape_cast %361 : vector<4x8xf32> to vector<1x4x8xf32>
    %363 = vector.extract_strided_slice %2 {offsets = [0, 0, 51], sizes = [2, 4, 1], strides = [1, 1, 1]} : vector<2x4x128xf32> to vector<2x4x1xf32>
    %364 = vector.broadcast %362 : vector<1x4x8xf32> to vector<2x4x8xf32>
    %365 = vector.broadcast %363 : vector<2x4x1xf32> to vector<2x4x8xf32>
    %366 = arith.mulf %364, %365 : vector<2x4x8xf32>
    %367 = arith.addf %360, %366 : vector<2x4x8xf32>
    %368 = vector.extract_strided_slice %1 {offsets = [0, 52], sizes = [4, 8], strides = [1, 1]} : vector<4x136xf32> to vector<4x8xf32>
    %369 = vector.shape_cast %368 : vector<4x8xf32> to vector<1x4x8xf32>
    %370 = vector.extract_strided_slice %2 {offsets = [0, 0, 52], sizes = [2, 4, 1], strides = [1, 1, 1]} : vector<2x4x128xf32> to vector<2x4x1xf32>
    %371 = vector.broadcast %369 : vector<1x4x8xf32> to vector<2x4x8xf32>
    %372 = vector.broadcast %370 : vector<2x4x1xf32> to vector<2x4x8xf32>
    %373 = arith.mulf %371, %372 : vector<2x4x8xf32>
    %374 = arith.addf %367, %373 : vector<2x4x8xf32>
    %375 = vector.extract_strided_slice %1 {offsets = [0, 53], sizes = [4, 8], strides = [1, 1]} : vector<4x136xf32> to vector<4x8xf32>
    %376 = vector.shape_cast %375 : vector<4x8xf32> to vector<1x4x8xf32>
    %377 = vector.extract_strided_slice %2 {offsets = [0, 0, 53], sizes = [2, 4, 1], strides = [1, 1, 1]} : vector<2x4x128xf32> to vector<2x4x1xf32>
    %378 = vector.broadcast %376 : vector<1x4x8xf32> to vector<2x4x8xf32>
    %379 = vector.broadcast %377 : vector<2x4x1xf32> to vector<2x4x8xf32>
    %380 = arith.mulf %378, %379 : vector<2x4x8xf32>
    %381 = arith.addf %374, %380 : vector<2x4x8xf32>
    %382 = vector.extract_strided_slice %1 {offsets = [0, 54], sizes = [4, 8], strides = [1, 1]} : vector<4x136xf32> to vector<4x8xf32>
    %383 = vector.shape_cast %382 : vector<4x8xf32> to vector<1x4x8xf32>
    %384 = vector.extract_strided_slice %2 {offsets = [0, 0, 54], sizes = [2, 4, 1], strides = [1, 1, 1]} : vector<2x4x128xf32> to vector<2x4x1xf32>
    %385 = vector.broadcast %383 : vector<1x4x8xf32> to vector<2x4x8xf32>
    %386 = vector.broadcast %384 : vector<2x4x1xf32> to vector<2x4x8xf32>
    %387 = arith.mulf %385, %386 : vector<2x4x8xf32>
    %388 = arith.addf %381, %387 : vector<2x4x8xf32>
    %389 = vector.extract_strided_slice %1 {offsets = [0, 55], sizes = [4, 8], strides = [1, 1]} : vector<4x136xf32> to vector<4x8xf32>
    %390 = vector.shape_cast %389 : vector<4x8xf32> to vector<1x4x8xf32>
    %391 = vector.extract_strided_slice %2 {offsets = [0, 0, 55], sizes = [2, 4, 1], strides = [1, 1, 1]} : vector<2x4x128xf32> to vector<2x4x1xf32>
    %392 = vector.broadcast %390 : vector<1x4x8xf32> to vector<2x4x8xf32>
    %393 = vector.broadcast %391 : vector<2x4x1xf32> to vector<2x4x8xf32>
    %394 = arith.mulf %392, %393 : vector<2x4x8xf32>
    %395 = arith.addf %388, %394 : vector<2x4x8xf32>
    %396 = vector.extract_strided_slice %1 {offsets = [0, 56], sizes = [4, 8], strides = [1, 1]} : vector<4x136xf32> to vector<4x8xf32>
    %397 = vector.shape_cast %396 : vector<4x8xf32> to vector<1x4x8xf32>
    %398 = vector.extract_strided_slice %2 {offsets = [0, 0, 56], sizes = [2, 4, 1], strides = [1, 1, 1]} : vector<2x4x128xf32> to vector<2x4x1xf32>
    %399 = vector.broadcast %397 : vector<1x4x8xf32> to vector<2x4x8xf32>
    %400 = vector.broadcast %398 : vector<2x4x1xf32> to vector<2x4x8xf32>
    %401 = arith.mulf %399, %400 : vector<2x4x8xf32>
    %402 = arith.addf %395, %401 : vector<2x4x8xf32>
    %403 = vector.extract_strided_slice %1 {offsets = [0, 57], sizes = [4, 8], strides = [1, 1]} : vector<4x136xf32> to vector<4x8xf32>
    %404 = vector.shape_cast %403 : vector<4x8xf32> to vector<1x4x8xf32>
    %405 = vector.extract_strided_slice %2 {offsets = [0, 0, 57], sizes = [2, 4, 1], strides = [1, 1, 1]} : vector<2x4x128xf32> to vector<2x4x1xf32>
    %406 = vector.broadcast %404 : vector<1x4x8xf32> to vector<2x4x8xf32>
    %407 = vector.broadcast %405 : vector<2x4x1xf32> to vector<2x4x8xf32>
    %408 = arith.mulf %406, %407 : vector<2x4x8xf32>
    %409 = arith.addf %402, %408 : vector<2x4x8xf32>
    %410 = vector.extract_strided_slice %1 {offsets = [0, 58], sizes = [4, 8], strides = [1, 1]} : vector<4x136xf32> to vector<4x8xf32>
    %411 = vector.shape_cast %410 : vector<4x8xf32> to vector<1x4x8xf32>
    %412 = vector.extract_strided_slice %2 {offsets = [0, 0, 58], sizes = [2, 4, 1], strides = [1, 1, 1]} : vector<2x4x128xf32> to vector<2x4x1xf32>
    %413 = vector.broadcast %411 : vector<1x4x8xf32> to vector<2x4x8xf32>
    %414 = vector.broadcast %412 : vector<2x4x1xf32> to vector<2x4x8xf32>
    %415 = arith.mulf %413, %414 : vector<2x4x8xf32>
    %416 = arith.addf %409, %415 : vector<2x4x8xf32>
    %417 = vector.extract_strided_slice %1 {offsets = [0, 59], sizes = [4, 8], strides = [1, 1]} : vector<4x136xf32> to vector<4x8xf32>
    %418 = vector.shape_cast %417 : vector<4x8xf32> to vector<1x4x8xf32>
    %419 = vector.extract_strided_slice %2 {offsets = [0, 0, 59], sizes = [2, 4, 1], strides = [1, 1, 1]} : vector<2x4x128xf32> to vector<2x4x1xf32>
    %420 = vector.broadcast %418 : vector<1x4x8xf32> to vector<2x4x8xf32>
    %421 = vector.broadcast %419 : vector<2x4x1xf32> to vector<2x4x8xf32>
    %422 = arith.mulf %420, %421 : vector<2x4x8xf32>
    %423 = arith.addf %416, %422 : vector<2x4x8xf32>
    %424 = vector.extract_strided_slice %1 {offsets = [0, 60], sizes = [4, 8], strides = [1, 1]} : vector<4x136xf32> to vector<4x8xf32>
    %425 = vector.shape_cast %424 : vector<4x8xf32> to vector<1x4x8xf32>
    %426 = vector.extract_strided_slice %2 {offsets = [0, 0, 60], sizes = [2, 4, 1], strides = [1, 1, 1]} : vector<2x4x128xf32> to vector<2x4x1xf32>
    %427 = vector.broadcast %425 : vector<1x4x8xf32> to vector<2x4x8xf32>
    %428 = vector.broadcast %426 : vector<2x4x1xf32> to vector<2x4x8xf32>
    %429 = arith.mulf %427, %428 : vector<2x4x8xf32>
    %430 = arith.addf %423, %429 : vector<2x4x8xf32>
    %431 = vector.extract_strided_slice %1 {offsets = [0, 61], sizes = [4, 8], strides = [1, 1]} : vector<4x136xf32> to vector<4x8xf32>
    %432 = vector.shape_cast %431 : vector<4x8xf32> to vector<1x4x8xf32>
    %433 = vector.extract_strided_slice %2 {offsets = [0, 0, 61], sizes = [2, 4, 1], strides = [1, 1, 1]} : vector<2x4x128xf32> to vector<2x4x1xf32>
    %434 = vector.broadcast %432 : vector<1x4x8xf32> to vector<2x4x8xf32>
    %435 = vector.broadcast %433 : vector<2x4x1xf32> to vector<2x4x8xf32>
    %436 = arith.mulf %434, %435 : vector<2x4x8xf32>
    %437 = arith.addf %430, %436 : vector<2x4x8xf32>
    %438 = vector.extract_strided_slice %1 {offsets = [0, 62], sizes = [4, 8], strides = [1, 1]} : vector<4x136xf32> to vector<4x8xf32>
    %439 = vector.shape_cast %438 : vector<4x8xf32> to vector<1x4x8xf32>
    %440 = vector.extract_strided_slice %2 {offsets = [0, 0, 62], sizes = [2, 4, 1], strides = [1, 1, 1]} : vector<2x4x128xf32> to vector<2x4x1xf32>
    %441 = vector.broadcast %439 : vector<1x4x8xf32> to vector<2x4x8xf32>
    %442 = vector.broadcast %440 : vector<2x4x1xf32> to vector<2x4x8xf32>
    %443 = arith.mulf %441, %442 : vector<2x4x8xf32>
    %444 = arith.addf %437, %443 : vector<2x4x8xf32>
    %445 = vector.extract_strided_slice %1 {offsets = [0, 63], sizes = [4, 8], strides = [1, 1]} : vector<4x136xf32> to vector<4x8xf32>
    %446 = vector.shape_cast %445 : vector<4x8xf32> to vector<1x4x8xf32>
    %447 = vector.extract_strided_slice %2 {offsets = [0, 0, 63], sizes = [2, 4, 1], strides = [1, 1, 1]} : vector<2x4x128xf32> to vector<2x4x1xf32>
    %448 = vector.broadcast %446 : vector<1x4x8xf32> to vector<2x4x8xf32>
    %449 = vector.broadcast %447 : vector<2x4x1xf32> to vector<2x4x8xf32>
    %450 = arith.mulf %448, %449 : vector<2x4x8xf32>
    %451 = arith.addf %444, %450 : vector<2x4x8xf32>
    %452 = vector.extract_strided_slice %1 {offsets = [0, 64], sizes = [4, 8], strides = [1, 1]} : vector<4x136xf32> to vector<4x8xf32>
    %453 = vector.shape_cast %452 : vector<4x8xf32> to vector<1x4x8xf32>
    %454 = vector.extract_strided_slice %2 {offsets = [0, 0, 64], sizes = [2, 4, 1], strides = [1, 1, 1]} : vector<2x4x128xf32> to vector<2x4x1xf32>
    %455 = vector.broadcast %453 : vector<1x4x8xf32> to vector<2x4x8xf32>
    %456 = vector.broadcast %454 : vector<2x4x1xf32> to vector<2x4x8xf32>
    %457 = arith.mulf %455, %456 : vector<2x4x8xf32>
    %458 = arith.addf %451, %457 : vector<2x4x8xf32>
    %459 = vector.extract_strided_slice %1 {offsets = [0, 65], sizes = [4, 8], strides = [1, 1]} : vector<4x136xf32> to vector<4x8xf32>
    %460 = vector.shape_cast %459 : vector<4x8xf32> to vector<1x4x8xf32>
    %461 = vector.extract_strided_slice %2 {offsets = [0, 0, 65], sizes = [2, 4, 1], strides = [1, 1, 1]} : vector<2x4x128xf32> to vector<2x4x1xf32>
    %462 = vector.broadcast %460 : vector<1x4x8xf32> to vector<2x4x8xf32>
    %463 = vector.broadcast %461 : vector<2x4x1xf32> to vector<2x4x8xf32>
    %464 = arith.mulf %462, %463 : vector<2x4x8xf32>
    %465 = arith.addf %458, %464 : vector<2x4x8xf32>
    %466 = vector.extract_strided_slice %1 {offsets = [0, 66], sizes = [4, 8], strides = [1, 1]} : vector<4x136xf32> to vector<4x8xf32>
    %467 = vector.shape_cast %466 : vector<4x8xf32> to vector<1x4x8xf32>
    %468 = vector.extract_strided_slice %2 {offsets = [0, 0, 66], sizes = [2, 4, 1], strides = [1, 1, 1]} : vector<2x4x128xf32> to vector<2x4x1xf32>
    %469 = vector.broadcast %467 : vector<1x4x8xf32> to vector<2x4x8xf32>
    %470 = vector.broadcast %468 : vector<2x4x1xf32> to vector<2x4x8xf32>
    %471 = arith.mulf %469, %470 : vector<2x4x8xf32>
    %472 = arith.addf %465, %471 : vector<2x4x8xf32>
    %473 = vector.extract_strided_slice %1 {offsets = [0, 67], sizes = [4, 8], strides = [1, 1]} : vector<4x136xf32> to vector<4x8xf32>
    %474 = vector.shape_cast %473 : vector<4x8xf32> to vector<1x4x8xf32>
    %475 = vector.extract_strided_slice %2 {offsets = [0, 0, 67], sizes = [2, 4, 1], strides = [1, 1, 1]} : vector<2x4x128xf32> to vector<2x4x1xf32>
    %476 = vector.broadcast %474 : vector<1x4x8xf32> to vector<2x4x8xf32>
    %477 = vector.broadcast %475 : vector<2x4x1xf32> to vector<2x4x8xf32>
    %478 = arith.mulf %476, %477 : vector<2x4x8xf32>
    %479 = arith.addf %472, %478 : vector<2x4x8xf32>
    %480 = vector.extract_strided_slice %1 {offsets = [0, 68], sizes = [4, 8], strides = [1, 1]} : vector<4x136xf32> to vector<4x8xf32>
    %481 = vector.shape_cast %480 : vector<4x8xf32> to vector<1x4x8xf32>
    %482 = vector.extract_strided_slice %2 {offsets = [0, 0, 68], sizes = [2, 4, 1], strides = [1, 1, 1]} : vector<2x4x128xf32> to vector<2x4x1xf32>
    %483 = vector.broadcast %481 : vector<1x4x8xf32> to vector<2x4x8xf32>
    %484 = vector.broadcast %482 : vector<2x4x1xf32> to vector<2x4x8xf32>
    %485 = arith.mulf %483, %484 : vector<2x4x8xf32>
    %486 = arith.addf %479, %485 : vector<2x4x8xf32>
    %487 = vector.extract_strided_slice %1 {offsets = [0, 69], sizes = [4, 8], strides = [1, 1]} : vector<4x136xf32> to vector<4x8xf32>
    %488 = vector.shape_cast %487 : vector<4x8xf32> to vector<1x4x8xf32>
    %489 = vector.extract_strided_slice %2 {offsets = [0, 0, 69], sizes = [2, 4, 1], strides = [1, 1, 1]} : vector<2x4x128xf32> to vector<2x4x1xf32>
    %490 = vector.broadcast %488 : vector<1x4x8xf32> to vector<2x4x8xf32>
    %491 = vector.broadcast %489 : vector<2x4x1xf32> to vector<2x4x8xf32>
    %492 = arith.mulf %490, %491 : vector<2x4x8xf32>
    %493 = arith.addf %486, %492 : vector<2x4x8xf32>
    %494 = vector.extract_strided_slice %1 {offsets = [0, 70], sizes = [4, 8], strides = [1, 1]} : vector<4x136xf32> to vector<4x8xf32>
    %495 = vector.shape_cast %494 : vector<4x8xf32> to vector<1x4x8xf32>
    %496 = vector.extract_strided_slice %2 {offsets = [0, 0, 70], sizes = [2, 4, 1], strides = [1, 1, 1]} : vector<2x4x128xf32> to vector<2x4x1xf32>
    %497 = vector.broadcast %495 : vector<1x4x8xf32> to vector<2x4x8xf32>
    %498 = vector.broadcast %496 : vector<2x4x1xf32> to vector<2x4x8xf32>
    %499 = arith.mulf %497, %498 : vector<2x4x8xf32>
    %500 = arith.addf %493, %499 : vector<2x4x8xf32>
    %501 = vector.extract_strided_slice %1 {offsets = [0, 71], sizes = [4, 8], strides = [1, 1]} : vector<4x136xf32> to vector<4x8xf32>
    %502 = vector.shape_cast %501 : vector<4x8xf32> to vector<1x4x8xf32>
    %503 = vector.extract_strided_slice %2 {offsets = [0, 0, 71], sizes = [2, 4, 1], strides = [1, 1, 1]} : vector<2x4x128xf32> to vector<2x4x1xf32>
    %504 = vector.broadcast %502 : vector<1x4x8xf32> to vector<2x4x8xf32>
    %505 = vector.broadcast %503 : vector<2x4x1xf32> to vector<2x4x8xf32>
    %506 = arith.mulf %504, %505 : vector<2x4x8xf32>
    %507 = arith.addf %500, %506 : vector<2x4x8xf32>
    %508 = vector.extract_strided_slice %1 {offsets = [0, 72], sizes = [4, 8], strides = [1, 1]} : vector<4x136xf32> to vector<4x8xf32>
    %509 = vector.shape_cast %508 : vector<4x8xf32> to vector<1x4x8xf32>
    %510 = vector.extract_strided_slice %2 {offsets = [0, 0, 72], sizes = [2, 4, 1], strides = [1, 1, 1]} : vector<2x4x128xf32> to vector<2x4x1xf32>
    %511 = vector.broadcast %509 : vector<1x4x8xf32> to vector<2x4x8xf32>
    %512 = vector.broadcast %510 : vector<2x4x1xf32> to vector<2x4x8xf32>
    %513 = arith.mulf %511, %512 : vector<2x4x8xf32>
    %514 = arith.addf %507, %513 : vector<2x4x8xf32>
    %515 = vector.extract_strided_slice %1 {offsets = [0, 73], sizes = [4, 8], strides = [1, 1]} : vector<4x136xf32> to vector<4x8xf32>
    %516 = vector.shape_cast %515 : vector<4x8xf32> to vector<1x4x8xf32>
    %517 = vector.extract_strided_slice %2 {offsets = [0, 0, 73], sizes = [2, 4, 1], strides = [1, 1, 1]} : vector<2x4x128xf32> to vector<2x4x1xf32>
    %518 = vector.broadcast %516 : vector<1x4x8xf32> to vector<2x4x8xf32>
    %519 = vector.broadcast %517 : vector<2x4x1xf32> to vector<2x4x8xf32>
    %520 = arith.mulf %518, %519 : vector<2x4x8xf32>
    %521 = arith.addf %514, %520 : vector<2x4x8xf32>
    %522 = vector.extract_strided_slice %1 {offsets = [0, 74], sizes = [4, 8], strides = [1, 1]} : vector<4x136xf32> to vector<4x8xf32>
    %523 = vector.shape_cast %522 : vector<4x8xf32> to vector<1x4x8xf32>
    %524 = vector.extract_strided_slice %2 {offsets = [0, 0, 74], sizes = [2, 4, 1], strides = [1, 1, 1]} : vector<2x4x128xf32> to vector<2x4x1xf32>
    %525 = vector.broadcast %523 : vector<1x4x8xf32> to vector<2x4x8xf32>
    %526 = vector.broadcast %524 : vector<2x4x1xf32> to vector<2x4x8xf32>
    %527 = arith.mulf %525, %526 : vector<2x4x8xf32>
    %528 = arith.addf %521, %527 : vector<2x4x8xf32>
    %529 = vector.extract_strided_slice %1 {offsets = [0, 75], sizes = [4, 8], strides = [1, 1]} : vector<4x136xf32> to vector<4x8xf32>
    %530 = vector.shape_cast %529 : vector<4x8xf32> to vector<1x4x8xf32>
    %531 = vector.extract_strided_slice %2 {offsets = [0, 0, 75], sizes = [2, 4, 1], strides = [1, 1, 1]} : vector<2x4x128xf32> to vector<2x4x1xf32>
    %532 = vector.broadcast %530 : vector<1x4x8xf32> to vector<2x4x8xf32>
    %533 = vector.broadcast %531 : vector<2x4x1xf32> to vector<2x4x8xf32>
    %534 = arith.mulf %532, %533 : vector<2x4x8xf32>
    %535 = arith.addf %528, %534 : vector<2x4x8xf32>
    %536 = vector.extract_strided_slice %1 {offsets = [0, 76], sizes = [4, 8], strides = [1, 1]} : vector<4x136xf32> to vector<4x8xf32>
    %537 = vector.shape_cast %536 : vector<4x8xf32> to vector<1x4x8xf32>
    %538 = vector.extract_strided_slice %2 {offsets = [0, 0, 76], sizes = [2, 4, 1], strides = [1, 1, 1]} : vector<2x4x128xf32> to vector<2x4x1xf32>
    %539 = vector.broadcast %537 : vector<1x4x8xf32> to vector<2x4x8xf32>
    %540 = vector.broadcast %538 : vector<2x4x1xf32> to vector<2x4x8xf32>
    %541 = arith.mulf %539, %540 : vector<2x4x8xf32>
    %542 = arith.addf %535, %541 : vector<2x4x8xf32>
    %543 = vector.extract_strided_slice %1 {offsets = [0, 77], sizes = [4, 8], strides = [1, 1]} : vector<4x136xf32> to vector<4x8xf32>
    %544 = vector.shape_cast %543 : vector<4x8xf32> to vector<1x4x8xf32>
    %545 = vector.extract_strided_slice %2 {offsets = [0, 0, 77], sizes = [2, 4, 1], strides = [1, 1, 1]} : vector<2x4x128xf32> to vector<2x4x1xf32>
    %546 = vector.broadcast %544 : vector<1x4x8xf32> to vector<2x4x8xf32>
    %547 = vector.broadcast %545 : vector<2x4x1xf32> to vector<2x4x8xf32>
    %548 = arith.mulf %546, %547 : vector<2x4x8xf32>
    %549 = arith.addf %542, %548 : vector<2x4x8xf32>
    %550 = vector.extract_strided_slice %1 {offsets = [0, 78], sizes = [4, 8], strides = [1, 1]} : vector<4x136xf32> to vector<4x8xf32>
    %551 = vector.shape_cast %550 : vector<4x8xf32> to vector<1x4x8xf32>
    %552 = vector.extract_strided_slice %2 {offsets = [0, 0, 78], sizes = [2, 4, 1], strides = [1, 1, 1]} : vector<2x4x128xf32> to vector<2x4x1xf32>
    %553 = vector.broadcast %551 : vector<1x4x8xf32> to vector<2x4x8xf32>
    %554 = vector.broadcast %552 : vector<2x4x1xf32> to vector<2x4x8xf32>
    %555 = arith.mulf %553, %554 : vector<2x4x8xf32>
    %556 = arith.addf %549, %555 : vector<2x4x8xf32>
    %557 = vector.extract_strided_slice %1 {offsets = [0, 79], sizes = [4, 8], strides = [1, 1]} : vector<4x136xf32> to vector<4x8xf32>
    %558 = vector.shape_cast %557 : vector<4x8xf32> to vector<1x4x8xf32>
    %559 = vector.extract_strided_slice %2 {offsets = [0, 0, 79], sizes = [2, 4, 1], strides = [1, 1, 1]} : vector<2x4x128xf32> to vector<2x4x1xf32>
    %560 = vector.broadcast %558 : vector<1x4x8xf32> to vector<2x4x8xf32>
    %561 = vector.broadcast %559 : vector<2x4x1xf32> to vector<2x4x8xf32>
    %562 = arith.mulf %560, %561 : vector<2x4x8xf32>
    %563 = arith.addf %556, %562 : vector<2x4x8xf32>
    %564 = vector.extract_strided_slice %1 {offsets = [0, 80], sizes = [4, 8], strides = [1, 1]} : vector<4x136xf32> to vector<4x8xf32>
    %565 = vector.shape_cast %564 : vector<4x8xf32> to vector<1x4x8xf32>
    %566 = vector.extract_strided_slice %2 {offsets = [0, 0, 80], sizes = [2, 4, 1], strides = [1, 1, 1]} : vector<2x4x128xf32> to vector<2x4x1xf32>
    %567 = vector.broadcast %565 : vector<1x4x8xf32> to vector<2x4x8xf32>
    %568 = vector.broadcast %566 : vector<2x4x1xf32> to vector<2x4x8xf32>
    %569 = arith.mulf %567, %568 : vector<2x4x8xf32>
    %570 = arith.addf %563, %569 : vector<2x4x8xf32>
    %571 = vector.extract_strided_slice %1 {offsets = [0, 81], sizes = [4, 8], strides = [1, 1]} : vector<4x136xf32> to vector<4x8xf32>
    %572 = vector.shape_cast %571 : vector<4x8xf32> to vector<1x4x8xf32>
    %573 = vector.extract_strided_slice %2 {offsets = [0, 0, 81], sizes = [2, 4, 1], strides = [1, 1, 1]} : vector<2x4x128xf32> to vector<2x4x1xf32>
    %574 = vector.broadcast %572 : vector<1x4x8xf32> to vector<2x4x8xf32>
    %575 = vector.broadcast %573 : vector<2x4x1xf32> to vector<2x4x8xf32>
    %576 = arith.mulf %574, %575 : vector<2x4x8xf32>
    %577 = arith.addf %570, %576 : vector<2x4x8xf32>
    %578 = vector.extract_strided_slice %1 {offsets = [0, 82], sizes = [4, 8], strides = [1, 1]} : vector<4x136xf32> to vector<4x8xf32>
    %579 = vector.shape_cast %578 : vector<4x8xf32> to vector<1x4x8xf32>
    %580 = vector.extract_strided_slice %2 {offsets = [0, 0, 82], sizes = [2, 4, 1], strides = [1, 1, 1]} : vector<2x4x128xf32> to vector<2x4x1xf32>
    %581 = vector.broadcast %579 : vector<1x4x8xf32> to vector<2x4x8xf32>
    %582 = vector.broadcast %580 : vector<2x4x1xf32> to vector<2x4x8xf32>
    %583 = arith.mulf %581, %582 : vector<2x4x8xf32>
    %584 = arith.addf %577, %583 : vector<2x4x8xf32>
    %585 = vector.extract_strided_slice %1 {offsets = [0, 83], sizes = [4, 8], strides = [1, 1]} : vector<4x136xf32> to vector<4x8xf32>
    %586 = vector.shape_cast %585 : vector<4x8xf32> to vector<1x4x8xf32>
    %587 = vector.extract_strided_slice %2 {offsets = [0, 0, 83], sizes = [2, 4, 1], strides = [1, 1, 1]} : vector<2x4x128xf32> to vector<2x4x1xf32>
    %588 = vector.broadcast %586 : vector<1x4x8xf32> to vector<2x4x8xf32>
    %589 = vector.broadcast %587 : vector<2x4x1xf32> to vector<2x4x8xf32>
    %590 = arith.mulf %588, %589 : vector<2x4x8xf32>
    %591 = arith.addf %584, %590 : vector<2x4x8xf32>
    %592 = vector.extract_strided_slice %1 {offsets = [0, 84], sizes = [4, 8], strides = [1, 1]} : vector<4x136xf32> to vector<4x8xf32>
    %593 = vector.shape_cast %592 : vector<4x8xf32> to vector<1x4x8xf32>
    %594 = vector.extract_strided_slice %2 {offsets = [0, 0, 84], sizes = [2, 4, 1], strides = [1, 1, 1]} : vector<2x4x128xf32> to vector<2x4x1xf32>
    %595 = vector.broadcast %593 : vector<1x4x8xf32> to vector<2x4x8xf32>
    %596 = vector.broadcast %594 : vector<2x4x1xf32> to vector<2x4x8xf32>
    %597 = arith.mulf %595, %596 : vector<2x4x8xf32>
    %598 = arith.addf %591, %597 : vector<2x4x8xf32>
    %599 = vector.extract_strided_slice %1 {offsets = [0, 85], sizes = [4, 8], strides = [1, 1]} : vector<4x136xf32> to vector<4x8xf32>
    %600 = vector.shape_cast %599 : vector<4x8xf32> to vector<1x4x8xf32>
    %601 = vector.extract_strided_slice %2 {offsets = [0, 0, 85], sizes = [2, 4, 1], strides = [1, 1, 1]} : vector<2x4x128xf32> to vector<2x4x1xf32>
    %602 = vector.broadcast %600 : vector<1x4x8xf32> to vector<2x4x8xf32>
    %603 = vector.broadcast %601 : vector<2x4x1xf32> to vector<2x4x8xf32>
    %604 = arith.mulf %602, %603 : vector<2x4x8xf32>
    %605 = arith.addf %598, %604 : vector<2x4x8xf32>
    %606 = vector.extract_strided_slice %1 {offsets = [0, 86], sizes = [4, 8], strides = [1, 1]} : vector<4x136xf32> to vector<4x8xf32>
    %607 = vector.shape_cast %606 : vector<4x8xf32> to vector<1x4x8xf32>
    %608 = vector.extract_strided_slice %2 {offsets = [0, 0, 86], sizes = [2, 4, 1], strides = [1, 1, 1]} : vector<2x4x128xf32> to vector<2x4x1xf32>
    %609 = vector.broadcast %607 : vector<1x4x8xf32> to vector<2x4x8xf32>
    %610 = vector.broadcast %608 : vector<2x4x1xf32> to vector<2x4x8xf32>
    %611 = arith.mulf %609, %610 : vector<2x4x8xf32>
    %612 = arith.addf %605, %611 : vector<2x4x8xf32>
    %613 = vector.extract_strided_slice %1 {offsets = [0, 87], sizes = [4, 8], strides = [1, 1]} : vector<4x136xf32> to vector<4x8xf32>
    %614 = vector.shape_cast %613 : vector<4x8xf32> to vector<1x4x8xf32>
    %615 = vector.extract_strided_slice %2 {offsets = [0, 0, 87], sizes = [2, 4, 1], strides = [1, 1, 1]} : vector<2x4x128xf32> to vector<2x4x1xf32>
    %616 = vector.broadcast %614 : vector<1x4x8xf32> to vector<2x4x8xf32>
    %617 = vector.broadcast %615 : vector<2x4x1xf32> to vector<2x4x8xf32>
    %618 = arith.mulf %616, %617 : vector<2x4x8xf32>
    %619 = arith.addf %612, %618 : vector<2x4x8xf32>
    %620 = vector.extract_strided_slice %1 {offsets = [0, 88], sizes = [4, 8], strides = [1, 1]} : vector<4x136xf32> to vector<4x8xf32>
    %621 = vector.shape_cast %620 : vector<4x8xf32> to vector<1x4x8xf32>
    %622 = vector.extract_strided_slice %2 {offsets = [0, 0, 88], sizes = [2, 4, 1], strides = [1, 1, 1]} : vector<2x4x128xf32> to vector<2x4x1xf32>
    %623 = vector.broadcast %621 : vector<1x4x8xf32> to vector<2x4x8xf32>
    %624 = vector.broadcast %622 : vector<2x4x1xf32> to vector<2x4x8xf32>
    %625 = arith.mulf %623, %624 : vector<2x4x8xf32>
    %626 = arith.addf %619, %625 : vector<2x4x8xf32>
    %627 = vector.extract_strided_slice %1 {offsets = [0, 89], sizes = [4, 8], strides = [1, 1]} : vector<4x136xf32> to vector<4x8xf32>
    %628 = vector.shape_cast %627 : vector<4x8xf32> to vector<1x4x8xf32>
    %629 = vector.extract_strided_slice %2 {offsets = [0, 0, 89], sizes = [2, 4, 1], strides = [1, 1, 1]} : vector<2x4x128xf32> to vector<2x4x1xf32>
    %630 = vector.broadcast %628 : vector<1x4x8xf32> to vector<2x4x8xf32>
    %631 = vector.broadcast %629 : vector<2x4x1xf32> to vector<2x4x8xf32>
    %632 = arith.mulf %630, %631 : vector<2x4x8xf32>
    %633 = arith.addf %626, %632 : vector<2x4x8xf32>
    %634 = vector.extract_strided_slice %1 {offsets = [0, 90], sizes = [4, 8], strides = [1, 1]} : vector<4x136xf32> to vector<4x8xf32>
    %635 = vector.shape_cast %634 : vector<4x8xf32> to vector<1x4x8xf32>
    %636 = vector.extract_strided_slice %2 {offsets = [0, 0, 90], sizes = [2, 4, 1], strides = [1, 1, 1]} : vector<2x4x128xf32> to vector<2x4x1xf32>
    %637 = vector.broadcast %635 : vector<1x4x8xf32> to vector<2x4x8xf32>
    %638 = vector.broadcast %636 : vector<2x4x1xf32> to vector<2x4x8xf32>
    %639 = arith.mulf %637, %638 : vector<2x4x8xf32>
    %640 = arith.addf %633, %639 : vector<2x4x8xf32>
    %641 = vector.extract_strided_slice %1 {offsets = [0, 91], sizes = [4, 8], strides = [1, 1]} : vector<4x136xf32> to vector<4x8xf32>
    %642 = vector.shape_cast %641 : vector<4x8xf32> to vector<1x4x8xf32>
    %643 = vector.extract_strided_slice %2 {offsets = [0, 0, 91], sizes = [2, 4, 1], strides = [1, 1, 1]} : vector<2x4x128xf32> to vector<2x4x1xf32>
    %644 = vector.broadcast %642 : vector<1x4x8xf32> to vector<2x4x8xf32>
    %645 = vector.broadcast %643 : vector<2x4x1xf32> to vector<2x4x8xf32>
    %646 = arith.mulf %644, %645 : vector<2x4x8xf32>
    %647 = arith.addf %640, %646 : vector<2x4x8xf32>
    %648 = vector.extract_strided_slice %1 {offsets = [0, 92], sizes = [4, 8], strides = [1, 1]} : vector<4x136xf32> to vector<4x8xf32>
    %649 = vector.shape_cast %648 : vector<4x8xf32> to vector<1x4x8xf32>
    %650 = vector.extract_strided_slice %2 {offsets = [0, 0, 92], sizes = [2, 4, 1], strides = [1, 1, 1]} : vector<2x4x128xf32> to vector<2x4x1xf32>
    %651 = vector.broadcast %649 : vector<1x4x8xf32> to vector<2x4x8xf32>
    %652 = vector.broadcast %650 : vector<2x4x1xf32> to vector<2x4x8xf32>
    %653 = arith.mulf %651, %652 : vector<2x4x8xf32>
    %654 = arith.addf %647, %653 : vector<2x4x8xf32>
    %655 = vector.extract_strided_slice %1 {offsets = [0, 93], sizes = [4, 8], strides = [1, 1]} : vector<4x136xf32> to vector<4x8xf32>
    %656 = vector.shape_cast %655 : vector<4x8xf32> to vector<1x4x8xf32>
    %657 = vector.extract_strided_slice %2 {offsets = [0, 0, 93], sizes = [2, 4, 1], strides = [1, 1, 1]} : vector<2x4x128xf32> to vector<2x4x1xf32>
    %658 = vector.broadcast %656 : vector<1x4x8xf32> to vector<2x4x8xf32>
    %659 = vector.broadcast %657 : vector<2x4x1xf32> to vector<2x4x8xf32>
    %660 = arith.mulf %658, %659 : vector<2x4x8xf32>
    %661 = arith.addf %654, %660 : vector<2x4x8xf32>
    %662 = vector.extract_strided_slice %1 {offsets = [0, 94], sizes = [4, 8], strides = [1, 1]} : vector<4x136xf32> to vector<4x8xf32>
    %663 = vector.shape_cast %662 : vector<4x8xf32> to vector<1x4x8xf32>
    %664 = vector.extract_strided_slice %2 {offsets = [0, 0, 94], sizes = [2, 4, 1], strides = [1, 1, 1]} : vector<2x4x128xf32> to vector<2x4x1xf32>
    %665 = vector.broadcast %663 : vector<1x4x8xf32> to vector<2x4x8xf32>
    %666 = vector.broadcast %664 : vector<2x4x1xf32> to vector<2x4x8xf32>
    %667 = arith.mulf %665, %666 : vector<2x4x8xf32>
    %668 = arith.addf %661, %667 : vector<2x4x8xf32>
    %669 = vector.extract_strided_slice %1 {offsets = [0, 95], sizes = [4, 8], strides = [1, 1]} : vector<4x136xf32> to vector<4x8xf32>
    %670 = vector.shape_cast %669 : vector<4x8xf32> to vector<1x4x8xf32>
    %671 = vector.extract_strided_slice %2 {offsets = [0, 0, 95], sizes = [2, 4, 1], strides = [1, 1, 1]} : vector<2x4x128xf32> to vector<2x4x1xf32>
    %672 = vector.broadcast %670 : vector<1x4x8xf32> to vector<2x4x8xf32>
    %673 = vector.broadcast %671 : vector<2x4x1xf32> to vector<2x4x8xf32>
    %674 = arith.mulf %672, %673 : vector<2x4x8xf32>
    %675 = arith.addf %668, %674 : vector<2x4x8xf32>
    %676 = vector.extract_strided_slice %1 {offsets = [0, 96], sizes = [4, 8], strides = [1, 1]} : vector<4x136xf32> to vector<4x8xf32>
    %677 = vector.shape_cast %676 : vector<4x8xf32> to vector<1x4x8xf32>
    %678 = vector.extract_strided_slice %2 {offsets = [0, 0, 96], sizes = [2, 4, 1], strides = [1, 1, 1]} : vector<2x4x128xf32> to vector<2x4x1xf32>
    %679 = vector.broadcast %677 : vector<1x4x8xf32> to vector<2x4x8xf32>
    %680 = vector.broadcast %678 : vector<2x4x1xf32> to vector<2x4x8xf32>
    %681 = arith.mulf %679, %680 : vector<2x4x8xf32>
    %682 = arith.addf %675, %681 : vector<2x4x8xf32>
    %683 = vector.extract_strided_slice %1 {offsets = [0, 97], sizes = [4, 8], strides = [1, 1]} : vector<4x136xf32> to vector<4x8xf32>
    %684 = vector.shape_cast %683 : vector<4x8xf32> to vector<1x4x8xf32>
    %685 = vector.extract_strided_slice %2 {offsets = [0, 0, 97], sizes = [2, 4, 1], strides = [1, 1, 1]} : vector<2x4x128xf32> to vector<2x4x1xf32>
    %686 = vector.broadcast %684 : vector<1x4x8xf32> to vector<2x4x8xf32>
    %687 = vector.broadcast %685 : vector<2x4x1xf32> to vector<2x4x8xf32>
    %688 = arith.mulf %686, %687 : vector<2x4x8xf32>
    %689 = arith.addf %682, %688 : vector<2x4x8xf32>
    %690 = vector.extract_strided_slice %1 {offsets = [0, 98], sizes = [4, 8], strides = [1, 1]} : vector<4x136xf32> to vector<4x8xf32>
    %691 = vector.shape_cast %690 : vector<4x8xf32> to vector<1x4x8xf32>
    %692 = vector.extract_strided_slice %2 {offsets = [0, 0, 98], sizes = [2, 4, 1], strides = [1, 1, 1]} : vector<2x4x128xf32> to vector<2x4x1xf32>
    %693 = vector.broadcast %691 : vector<1x4x8xf32> to vector<2x4x8xf32>
    %694 = vector.broadcast %692 : vector<2x4x1xf32> to vector<2x4x8xf32>
    %695 = arith.mulf %693, %694 : vector<2x4x8xf32>
    %696 = arith.addf %689, %695 : vector<2x4x8xf32>
    %697 = vector.extract_strided_slice %1 {offsets = [0, 99], sizes = [4, 8], strides = [1, 1]} : vector<4x136xf32> to vector<4x8xf32>
    %698 = vector.shape_cast %697 : vector<4x8xf32> to vector<1x4x8xf32>
    %699 = vector.extract_strided_slice %2 {offsets = [0, 0, 99], sizes = [2, 4, 1], strides = [1, 1, 1]} : vector<2x4x128xf32> to vector<2x4x1xf32>
    %700 = vector.broadcast %698 : vector<1x4x8xf32> to vector<2x4x8xf32>
    %701 = vector.broadcast %699 : vector<2x4x1xf32> to vector<2x4x8xf32>
    %702 = arith.mulf %700, %701 : vector<2x4x8xf32>
    %703 = arith.addf %696, %702 : vector<2x4x8xf32>
    %704 = vector.extract_strided_slice %1 {offsets = [0, 100], sizes = [4, 8], strides = [1, 1]} : vector<4x136xf32> to vector<4x8xf32>
    %705 = vector.shape_cast %704 : vector<4x8xf32> to vector<1x4x8xf32>
    %706 = vector.extract_strided_slice %2 {offsets = [0, 0, 100], sizes = [2, 4, 1], strides = [1, 1, 1]} : vector<2x4x128xf32> to vector<2x4x1xf32>
    %707 = vector.broadcast %705 : vector<1x4x8xf32> to vector<2x4x8xf32>
    %708 = vector.broadcast %706 : vector<2x4x1xf32> to vector<2x4x8xf32>
    %709 = arith.mulf %707, %708 : vector<2x4x8xf32>
    %710 = arith.addf %703, %709 : vector<2x4x8xf32>
    %711 = vector.extract_strided_slice %1 {offsets = [0, 101], sizes = [4, 8], strides = [1, 1]} : vector<4x136xf32> to vector<4x8xf32>
    %712 = vector.shape_cast %711 : vector<4x8xf32> to vector<1x4x8xf32>
    %713 = vector.extract_strided_slice %2 {offsets = [0, 0, 101], sizes = [2, 4, 1], strides = [1, 1, 1]} : vector<2x4x128xf32> to vector<2x4x1xf32>
    %714 = vector.broadcast %712 : vector<1x4x8xf32> to vector<2x4x8xf32>
    %715 = vector.broadcast %713 : vector<2x4x1xf32> to vector<2x4x8xf32>
    %716 = arith.mulf %714, %715 : vector<2x4x8xf32>
    %717 = arith.addf %710, %716 : vector<2x4x8xf32>
    %718 = vector.extract_strided_slice %1 {offsets = [0, 102], sizes = [4, 8], strides = [1, 1]} : vector<4x136xf32> to vector<4x8xf32>
    %719 = vector.shape_cast %718 : vector<4x8xf32> to vector<1x4x8xf32>
    %720 = vector.extract_strided_slice %2 {offsets = [0, 0, 102], sizes = [2, 4, 1], strides = [1, 1, 1]} : vector<2x4x128xf32> to vector<2x4x1xf32>
    %721 = vector.broadcast %719 : vector<1x4x8xf32> to vector<2x4x8xf32>
    %722 = vector.broadcast %720 : vector<2x4x1xf32> to vector<2x4x8xf32>
    %723 = arith.mulf %721, %722 : vector<2x4x8xf32>
    %724 = arith.addf %717, %723 : vector<2x4x8xf32>
    %725 = vector.extract_strided_slice %1 {offsets = [0, 103], sizes = [4, 8], strides = [1, 1]} : vector<4x136xf32> to vector<4x8xf32>
    %726 = vector.shape_cast %725 : vector<4x8xf32> to vector<1x4x8xf32>
    %727 = vector.extract_strided_slice %2 {offsets = [0, 0, 103], sizes = [2, 4, 1], strides = [1, 1, 1]} : vector<2x4x128xf32> to vector<2x4x1xf32>
    %728 = vector.broadcast %726 : vector<1x4x8xf32> to vector<2x4x8xf32>
    %729 = vector.broadcast %727 : vector<2x4x1xf32> to vector<2x4x8xf32>
    %730 = arith.mulf %728, %729 : vector<2x4x8xf32>
    %731 = arith.addf %724, %730 : vector<2x4x8xf32>
    %732 = vector.extract_strided_slice %1 {offsets = [0, 104], sizes = [4, 8], strides = [1, 1]} : vector<4x136xf32> to vector<4x8xf32>
    %733 = vector.shape_cast %732 : vector<4x8xf32> to vector<1x4x8xf32>
    %734 = vector.extract_strided_slice %2 {offsets = [0, 0, 104], sizes = [2, 4, 1], strides = [1, 1, 1]} : vector<2x4x128xf32> to vector<2x4x1xf32>
    %735 = vector.broadcast %733 : vector<1x4x8xf32> to vector<2x4x8xf32>
    %736 = vector.broadcast %734 : vector<2x4x1xf32> to vector<2x4x8xf32>
    %737 = arith.mulf %735, %736 : vector<2x4x8xf32>
    %738 = arith.addf %731, %737 : vector<2x4x8xf32>
    %739 = vector.extract_strided_slice %1 {offsets = [0, 105], sizes = [4, 8], strides = [1, 1]} : vector<4x136xf32> to vector<4x8xf32>
    %740 = vector.shape_cast %739 : vector<4x8xf32> to vector<1x4x8xf32>
    %741 = vector.extract_strided_slice %2 {offsets = [0, 0, 105], sizes = [2, 4, 1], strides = [1, 1, 1]} : vector<2x4x128xf32> to vector<2x4x1xf32>
    %742 = vector.broadcast %740 : vector<1x4x8xf32> to vector<2x4x8xf32>
    %743 = vector.broadcast %741 : vector<2x4x1xf32> to vector<2x4x8xf32>
    %744 = arith.mulf %742, %743 : vector<2x4x8xf32>
    %745 = arith.addf %738, %744 : vector<2x4x8xf32>
    %746 = vector.extract_strided_slice %1 {offsets = [0, 106], sizes = [4, 8], strides = [1, 1]} : vector<4x136xf32> to vector<4x8xf32>
    %747 = vector.shape_cast %746 : vector<4x8xf32> to vector<1x4x8xf32>
    %748 = vector.extract_strided_slice %2 {offsets = [0, 0, 106], sizes = [2, 4, 1], strides = [1, 1, 1]} : vector<2x4x128xf32> to vector<2x4x1xf32>
    %749 = vector.broadcast %747 : vector<1x4x8xf32> to vector<2x4x8xf32>
    %750 = vector.broadcast %748 : vector<2x4x1xf32> to vector<2x4x8xf32>
    %751 = arith.mulf %749, %750 : vector<2x4x8xf32>
    %752 = arith.addf %745, %751 : vector<2x4x8xf32>
    %753 = vector.extract_strided_slice %1 {offsets = [0, 107], sizes = [4, 8], strides = [1, 1]} : vector<4x136xf32> to vector<4x8xf32>
    %754 = vector.shape_cast %753 : vector<4x8xf32> to vector<1x4x8xf32>
    %755 = vector.extract_strided_slice %2 {offsets = [0, 0, 107], sizes = [2, 4, 1], strides = [1, 1, 1]} : vector<2x4x128xf32> to vector<2x4x1xf32>
    %756 = vector.broadcast %754 : vector<1x4x8xf32> to vector<2x4x8xf32>
    %757 = vector.broadcast %755 : vector<2x4x1xf32> to vector<2x4x8xf32>
    %758 = arith.mulf %756, %757 : vector<2x4x8xf32>
    %759 = arith.addf %752, %758 : vector<2x4x8xf32>
    %760 = vector.extract_strided_slice %1 {offsets = [0, 108], sizes = [4, 8], strides = [1, 1]} : vector<4x136xf32> to vector<4x8xf32>
    %761 = vector.shape_cast %760 : vector<4x8xf32> to vector<1x4x8xf32>
    %762 = vector.extract_strided_slice %2 {offsets = [0, 0, 108], sizes = [2, 4, 1], strides = [1, 1, 1]} : vector<2x4x128xf32> to vector<2x4x1xf32>
    %763 = vector.broadcast %761 : vector<1x4x8xf32> to vector<2x4x8xf32>
    %764 = vector.broadcast %762 : vector<2x4x1xf32> to vector<2x4x8xf32>
    %765 = arith.mulf %763, %764 : vector<2x4x8xf32>
    %766 = arith.addf %759, %765 : vector<2x4x8xf32>
    %767 = vector.extract_strided_slice %1 {offsets = [0, 109], sizes = [4, 8], strides = [1, 1]} : vector<4x136xf32> to vector<4x8xf32>
    %768 = vector.shape_cast %767 : vector<4x8xf32> to vector<1x4x8xf32>
    %769 = vector.extract_strided_slice %2 {offsets = [0, 0, 109], sizes = [2, 4, 1], strides = [1, 1, 1]} : vector<2x4x128xf32> to vector<2x4x1xf32>
    %770 = vector.broadcast %768 : vector<1x4x8xf32> to vector<2x4x8xf32>
    %771 = vector.broadcast %769 : vector<2x4x1xf32> to vector<2x4x8xf32>
    %772 = arith.mulf %770, %771 : vector<2x4x8xf32>
    %773 = arith.addf %766, %772 : vector<2x4x8xf32>
    %774 = vector.extract_strided_slice %1 {offsets = [0, 110], sizes = [4, 8], strides = [1, 1]} : vector<4x136xf32> to vector<4x8xf32>
    %775 = vector.shape_cast %774 : vector<4x8xf32> to vector<1x4x8xf32>
    %776 = vector.extract_strided_slice %2 {offsets = [0, 0, 110], sizes = [2, 4, 1], strides = [1, 1, 1]} : vector<2x4x128xf32> to vector<2x4x1xf32>
    %777 = vector.broadcast %775 : vector<1x4x8xf32> to vector<2x4x8xf32>
    %778 = vector.broadcast %776 : vector<2x4x1xf32> to vector<2x4x8xf32>
    %779 = arith.mulf %777, %778 : vector<2x4x8xf32>
    %780 = arith.addf %773, %779 : vector<2x4x8xf32>
    %781 = vector.extract_strided_slice %1 {offsets = [0, 111], sizes = [4, 8], strides = [1, 1]} : vector<4x136xf32> to vector<4x8xf32>
    %782 = vector.shape_cast %781 : vector<4x8xf32> to vector<1x4x8xf32>
    %783 = vector.extract_strided_slice %2 {offsets = [0, 0, 111], sizes = [2, 4, 1], strides = [1, 1, 1]} : vector<2x4x128xf32> to vector<2x4x1xf32>
    %784 = vector.broadcast %782 : vector<1x4x8xf32> to vector<2x4x8xf32>
    %785 = vector.broadcast %783 : vector<2x4x1xf32> to vector<2x4x8xf32>
    %786 = arith.mulf %784, %785 : vector<2x4x8xf32>
    %787 = arith.addf %780, %786 : vector<2x4x8xf32>
    %788 = vector.extract_strided_slice %1 {offsets = [0, 112], sizes = [4, 8], strides = [1, 1]} : vector<4x136xf32> to vector<4x8xf32>
    %789 = vector.shape_cast %788 : vector<4x8xf32> to vector<1x4x8xf32>
    %790 = vector.extract_strided_slice %2 {offsets = [0, 0, 112], sizes = [2, 4, 1], strides = [1, 1, 1]} : vector<2x4x128xf32> to vector<2x4x1xf32>
    %791 = vector.broadcast %789 : vector<1x4x8xf32> to vector<2x4x8xf32>
    %792 = vector.broadcast %790 : vector<2x4x1xf32> to vector<2x4x8xf32>
    %793 = arith.mulf %791, %792 : vector<2x4x8xf32>
    %794 = arith.addf %787, %793 : vector<2x4x8xf32>
    %795 = vector.extract_strided_slice %1 {offsets = [0, 113], sizes = [4, 8], strides = [1, 1]} : vector<4x136xf32> to vector<4x8xf32>
    %796 = vector.shape_cast %795 : vector<4x8xf32> to vector<1x4x8xf32>
    %797 = vector.extract_strided_slice %2 {offsets = [0, 0, 113], sizes = [2, 4, 1], strides = [1, 1, 1]} : vector<2x4x128xf32> to vector<2x4x1xf32>
    %798 = vector.broadcast %796 : vector<1x4x8xf32> to vector<2x4x8xf32>
    %799 = vector.broadcast %797 : vector<2x4x1xf32> to vector<2x4x8xf32>
    %800 = arith.mulf %798, %799 : vector<2x4x8xf32>
    %801 = arith.addf %794, %800 : vector<2x4x8xf32>
    %802 = vector.extract_strided_slice %1 {offsets = [0, 114], sizes = [4, 8], strides = [1, 1]} : vector<4x136xf32> to vector<4x8xf32>
    %803 = vector.shape_cast %802 : vector<4x8xf32> to vector<1x4x8xf32>
    %804 = vector.extract_strided_slice %2 {offsets = [0, 0, 114], sizes = [2, 4, 1], strides = [1, 1, 1]} : vector<2x4x128xf32> to vector<2x4x1xf32>
    %805 = vector.broadcast %803 : vector<1x4x8xf32> to vector<2x4x8xf32>
    %806 = vector.broadcast %804 : vector<2x4x1xf32> to vector<2x4x8xf32>
    %807 = arith.mulf %805, %806 : vector<2x4x8xf32>
    %808 = arith.addf %801, %807 : vector<2x4x8xf32>
    %809 = vector.extract_strided_slice %1 {offsets = [0, 115], sizes = [4, 8], strides = [1, 1]} : vector<4x136xf32> to vector<4x8xf32>
    %810 = vector.shape_cast %809 : vector<4x8xf32> to vector<1x4x8xf32>
    %811 = vector.extract_strided_slice %2 {offsets = [0, 0, 115], sizes = [2, 4, 1], strides = [1, 1, 1]} : vector<2x4x128xf32> to vector<2x4x1xf32>
    %812 = vector.broadcast %810 : vector<1x4x8xf32> to vector<2x4x8xf32>
    %813 = vector.broadcast %811 : vector<2x4x1xf32> to vector<2x4x8xf32>
    %814 = arith.mulf %812, %813 : vector<2x4x8xf32>
    %815 = arith.addf %808, %814 : vector<2x4x8xf32>
    %816 = vector.extract_strided_slice %1 {offsets = [0, 116], sizes = [4, 8], strides = [1, 1]} : vector<4x136xf32> to vector<4x8xf32>
    %817 = vector.shape_cast %816 : vector<4x8xf32> to vector<1x4x8xf32>
    %818 = vector.extract_strided_slice %2 {offsets = [0, 0, 116], sizes = [2, 4, 1], strides = [1, 1, 1]} : vector<2x4x128xf32> to vector<2x4x1xf32>
    %819 = vector.broadcast %817 : vector<1x4x8xf32> to vector<2x4x8xf32>
    %820 = vector.broadcast %818 : vector<2x4x1xf32> to vector<2x4x8xf32>
    %821 = arith.mulf %819, %820 : vector<2x4x8xf32>
    %822 = arith.addf %815, %821 : vector<2x4x8xf32>
    %823 = vector.extract_strided_slice %1 {offsets = [0, 117], sizes = [4, 8], strides = [1, 1]} : vector<4x136xf32> to vector<4x8xf32>
    %824 = vector.shape_cast %823 : vector<4x8xf32> to vector<1x4x8xf32>
    %825 = vector.extract_strided_slice %2 {offsets = [0, 0, 117], sizes = [2, 4, 1], strides = [1, 1, 1]} : vector<2x4x128xf32> to vector<2x4x1xf32>
    %826 = vector.broadcast %824 : vector<1x4x8xf32> to vector<2x4x8xf32>
    %827 = vector.broadcast %825 : vector<2x4x1xf32> to vector<2x4x8xf32>
    %828 = arith.mulf %826, %827 : vector<2x4x8xf32>
    %829 = arith.addf %822, %828 : vector<2x4x8xf32>
    %830 = vector.extract_strided_slice %1 {offsets = [0, 118], sizes = [4, 8], strides = [1, 1]} : vector<4x136xf32> to vector<4x8xf32>
    %831 = vector.shape_cast %830 : vector<4x8xf32> to vector<1x4x8xf32>
    %832 = vector.extract_strided_slice %2 {offsets = [0, 0, 118], sizes = [2, 4, 1], strides = [1, 1, 1]} : vector<2x4x128xf32> to vector<2x4x1xf32>
    %833 = vector.broadcast %831 : vector<1x4x8xf32> to vector<2x4x8xf32>
    %834 = vector.broadcast %832 : vector<2x4x1xf32> to vector<2x4x8xf32>
    %835 = arith.mulf %833, %834 : vector<2x4x8xf32>
    %836 = arith.addf %829, %835 : vector<2x4x8xf32>
    %837 = vector.extract_strided_slice %1 {offsets = [0, 119], sizes = [4, 8], strides = [1, 1]} : vector<4x136xf32> to vector<4x8xf32>
    %838 = vector.shape_cast %837 : vector<4x8xf32> to vector<1x4x8xf32>
    %839 = vector.extract_strided_slice %2 {offsets = [0, 0, 119], sizes = [2, 4, 1], strides = [1, 1, 1]} : vector<2x4x128xf32> to vector<2x4x1xf32>
    %840 = vector.broadcast %838 : vector<1x4x8xf32> to vector<2x4x8xf32>
    %841 = vector.broadcast %839 : vector<2x4x1xf32> to vector<2x4x8xf32>
    %842 = arith.mulf %840, %841 : vector<2x4x8xf32>
    %843 = arith.addf %836, %842 : vector<2x4x8xf32>
    %844 = vector.extract_strided_slice %1 {offsets = [0, 120], sizes = [4, 8], strides = [1, 1]} : vector<4x136xf32> to vector<4x8xf32>
    %845 = vector.shape_cast %844 : vector<4x8xf32> to vector<1x4x8xf32>
    %846 = vector.extract_strided_slice %2 {offsets = [0, 0, 120], sizes = [2, 4, 1], strides = [1, 1, 1]} : vector<2x4x128xf32> to vector<2x4x1xf32>
    %847 = vector.broadcast %845 : vector<1x4x8xf32> to vector<2x4x8xf32>
    %848 = vector.broadcast %846 : vector<2x4x1xf32> to vector<2x4x8xf32>
    %849 = arith.mulf %847, %848 : vector<2x4x8xf32>
    %850 = arith.addf %843, %849 : vector<2x4x8xf32>
    %851 = vector.extract_strided_slice %1 {offsets = [0, 121], sizes = [4, 8], strides = [1, 1]} : vector<4x136xf32> to vector<4x8xf32>
    %852 = vector.shape_cast %851 : vector<4x8xf32> to vector<1x4x8xf32>
    %853 = vector.extract_strided_slice %2 {offsets = [0, 0, 121], sizes = [2, 4, 1], strides = [1, 1, 1]} : vector<2x4x128xf32> to vector<2x4x1xf32>
    %854 = vector.broadcast %852 : vector<1x4x8xf32> to vector<2x4x8xf32>
    %855 = vector.broadcast %853 : vector<2x4x1xf32> to vector<2x4x8xf32>
    %856 = arith.mulf %854, %855 : vector<2x4x8xf32>
    %857 = arith.addf %850, %856 : vector<2x4x8xf32>
    %858 = vector.extract_strided_slice %1 {offsets = [0, 122], sizes = [4, 8], strides = [1, 1]} : vector<4x136xf32> to vector<4x8xf32>
    %859 = vector.shape_cast %858 : vector<4x8xf32> to vector<1x4x8xf32>
    %860 = vector.extract_strided_slice %2 {offsets = [0, 0, 122], sizes = [2, 4, 1], strides = [1, 1, 1]} : vector<2x4x128xf32> to vector<2x4x1xf32>
    %861 = vector.broadcast %859 : vector<1x4x8xf32> to vector<2x4x8xf32>
    %862 = vector.broadcast %860 : vector<2x4x1xf32> to vector<2x4x8xf32>
    %863 = arith.mulf %861, %862 : vector<2x4x8xf32>
    %864 = arith.addf %857, %863 : vector<2x4x8xf32>
    %865 = vector.extract_strided_slice %1 {offsets = [0, 123], sizes = [4, 8], strides = [1, 1]} : vector<4x136xf32> to vector<4x8xf32>
    %866 = vector.shape_cast %865 : vector<4x8xf32> to vector<1x4x8xf32>
    %867 = vector.extract_strided_slice %2 {offsets = [0, 0, 123], sizes = [2, 4, 1], strides = [1, 1, 1]} : vector<2x4x128xf32> to vector<2x4x1xf32>
    %868 = vector.broadcast %866 : vector<1x4x8xf32> to vector<2x4x8xf32>
    %869 = vector.broadcast %867 : vector<2x4x1xf32> to vector<2x4x8xf32>
    %870 = arith.mulf %868, %869 : vector<2x4x8xf32>
    %871 = arith.addf %864, %870 : vector<2x4x8xf32>
    %872 = vector.extract_strided_slice %1 {offsets = [0, 124], sizes = [4, 8], strides = [1, 1]} : vector<4x136xf32> to vector<4x8xf32>
    %873 = vector.shape_cast %872 : vector<4x8xf32> to vector<1x4x8xf32>
    %874 = vector.extract_strided_slice %2 {offsets = [0, 0, 124], sizes = [2, 4, 1], strides = [1, 1, 1]} : vector<2x4x128xf32> to vector<2x4x1xf32>
    %875 = vector.broadcast %873 : vector<1x4x8xf32> to vector<2x4x8xf32>
    %876 = vector.broadcast %874 : vector<2x4x1xf32> to vector<2x4x8xf32>
    %877 = arith.mulf %875, %876 : vector<2x4x8xf32>
    %878 = arith.addf %871, %877 : vector<2x4x8xf32>
    %879 = vector.extract_strided_slice %1 {offsets = [0, 125], sizes = [4, 8], strides = [1, 1]} : vector<4x136xf32> to vector<4x8xf32>
    %880 = vector.shape_cast %879 : vector<4x8xf32> to vector<1x4x8xf32>
    %881 = vector.extract_strided_slice %2 {offsets = [0, 0, 125], sizes = [2, 4, 1], strides = [1, 1, 1]} : vector<2x4x128xf32> to vector<2x4x1xf32>
    %882 = vector.broadcast %880 : vector<1x4x8xf32> to vector<2x4x8xf32>
    %883 = vector.broadcast %881 : vector<2x4x1xf32> to vector<2x4x8xf32>
    %884 = arith.mulf %882, %883 : vector<2x4x8xf32>
    %885 = arith.addf %878, %884 : vector<2x4x8xf32>
    %886 = vector.extract_strided_slice %1 {offsets = [0, 126], sizes = [4, 8], strides = [1, 1]} : vector<4x136xf32> to vector<4x8xf32>
    %887 = vector.shape_cast %886 : vector<4x8xf32> to vector<1x4x8xf32>
    %888 = vector.extract_strided_slice %2 {offsets = [0, 0, 126], sizes = [2, 4, 1], strides = [1, 1, 1]} : vector<2x4x128xf32> to vector<2x4x1xf32>
    %889 = vector.broadcast %887 : vector<1x4x8xf32> to vector<2x4x8xf32>
    %890 = vector.broadcast %888 : vector<2x4x1xf32> to vector<2x4x8xf32>
    %891 = arith.mulf %889, %890 : vector<2x4x8xf32>
    %892 = arith.addf %885, %891 : vector<2x4x8xf32>
    %893 = vector.extract_strided_slice %1 {offsets = [0, 127], sizes = [4, 8], strides = [1, 1]} : vector<4x136xf32> to vector<4x8xf32>
    %894 = vector.shape_cast %893 : vector<4x8xf32> to vector<1x4x8xf32>
    %895 = vector.extract_strided_slice %2 {offsets = [0, 0, 127], sizes = [2, 4, 1], strides = [1, 1, 1]} : vector<2x4x128xf32> to vector<2x4x1xf32>
    %896 = vector.broadcast %894 : vector<1x4x8xf32> to vector<2x4x8xf32>
    %897 = vector.broadcast %895 : vector<2x4x1xf32> to vector<2x4x8xf32>
    %898 = arith.mulf %896, %897 : vector<2x4x8xf32>
    %899 = arith.addf %892, %898 : vector<2x4x8xf32>
    %c0_5 = arith.constant 0 : index
    %c0_6 = arith.constant 0 : index
    %c0_7 = arith.constant 0 : index
    %c0_8 = arith.constant 0 : index
    %900 = vector.load %arg3[%c0_5, %c0_6, %c0_7, %c0_8] : memref<1x2x4x8xf32, #tpu.memory_space<vmem>>, vector<1x2x4x8xf32>
    %901 = vector.shape_cast %900 : vector<1x2x4x8xf32> to vector<2x4x8xf32>
    %902 = vector.shape_cast %899 : vector<2x4x8xf32> to vector<1x2x4x8xf32>
    tpu.vector_store %arg3[%c0_5, %c0_6, %c0_7, %c0_8], %902 {strides = array<i32>} : memref<1x2x4x8xf32, #tpu.memory_space<vmem>>, vector<1x2x4x8xf32>,
    %cst_9 = arith.constant dense<0.000000e+00> : vector<2x4xf32>
    %903 = vector.multi_reduction <add>, %899, %cst_9 [2] : vector<2x4x8xf32> to vector<2x4xf32>
    %c0_10 = arith.constant 0 : index
    %c0_11 = arith.constant 0 : index
    %c0_12 = arith.constant 0 : index
    %c0_13 = arith.constant 0 : index
    %904 = vector.load %arg4[%c0_10, %c0_11, %c0_12, %c0_13] : memref<1x2x2x4xf32, #tpu.memory_space<vmem>>, vector<1x1x2x4xf32>
    %905 = vector.shape_cast %904 : vector<1x1x2x4xf32> to vector<2x4xf32>
    %906 = vector.shape_cast %903 : vector<2x4xf32> to vector<1x1x2x4xf32>
    tpu.vector_store %arg4[%c0_10, %c0_11, %c0_12, %c0_13], %906 {strides = array<i32>} : memref<1x2x2x4xf32, #tpu.memory_space<vmem>>, vector<1x1x2x4xf32>,
    %907 = arith.mulf %899, %899 : vector<2x4x8xf32>
    %cst_14 = arith.constant dense<0.000000e+00> : vector<2x4xf32>
    %908 = vector.multi_reduction <add>, %907, %cst_14 [2] : vector<2x4x8xf32> to vector<2x4xf32>
    %c0_15 = arith.constant 0 : index
    %c1 = arith.constant 1 : index
    %c0_16 = arith.constant 0 : index
    %c0_17 = arith.constant 0 : index
    %909 = vector.load %arg4[%c0_15, %c1, %c0_16, %c0_17] : memref<1x2x2x4xf32, #tpu.memory_space<vmem>>, vector<1x1x2x4xf32>
    %910 = vector.shape_cast %909 : vector<1x1x2x4xf32> to vector<2x4xf32>
    %911 = vector.shape_cast %908 : vector<2x4xf32> to vector<1x1x2x4xf32>
    tpu.vector_store %arg4[%c0_15, %c1, %c0_16, %c0_17], %911 {strides = array<i32>} : memref<1x2x2x4xf32, #tpu.memory_space<vmem>>, vector<1x1x2x4xf32>,
    return
  }
  func.func @transform_0(%arg0: i32) -> (i32, i32, i32) {
    %c0_i32 = arith.constant 0 : i32
    %c0_i32_0 = arith.constant 0 : i32
    %c0_i32_1 = arith.constant 0 : i32
    return %arg0, %c0_i32, %c0_i32_0 : i32, i32, i32
  }
  func.func @transform_1(%arg0: i32) -> (i32, i32, i32) {
    %c0_i32 = arith.constant 0 : i32
    %c0_i32_0 = arith.constant 0 : i32
    %c0_i32_1 = arith.constant 0 : i32
    %c0_i32_2 = arith.constant 0 : i32
    return %c0_i32, %c0_i32_0, %c0_i32_1 : i32, i32, i32
  }
  func.func @transform_2(%arg0: i32) -> (i32, i32, i32, i32) {
    %c0_i32 = arith.constant 0 : i32
    %c0_i32_0 = arith.constant 0 : i32
    %c0_i32_1 = arith.constant 0 : i32
    %c0_i32_2 = arith.constant 0 : i32
    return %arg0, %c0_i32, %c0_i32_0, %c0_i32_1 : i32, i32, i32, i32
  }
  func.func @transform_3(%arg0: i32) -> (i32, i32, i32, i32) {
    %c0_i32 = arith.constant 0 : i32
    %c0_i32_0 = arith.constant 0 : i32
    %c0_i32_1 = arith.constant 0 : i32
    %c0_i32_2 = arith.constant 0 : i32
    return %arg0, %c0_i32, %c0_i32_0, %c0_i32_1 : i32, i32, i32, i32
  }
}

module attributes {stable_mosaic.version = 11 : i64} {
  func.func @bn_normalize_kernel(%arg0: i32, %arg1: memref<1x2x4x8xf32, #tpu.memory_space<vmem>>, %arg2: memref<2x4x1xf32, #tpu.memory_space<vmem>>, %arg3: memref<2x4x1xf32, #tpu.memory_space<vmem>>, %arg4: memref<1x2x4x8xf32, #tpu.memory_space<vmem>>) attributes {dimension_semantics = [#tpu.dimension_semantics<parallel>], iteration_bounds = array<i64: 2>, scalar_prefetch = 0 : i64, scratch_operands = 0 : i64, tpu.core_type = #tpu.core_type<tc>, window_params = [{transform_indices = @transform_0, window_bounds = array<i64: 1, 2, 4, 8>}, {pipeline_mode = #tpu.pipeline_mode<synchronous>, transform_indices = @transform_1, window_bounds = array<i64: 2, 4, 1>}, {pipeline_mode = #tpu.pipeline_mode<synchronous>, transform_indices = @transform_2, window_bounds = array<i64: 2, 4, 1>}, {transform_indices = @transform_3, window_bounds = array<i64: 1, 2, 4, 8>}]} {
    %c0 = arith.constant 0 : index
    %c0_0 = arith.constant 0 : index
    %c0_1 = arith.constant 0 : index
    %c0_2 = arith.constant 0 : index
    %0 = vector.load %arg1[%c0, %c0_0, %c0_1, %c0_2] : memref<1x2x4x8xf32, #tpu.memory_space<vmem>>, vector<1x2x4x8xf32>
    %1 = vector.shape_cast %0 : vector<1x2x4x8xf32> to vector<2x4x8xf32>
    %c0_3 = arith.constant 0 : index
    %c0_4 = arith.constant 0 : index
    %c0_5 = arith.constant 0 : index
    %2 = vector.load %arg2[%c0_3, %c0_4, %c0_5] : memref<2x4x1xf32, #tpu.memory_space<vmem>>, vector<2x4x1xf32>
    %3 = vector.broadcast %2 : vector<2x4x1xf32> to vector<2x4x8xf32>
    %4 = arith.subf %1, %3 : vector<2x4x8xf32>
    %c0_6 = arith.constant 0 : index
    %c0_7 = arith.constant 0 : index
    %c0_8 = arith.constant 0 : index
    %5 = vector.load %arg3[%c0_6, %c0_7, %c0_8] : memref<2x4x1xf32, #tpu.memory_space<vmem>>, vector<2x4x1xf32>
    %6 = vector.broadcast %5 : vector<2x4x1xf32> to vector<2x4x8xf32>
    %7 = arith.mulf %4, %6 : vector<2x4x8xf32>
    %c0_9 = arith.constant 0 : index
    %c0_10 = arith.constant 0 : index
    %c0_11 = arith.constant 0 : index
    %c0_12 = arith.constant 0 : index
    %8 = vector.load %arg4[%c0_9, %c0_10, %c0_11, %c0_12] : memref<1x2x4x8xf32, #tpu.memory_space<vmem>>, vector<1x2x4x8xf32>
    %9 = vector.shape_cast %8 : vector<1x2x4x8xf32> to vector<2x4x8xf32>
    %10 = vector.shape_cast %7 : vector<2x4x8xf32> to vector<1x2x4x8xf32>
    tpu.vector_store %arg4[%c0_9, %c0_10, %c0_11, %c0_12], %10 {strides = array<i32>} : memref<1x2x4x8xf32, #tpu.memory_space<vmem>>, vector<1x2x4x8xf32>,
    return
  }
  func.func @transform_0(%arg0: i32) -> (i32, i32, i32, i32) {
    %c0_i32 = arith.constant 0 : i32
    %c0_i32_0 = arith.constant 0 : i32
    %c0_i32_1 = arith.constant 0 : i32
    %c0_i32_2 = arith.constant 0 : i32
    return %arg0, %c0_i32, %c0_i32_0, %c0_i32_1 : i32, i32, i32, i32
  }
  func.func @transform_1(%arg0: i32) -> (i32, i32, i32) {
    %c0_i32 = arith.constant 0 : i32
    %c0_i32_0 = arith.constant 0 : i32
    %c0_i32_1 = arith.constant 0 : i32
    %c0_i32_2 = arith.constant 0 : i32
    return %c0_i32, %c0_i32_0, %c0_i32_1 : i32, i32, i32
  }
  func.func @transform_2(%arg0: i32) -> (i32, i32, i32) {
    %c0_i32 = arith.constant 0 : i32
    %c0_i32_0 = arith.constant 0 : i32
    %c0_i32_1 = arith.constant 0 : i32
    %c0_i32_2 = arith.constant 0 : i32
    return %c0_i32, %c0_i32_0, %c0_i32_1 : i32, i32, i32
  }
  func.func @transform_3(%arg0: i32) -> (i32, i32, i32, i32) {
    %c0_i32 = arith.constant 0 : i32
    %c0_i32_0 = arith.constant 0 : i32
    %c0_i32_1 = arith.constant 0 : i32
    %c0_i32_2 = arith.constant 0 : i32
    return %arg0, %c0_i32, %c0_i32_0, %c0_i32_1 : i32, i32, i32, i32
  }
}

</mosaic_0001>

<llo_original>
// kernel: feature_layer_forward.3
$region0: #{feature_layer_forward.3}
  #allocation0 [shape = 'u32[]', space=smem, size = 0x4, offset = 0x4, fixed_abs, tag = 'smem constant byte address 0x4 - core index']
  #allocation1 [shape = 'u32[72,128]{1,0:T(1,128)}', space=vmem, size = 0x9000, scoped, tag = 'internal scratch']
  %s0 = inlined_call_operand.vmem [shape: f32[2,2,4,8], index: 0, kind: input, shape index: {}]
  %s1 = inlined_call_operand.vmem [shape: f32[2,4,1], index: 1, kind: input, shape index: {}]
  %s2 = inlined_call_operand.vmem [shape: f32[2,4,1], index: 2, kind: input, shape index: {}]
  %s3 = inlined_call_operand.vmem [shape: f32[2,2,4,8], index: 3, kind: output, shape index: {}]
  %s4 = sld [smem:[#allocation0]]
  $region45: #{feature_layer_forward.3} parent=0
    _
  %s6 = ssub.s32 1, %s4
  %s7 = scalar_select 0, %s6, %s4
  loop: start=0, step=1, limit=4
  $region2: #{feature_layer_forward.3} parent=0 // loop_pre_header
    _
  $region3: #{feature_layer_forward.3} parent=0 // loop_header
    %s9 = sphi 0, %s13
    %p10 = scmp.ge.s32.totalorder %s9, 4
    %s19 = sphi 0, %s21
    %s22 = sphi 0, %s19
    %s23 = sphi 0, %s22
    %s39 = sphi 0, %s23
    %s43 = sphi 0, %s43
    %s45 = sphi 0, %s43
    %s46 = sphi 0, %s45
    %s60 = sphi 0, %s46
    %s64 = sphi 0, %s64
    %s66 = sphi 0, %s64
    %s67 = sphi 0, %s66
    %s81 = sphi 0, %s67
    %s87 = sphi 0, %s89
    %s90 = sphi 0, %s87
    %s91 = sphi 0, %s90
    %s107 = sphi 0, %s91
  $region4: #{feature_layer_forward.3} parent=0 // loop_header_branch
    %12 = sbr.rel (%p10) target = $region8
  $region5: #{feature_layer_forward.3} parent=0 // loop_body
    %s14 = ssub.s32 %s9, 1
    %s15 = ssub.s32 %s9, 2
    %s16 = sadd.s32 %s9, 1
    %s17 = ssub.s32 %s9, %s16
    %p18 = scmp.eq.s32.totalorder %s17, 0
    %s20 = sadd.s32 %s19, 1
    %s21 = scalar_select %p18, %s19, %s20
    %p24 = pneg %p18
    %p25 = scmp.eq.s32.totalorder %s9, 1
    %p26 = por %p24, %p25
    %p27 = scmp.ne.s32.totalorder %s19, %s22
    %p28 = scmp.eq.s32.totalorder %s9, 0
    %p29 = por %p27, %p28
    %p30 = scmp.ne.s32.totalorder %s19, %s22
    %p31 = scmp.eq.s32.totalorder %s14, 1
    %p32 = por %p30, %p31
    %p33 = scmp.ne.s32.totalorder %s22, %s23
    %p34 = scmp.eq.s32.totalorder %s14, 0
    %p35 = por %p33, %p34
    %p36 = scmp.ne.s32.totalorder %s22, %s23
    %p37 = scmp.eq.s32.totalorder %s15, 1
    %p38 = por %p36, %p37
    %p40 = scmp.ne.s32.totalorder %s23, %s39
    %p41 = scmp.eq.s32.totalorder %s15, 0
    %p42 = por %p40, %p41
    %s44 = sadd.s32 %s43, 1
    %p47 = scmp.eq.s32.totalorder %s9, 1
    %p48 = scmp.ne.s32.totalorder %s43, %s45
    %p49 = scmp.eq.s32.totalorder %s9, 0
    %p50 = por %p48, %p49
    %p51 = scmp.ne.s32.totalorder %s43, %s45
    %p52 = scmp.eq.s32.totalorder %s14, 1
    %p53 = por %p51, %p52
    %p54 = scmp.ne.s32.totalorder %s45, %s46
    %p55 = scmp.eq.s32.totalorder %s14, 0
    %p56 = por %p54, %p55
    %p57 = scmp.ne.s32.totalorder %s45, %s46
    %p58 = scmp.eq.s32.totalorder %s15, 1
    %p59 = por %p57, %p58
    %p61 = scmp.ne.s32.totalorder %s46, %s60
    %p62 = scmp.eq.s32.totalorder %s15, 0
    %p63 = por %p61, %p62
    %s65 = sadd.s32 %s64, 1
    %p68 = scmp.eq.s32.totalorder %s9, 1
    %p69 = scmp.ne.s32.totalorder %s64, %s66
    %p70 = scmp.eq.s32.totalorder %s9, 0
    %p71 = por %p69, %p70
    %p72 = scmp.ne.s32.totalorder %s64, %s66
    %p73 = scmp.eq.s32.totalorder %s14, 1
    %p74 = por %p72, %p73
    %p75 = scmp.ne.s32.totalorder %s66, %s67
    %p76 = scmp.eq.s32.totalorder %s14, 0
    %p77 = por %p75, %p76
    %p78 = scmp.ne.s32.totalorder %s66, %s67
    %p79 = scmp.eq.s32.totalorder %s15, 1
    %p80 = por %p78, %p79
    %p82 = scmp.ne.s32.totalorder %s67, %s81
    %p83 = scmp.eq.s32.totalorder %s15, 0
    %p84 = por %p82, %p83
    %s85 = ssub.s32 %s9, %s16
    %p86 = scmp.eq.s32.totalorder %s85, 0
    %s88 = sadd.s32 %s87, 1
    %s89 = scalar_select %p86, %s87, %s88
    %p92 = pneg %p86
    %p93 = scmp.eq.s32.totalorder %s9, 1
    %p94 = por %p92, %p93
    %p95 = scmp.ne.s32.totalorder %s87, %s90
    %p96 = scmp.eq.s32.totalorder %s9, 0
    %p97 = por %p95, %p96
    %p98 = scmp.ne.s32.totalorder %s87, %s90
    %p99 = scmp.eq.s32.totalorder %s14, 1
    %p100 = por %p98, %p99
    %p101 = scmp.ne.s32.totalorder %s90, %s91
    %p102 = scmp.eq.s32.totalorder %s14, 0
    %p103 = por %p101, %p102
    %p104 = scmp.ne.s32.totalorder %s90, %s91
    %p105 = scmp.eq.s32.totalorder %s15, 1
    %p106 = por %p104, %p105
    %p108 = scmp.ne.s32.totalorder %s91, %s107
    %p109 = scmp.eq.s32.totalorder %s15, 0
    %p110 = por %p108, %p109
    %p111 = scmp.le.s32.totalorder 1, %s9
    %p112 = scmp.lt.s32.totalorder %s9, 3
    %p113 = pnand %p111, %p112
    %p114 = pneg %p113
    // Predicated region
    $region9: #{feature_layer_forward.3} parent=5 // pred_check
      _
    $region10: #{feature_layer_forward.3} parent=5 // pred_check_branch
      %116 = sbr.rel (%p113) target = $region12
    $region11: #{feature_layer_forward.3} parent=5 // pred_region
      %s117 = ssub.s32 %s9, 1
      // Predicated region
      $region13: #{feature_layer_forward.3} parent=11 // pred_check
        %p118 = pneg %p56
      $region14: #{feature_layer_forward.3} parent=11 // pred_check_branch
        %120 = sbr.rel (%p118) target = $region16
      $region15: #{feature_layer_forward.3} parent=11 // pred_region
        _
      $region16: #{feature_layer_forward.3} parent=11 // pred_fallthru
        _
      // Predicated region
      $region17: #{feature_layer_forward.3} parent=11 // pred_check
        %p121 = pneg %p77
      $region18: #{feature_layer_forward.3} parent=11 // pred_check_branch
        %123 = sbr.rel (%p121) target = $region20
      $region19: #{feature_layer_forward.3} parent=11 // pred_region
        _
      $region20: #{feature_layer_forward.3} parent=11 // pred_fallthru
        _
    $region12: #{feature_layer_forward.3} parent=5 // pred_fallthru
      _
    %p124 = scmp.lt.s32.totalorder %s9, 2
    // Predicated region
    $region21: #{feature_layer_forward.3} parent=5 // pred_check
      %p125 = pneg %p124
    $region22: #{feature_layer_forward.3} parent=5 // pred_check_branch
      %127 = sbr.rel (%p125) target = $region24
    $region23: #{feature_layer_forward.3} parent=5 // pred_region
      // Predicated region
      $region25: #{feature_layer_forward.3} parent=23 // pred_check
        %p128 = pneg %p29
      $region26: #{feature_layer_forward.3} parent=23 // pred_check_branch
        %130 = sbr.rel (%p128) target = $region28
      $region27: #{feature_layer_forward.3} parent=23 // pred_region
        %p131 = scmp.lt.s32.totalorder %s9, 1
        %s132 = scalar_select %p131, %s9, 1
        %s133 = smul.addr %s132, 2
        %s134 = smul.addr %s133, 4
        %s135 = scalar_lea.vmem %s0, %s134
      $region28: #{feature_layer_forward.3} parent=23 // pred_fallthru
        _
    $region24: #{feature_layer_forward.3} parent=5 // pred_fallthru
      _
    %p136 = scmp.le.s32.totalorder 1, %s9
    %p137 = scmp.lt.s32.totalorder %s9, 3
    %p138 = pnand %p136, %p137
    %p139 = pneg %p138
    // Predicated region
    $region29: #{feature_layer_forward.3} parent=5 // pred_check
      _
    $region30: #{feature_layer_forward.3} parent=5 // pred_check_branch
      %141 = sbr.rel (%p138) target = $region32
    $region31: #{feature_layer_forward.3} parent=5 // pred_region
      %s142 = ssub.s32 %s9, 1
      %p143 = scmp.lt.s32.totalorder %s14, 1
      %s144 = scalar_select %p143, %s14, 1
      %s145 = smul.addr %s144, 2
      %s146 = smul.addr %s145, 4
      %s147 = scalar_lea.vmem %s0, %s146
      %p148 = pneg %p35
      %p149 = pneg %p32
      %p150 = pneg %p56
      %p151 = pneg %p53
      %p152 = pneg %p77
      %p153 = pneg %p74
      %p154 = pneg %p103
      %p155 = pneg %p100
      %p156 = scmp.lt.s32.totalorder %s14, 1
      %s157 = scalar_select %p156, %s14, 1
      %s158 = smul.addr %s157, 2
      %s159 = smul.addr %s158, 4
      %s160 = scalar_lea.vmem %s3, %s159
      %p161 = scmp.lt.s32.totalorder %s14, 1
      %s162 = scalar_select %p161, %s14, 1
      %s163 = smul.addr %s162, 2
      %s164 = smul.addr %s163, 4
      %s165 = scalar_lea.vmem %s0, %s164
      %p166 = scmp.lt.s32.totalorder %s14, 1
      %s167 = scalar_select %p166, %s14, 1
      %s168 = smul.addr %s167, 2
      %s169 = smul.addr %s168, 4
      %s170 = scalar_lea.vmem %s3, %s169
      %v171 = vld [vmem:[%s165] sm:$0xf]
      %v172 = vld [vmem:[%s165 + $0x4] sm:$0xf]
      %v173 = vld [vmem:[%s1] sm:$0xf]
      %v174 = vld [vmem:[%s1 + $0x4] sm:$0xf]
      %176 = vset.pattern.permute.xlu0 0
      %177 = vperm.xlu0 %176, %v173
      %v178 = vpop.permute.xlu0 %177
      %181 = vset.pattern.permute.xlu0 0
      %182 = vperm.xlu0 %181, %v174
      %v183 = vpop.permute.xlu0 %182
      %v185 = vsub.f32 %v171, %v178
      %v186 = vsub.f32 %v172, %v183
      %v187 = vld [vmem:[%s2] sm:$0xf]
      %v188 = vld [vmem:[%s2 + $0x4] sm:$0xf]
      %190 = vset.pattern.permute.xlu0 0
      %191 = vperm.xlu0 %190, %v187
      %v192 = vpop.permute.xlu0 %191
      %195 = vset.pattern.permute.xlu0 0
      %196 = vperm.xlu0 %195, %v188
      %v197 = vpop.permute.xlu0 %196
      %v199 = vmul.f32 %v185, %v192
      %v200 = vmul.f32 %v186, %v197
      %vm201 = vcmask 60416
      %202 = vst.msk [vmem:[%s170] sm:$0xf] %vm201, %v199
      %203 = vst.msk [vmem:[%s170 + $0x4] sm:$0xf] %vm201, %v200
      %p204 = scmp.lt.s32.totalorder %s14, 1
      %s205 = scalar_select %p204, %s14, 1
      %s206 = smul.addr %s205, 2
      %s207 = smul.addr %s206, 4
      %s208 = scalar_lea.vmem %s3, %s207
      // Predicated region
      $region33: #{feature_layer_forward.3} parent=31 // pred_check
        %p209 = pneg %p100
      $region34: #{feature_layer_forward.3} parent=31 // pred_check_branch
        %211 = sbr.rel (%p209) target = $region36
      $region35: #{feature_layer_forward.3} parent=31 // pred_region
        _
      $region36: #{feature_layer_forward.3} parent=31 // pred_fallthru
        _
    $region32: #{feature_layer_forward.3} parent=5 // pred_fallthru
      _
    %p212 = scmp.le.s32.totalorder 2, %s9
    // Predicated region
    $region37: #{feature_layer_forward.3} parent=5 // pred_check
      %p213 = pneg %p212
    $region38: #{feature_layer_forward.3} parent=5 // pred_check_branch
      %215 = sbr.rel (%p213) target = $region40
    $region39: #{feature_layer_forward.3} parent=5 // pred_region
      %s216 = ssub.s32 %s9, 2
      // Predicated region
      $region41: #{feature_layer_forward.3} parent=39 // pred_check
        %p217 = pneg %p106
      $region42: #{feature_layer_forward.3} parent=39 // pred_check_branch
        %219 = sbr.rel (%p217) target = $region44
      $region43: #{feature_layer_forward.3} parent=39 // pred_region
        %p220 = scmp.lt.s32.totalorder %s15, 1
        %s221 = scalar_select %p220, %s15, 1
        %s222 = smul.addr %s221, 2
        %s223 = smul.addr %s222, 4
        %s224 = scalar_lea.vmem %s3, %s223
      $region44: #{feature_layer_forward.3} parent=39 // pred_fallthru
        _
    $region40: #{feature_layer_forward.3} parent=5 // pred_fallthru
      _
  $region6: #{feature_layer_forward.3} parent=0 // loop_footer
    %s13 = sadd.s32 1, %s9
  $region7: #{feature_layer_forward.3} parent=0 // loop_footer_branch
    %8 = sbr.rel target = $region3
  $region8: #{feature_layer_forward.3} parent=0 // loop_exit
    _

// kernel: feature_layer_forward.2
$region0: #{feature_layer_forward.2}
  #allocation0 [shape = 'u32[]', space=smem, size = 0x4, offset = 0x4, fixed_abs, tag = 'smem constant byte address 0x4 - core index']
  #allocation1 [shape = 'u32[72,128]{1,0:T(1,128)}', space=vmem, size = 0x9000, scoped, tag = 'internal scratch']
  %s0 = inlined_call_operand.hbm [shape: f32[2,4,136], index: 0, kind: input, shape index: {}]
  %s1 = inlined_call_operand.hbm [shape: f32[2,4,128], index: 1, kind: input, shape index: {}]
  %s2 = inlined_call_operand.vmem [shape: f32[2,2,4,8], index: 2, kind: output, shape index: {0}]
  %s3 = inlined_call_operand.vmem [shape: f32[2,2,2,4], index: 3, kind: output, shape index: {1}]
  %4 = xla_tuple %s2, %s3
  %s5 = sld [smem:[#allocation0]]
  $region57: #{feature_layer_forward.2} parent=0
    _
  %s7 = ssub.s32 1, %s5
  %s8 = scalar_select 0, %s7, %s5
  $region1: #{feature_layer_forward.2} parent=0
    #allocation2 [shape = 'u8[8192]{0}', space=vmem, size = 0x2000, scoped, tag = 'input window, operand 0']
    #allocation3 [shape = 's32[2]{0}', space=sflag, size = 0x8, scoped, tag = 'scoped memory for feature_layer_forward.2']
    #allocation4 [shape = 'u8[4096]{0}', space=vmem, size = 0x1000, scoped, tag = 'input window, operand 1, single buffered']
    #allocation5 [shape = 's32[1]{0}', space=sflag, size = 0x4, scoped, tag = 'scoped memory for feature_layer_forward.2']
    %9 = vsyncpa [#allocation3], 0
    %s10 = scalar_lea.sflag [#allocation3], 1
    %11 = vsyncpa %s10, 0
    %12 = vsyncpa [#allocation5], 0
    loop: start=0, step=1, limit=4
    $region2: #{feature_layer_forward.2} parent=1 // loop_pre_header
      _
    $region3: #{feature_layer_forward.2} parent=1 // loop_header
      %s14 = sphi 0, %s18
      %p15 = scmp.ge.s32.totalorder %s14, 4
      %s24 = sphi 0, %s26
      %s27 = sphi 0, %s24
      %s28 = sphi 0, %s27
      %s44 = sphi 0, %s28
      %s48 = sphi 0, %s48
      %s50 = sphi 0, %s48
      %s51 = sphi 0, %s50
      %s65 = sphi 0, %s51
      %s71 = sphi 0, %s73
      %s74 = sphi 0, %s71
      %s75 = sphi 0, %s74
      %s91 = sphi 0, %s75
      %s97 = sphi 0, %s99
      %s100 = sphi 0, %s97
      %s101 = sphi 0, %s100
      %s117 = sphi 0, %s101
    $region4: #{feature_layer_forward.2} parent=1 // loop_header_branch
      %17 = sbr.rel (%p15) target = $region8
    $region5: #{feature_layer_forward.2} parent=1 // loop_body
      %s19 = ssub.s32 %s14, 1
      %s20 = ssub.s32 %s14, 2
      %s21 = sadd.s32 %s14, 1
      %s22 = ssub.s32 %s14, %s21
      %p23 = scmp.eq.s32.totalorder %s22, 0
      %s25 = sadd.s32 %s24, 1
      %s26 = scalar_select %p23, %s24, %s25
      %p29 = pneg %p23
      %p30 = scmp.eq.s32.totalorder %s14, 1
      %p31 = por %p29, %p30
      %p32 = scmp.ne.s32.totalorder %s24, %s27
      %p33 = scmp.eq.s32.totalorder %s14, 0
      %p34 = por %p32, %p33
      %p35 = scmp.ne.s32.totalorder %s24, %s27
      %p36 = scmp.eq.s32.totalorder %s19, 1
      %p37 = por %p35, %p36
      %p38 = scmp.ne.s32.totalorder %s27, %s28
      %p39 = scmp.eq.s32.totalorder %s19, 0
      %p40 = por %p38, %p39
      %p41 = scmp.ne.s32.totalorder %s27, %s28
      %p42 = scmp.eq.s32.totalorder %s20, 1
      %p43 = por %p41, %p42
      %p45 = scmp.ne.s32.totalorder %s28, %s44
      %p46 = scmp.eq.s32.totalorder %s20, 0
      %p47 = por %p45, %p46
      %s49 = sadd.s32 %s48, 1
      %p52 = scmp.eq.s32.totalorder %s14, 1
      %p53 = scmp.ne.s32.totalorder %s48, %s50
      %p54 = scmp.eq.s32.totalorder %s14, 0
      %p55 = por %p53, %p54
      %p56 = scmp.ne.s32.totalorder %s48, %s50
      %p57 = scmp.eq.s32.totalorder %s19, 1
      %p58 = por %p56, %p57
      %p59 = scmp.ne.s32.totalorder %s50, %s51
      %p60 = scmp.eq.s32.totalorder %s19, 0
      %p61 = por %p59, %p60
      %p62 = scmp.ne.s32.totalorder %s50, %s51
      %p63 = scmp.eq.s32.totalorder %s20, 1
      %p64 = por %p62, %p63
      %p66 = scmp.ne.s32.totalorder %s51, %s65
      %p67 = scmp.eq.s32.totalorder %s20, 0
      %p68 = por %p66, %p67
      %s69 = ssub.s32 %s14, %s21
      %p70 = scmp.eq.s32.totalorder %s69, 0
      %s72 = sadd.s32 %s71, 1
      %s73 = scalar_select %p70, %s71, %s72
      %p76 = pneg %p70
      %p77 = scmp.eq.s32.totalorder %s14, 1
      %p78 = por %p76, %p77
      %p79 = scmp.ne.s32.totalorder %s71, %s74
      %p80 = scmp.eq.s32.totalorder %s14, 0
      %p81 = por %p79, %p80
      %p82 = scmp.ne.s32.totalorder %s71, %s74
      %p83 = scmp.eq.s32.totalorder %s19, 1
      %p84 = por %p82, %p83
      %p85 = scmp.ne.s32.totalorder %s74, %s75
      %p86 = scmp.eq.s32.totalorder %s19, 0
      %p87 = por %p85, %p86
      %p88 = scmp.ne.s32.totalorder %s74, %s75
      %p89 = scmp.eq.s32.totalorder %s20, 1
      %p90 = por %p88, %p89
      %p92 = scmp.ne.s32.totalorder %s75, %s91
      %p93 = scmp.eq.s32.totalorder %s20, 0
      %p94 = por %p92, %p93
      %s95 = ssub.s32 %s14, %s21
      %p96 = scmp.eq.s32.totalorder %s95, 0
      %s98 = sadd.s32 %s97, 1
      %s99 = scalar_select %p96, %s97, %s98
      %p102 = pneg %p96
      %p103 = scmp.eq.s32.totalorder %s14, 1
      %p104 = por %p102, %p103
      %p105 = scmp.ne.s32.totalorder %s97, %s100
      %p106 = scmp.eq.s32.totalorder %s14, 0
      %p107 = por %p105, %p106
      %p108 = scmp.ne.s32.totalorder %s97, %s100
      %p109 = scmp.eq.s32.totalorder %s19, 1
      %p110 = por %p108, %p109
      %p111 = scmp.ne.s32.totalorder %s100, %s101
      %p112 = scmp.eq.s32.totalorder %s19, 0
      %p113 = por %p111, %p112
      %p114 = scmp.ne.s32.totalorder %s100, %s101
      %p115 = scmp.eq.s32.totalorder %s20, 1
      %p116 = por %p114, %p115
      %p118 = scmp.ne.s32.totalorder %s101, %s117
      %p119 = scmp.eq.s32.totalorder %s20, 0
      %p120 = por %p118, %p119
      %p121 = scmp.le.s32.totalorder 1, %s14
      %p122 = scmp.lt.s32.totalorder %s14, 3
      %p123 = pnand %p121, %p122
      %p124 = pneg %p123
      // Predicated region
      $region9: #{feature_layer_forward.2} parent=5 // pred_check
        _
      $region10: #{feature_layer_forward.2} parent=5 // pred_check_branch
        %126 = sbr.rel (%p123) target = $region12
      $region11: #{feature_layer_forward.2} parent=5 // pred_region
        %s127 = ssub.s32 %s14, 1
        // Predicated region
        $region13: #{feature_layer_forward.2} parent=11 // pred_check
          %p128 = pneg %p61
        $region14: #{feature_layer_forward.2} parent=11 // pred_check_branch
          %130 = sbr.rel (%p128) target = $region16
        $region15: #{feature_layer_forward.2} parent=11 // pred_region
          %132 = vsyncadd [#allocation5], 0
          %s133 = sshll.u32 %s1, 4
          %s134 = int_to_ptr.hbm [resolvable:$true] %s133
          %s135 = sshll.u32 [#allocation4], 4
          %s136 = int_to_ptr.vmem [resolvable:$true] %s135
          %141 = dma.hbm_to_vmem [thread:$0]  %s134, 128, %s136, [#allocation5], 64, 64, 4
        $region16: #{feature_layer_forward.2} parent=11 // pred_fallthru
          _
      $region12: #{feature_layer_forward.2} parent=5 // pred_fallthru
        _
      %p142 = scmp.lt.s32.totalorder %s14, 2
      // Predicated region
      $region17: #{feature_layer_forward.2} parent=5 // pred_check
        %p143 = pneg %p142
      $region18: #{feature_layer_forward.2} parent=5 // pred_check_branch
        %145 = sbr.rel (%p143) target = $region20
      $region19: #{feature_layer_forward.2} parent=5 // pred_region
        // Predicated region
        $region21: #{feature_layer_forward.2} parent=19 // pred_check
          %p146 = pneg %p34
        $region22: #{feature_layer_forward.2} parent=19 // pred_check_branch
          %148 = sbr.rel (%p146) target = $region24
        $region23: #{feature_layer_forward.2} parent=19 // pred_region
          %s149 = sand.u32 %s24, 1
          %s150 = scalar_lea.sflag [#allocation3], %s149
          %s151 = sand.u32 %s24, 1
          %s152 = smul.addr %s151, 8
          %s153 = scalar_lea.vmem [#allocation2], %s152
          %155 = vsyncadd %s150, 0
          %s156 = smul.addr %s14, 2
          %s157 = smul.addr %s156, 4
          %s158 = scalar_lea.hbm %s0, %s157
          %s160 = sshll.u32 %s158, 4
          %s161 = int_to_ptr.hbm [resolvable:$true] %s160
          %s162 = sshll.u32 %s153, 4
          %s163 = int_to_ptr.vmem [resolvable:$true] %s162
          %165 = dma.hbm_to_vmem [thread:$0]  %s161, 128, %s163, %s150
        $region24: #{feature_layer_forward.2} parent=19 // pred_fallthru
          _
      $region20: #{feature_layer_forward.2} parent=5 // pred_fallthru
        _
      %p166 = scmp.le.s32.totalorder 1, %s14
      %p167 = scmp.lt.s32.totalorder %s14, 3
      %p168 = pnand %p166, %p167
      %p169 = pneg %p168
      // Predicated region
      $region25: #{feature_layer_forward.2} parent=5 // pred_check
        _
      $region26: #{feature_layer_forward.2} parent=5 // pred_check_branch
        %171 = sbr.rel (%p168) target = $region28
      $region27: #{feature_layer_forward.2} parent=5 // pred_region
        %s172 = ssub.s32 %s14, 1
        %s173 = sand.u32 %s27, 1
        %s174 = scalar_lea.sflag [#allocation3], %s173
        %s175 = sand.u32 %s27, 1
        %s176 = smul.addr %s175, 8
        %s177 = scalar_lea.vmem [#allocation2], %s176
        // Predicated region
        $region29: #{feature_layer_forward.2} parent=27 // pred_check
          %p178 = pneg %p40
        $region30: #{feature_layer_forward.2} parent=27 // pred_check_branch
          %180 = sbr.rel (%p178) target = $region32
        $region31: #{feature_layer_forward.2} parent=27 // pred_region
          %182 = dma.done %s174, 128
        $region32: #{feature_layer_forward.2} parent=27 // pred_fallthru
          _
        // Predicated region
        $region33: #{feature_layer_forward.2} parent=27 // pred_check
          %p183 = pneg %p61
        $region34: #{feature_layer_forward.2} parent=27 // pred_check_branch
          %185 = sbr.rel (%p183) target = $region36
        $region35: #{feature_layer_forward.2} parent=27 // pred_region
          %187 = dma.done [#allocation5], 128
        $region36: #{feature_layer_forward.2} parent=27 // pred_fallthru
          _
        %s188 = sand.u32 %s27, 1
        %s189 = scalar_lea.sflag [#allocation3], %s188
        %s190 = sand.u32 %s27, 1
        %s191 = smul.addr %s190, 8
        %s192 = scalar_lea.vmem [#allocation2], %s191
        %p193 = pneg %p40
        %p194 = pneg %p37
        %p195 = pneg %p61
        %p196 = pneg %p58
        %p197 = pneg %p87
        %p198 = pneg %p84
        %p199 = scmp.lt.s32.totalorder %s19, 1
        %s200 = scalar_select %p199, %s19, 1
        %s201 = smul.addr %s200, 2
        %s202 = smul.addr %s201, 4
        %s203 = scalar_lea.vmem %s2, %s202
        %p204 = pneg %p113
        %p205 = pneg %p110
        %p206 = scmp.lt.s32.totalorder %s19, 1
        %s207 = scalar_select %p206, %s19, 1
        %s208 = smul.addr %s207, 2
        %s209 = smul.addr %s208, 2
        %s210 = scalar_lea.vmem %s3, %s209
        %p211 = scmp.lt.s32.totalorder %s19, 1
        %s212 = scalar_select %p211, %s19, 1
        %s213 = smul.addr %s212, 2
        %s214 = smul.addr %s213, 4
        %s215 = scalar_lea.vmem %s2, %s214
        %p216 = scmp.lt.s32.totalorder %s19, 1
        %s217 = scalar_select %p216, %s19, 1
        %s218 = smul.addr %s217, 2
        %s219 = smul.addr %s218, 2
        %s220 = scalar_lea.vmem %s3, %s219
        %v221 = vld [vmem:[%s177] sm:$0xff]
        %v222 = vld [vmem:[#allocation4] sm:$0xf]
        %v223 = vld [vmem:[#allocation4 + $0x4] sm:$0xf]
        %225 = vset.pattern.permute.xlu0 0
        %226 = vperm.xlu0 %225, %v222
        %v227 = vpop.permute.xlu0 %226
        %230 = vset.pattern.permute.xlu0 0
        %231 = vperm.xlu0 %230, %v223
        %v232 = vpop.permute.xlu0 %231
        %v234 = vmul.f32 %v221, %v227
        %v235 = vmul.f32 %v221, %v232
        %v236 = vadd.f32 %v234, 0.0
        %v237 = vadd.f32 %v235, 0.0
        %238 = vset.pattern.permute.xlu0 1
        %239 = vperm.xlu0 %238, %v222
        %v240 = vpop.permute.xlu0 %239
        %242 = vset.pattern.permute.xlu0 1
        %243 = vperm.xlu0 %242, %v223
        %v244 = vpop.permute.xlu0 %243
        %v246 = vmul.f32 %v221, %v240
        %v247 = vmul.f32 %v221, %v244
        %250 = vrot.lane.b32.xlu0 %v246, 127
        %v251 = vpop.permute.xlu0 %250
        %252 = vrot.lane.b32.xlu0 %v247, 127
        %v253 = vpop.permute.xlu0 %252
        %v256 = vadd.f32 %v236, %v251
        %v257 = vadd.f32 %v237, %v253
        %258 = vset.pattern.permute.xlu0 2
        %259 = vperm.xlu0 %258, %v222
        %v260 = vpop.permute.xlu0 %259
        %262 = vset.pattern.permute.xlu0 2
        %263 = vperm.xlu0 %262, %v223
        %v264 = vpop.permute.xlu0 %263
        %v266 = vmul.f32 %v221, %v260
        %v267 = vmul.f32 %v221, %v264
        %270 = vrot.lane.b32.xlu0 %v266, 126
        %v271 = vpop.permute.xlu0 %270
        %272 = vrot.lane.b32.xlu0 %v267, 126
        %v273 = vpop.permute.xlu0 %272
        %v276 = vadd.f32 %v256, %v271
        %v277 = vadd.f32 %v257, %v273
        %278 = vset.pattern.permute.xlu0 3
        %279 = vperm.xlu0 %278, %v222
        %v280 = vpop.permute.xlu0 %279
        %282 = vset.pattern.permute.xlu0 3
        %283 = vperm.xlu0 %282, %v223
        %v284 = vpop.permute.xlu0 %283
        %v286 = vmul.f32 %v221, %v280
        %v287 = vmul.f32 %v221, %v284
        %290 = vrot.lane.b32.xlu0 %v286, 125
        %v291 = vpop.permute.xlu0 %290
        %292 = vrot.lane.b32.xlu0 %v287, 125
        %v293 = vpop.permute.xlu0 %292
        %v296 = vadd.f32 %v276, %v291
        %v297 = vadd.f32 %v277, %v293
        %298 = vset.pattern.permute.xlu0 4
        %299 = vperm.xlu0 %298, %v222
        %v300 = vpop.permute.xlu0 %299
        %302 = vset.pattern.permute.xlu0 4
        %303 = vperm.xlu0 %302, %v223
        %v304 = vpop.permute.xlu0 %303
        %v306 = vmul.f32 %v221, %v300
        %v307 = vmul.f32 %v221, %v304
        %310 = vrot.lane.b32.xlu0 %v306, 124
        %v311 = vpop.permute.xlu0 %310
        %312 = vrot.lane.b32.xlu0 %v307, 124
        %v313 = vpop.permute.xlu0 %312
        %v316 = vadd.f32 %v296, %v311
        %v317 = vadd.f32 %v297, %v313
        %318 = vset.pattern.permute.xlu0 5
        %319 = vperm.xlu0 %318, %v222
        %v320 = vpop.permute.xlu0 %319
        %322 = vset.pattern.permute.xlu0 5
        %323 = vperm.xlu0 %322, %v223
        %v324 = vpop.permute.xlu0 %323
        %v326 = vmul.f32 %v221, %v320
        %v327 = vmul.f32 %v221, %v324
        %330 = vrot.lane.b32.xlu0 %v326, 123
        %v331 = vpop.permute.xlu0 %330
        %332 = vrot.lane.b32.xlu0 %v327, 123
        %v333 = vpop.permute.xlu0 %332
        %v336 = vadd.f32 %v316, %v331
        %v337 = vadd.f32 %v317, %v333
        %338 = vset.pattern.permute.xlu0 6
        %339 = vperm.xlu0 %338, %v222
        %v340 = vpop.permute.xlu0 %339
        %342 = vset.pattern.permute.xlu0 6
        %343 = vperm.xlu0 %342, %v223
        %v344 = vpop.permute.xlu0 %343
        %v346 = vmul.f32 %v221, %v340
        %v347 = vmul.f32 %v221, %v344
        %350 = vrot.lane.b32.xlu0 %v346, 122
        %v351 = vpop.permute.xlu0 %350
        %352 = vrot.lane.b32.xlu0 %v347, 122
        %v353 = vpop.permute.xlu0 %352
        %v356 = vadd.f32 %v336, %v351
        %v357 = vadd.f32 %v337, %v353
        %358 = vset.pattern.permute.xlu0 7
        %359 = vperm.xlu0 %358, %v222
        %v360 = vpop.permute.xlu0 %359
        %362 = vset.pattern.permute.xlu0 7
        %363 = vperm.xlu0 %362, %v223
        %v364 = vpop.permute.xlu0 %363
        %v366 = vmul.f32 %v221, %v360
        %v367 = vmul.f32 %v221, %v364
        %370 = vrot.lane.b32.xlu0 %v366, 121
        %v371 = vpop.permute.xlu0 %370
        %372 = vrot.lane.b32.xlu0 %v367, 121
        %v373 = vpop.permute.xlu0 %372
        %v376 = vadd.f32 %v356, %v371
        %v377 = vadd.f32 %v357, %v373
        %378 = vset.pattern.permute.xlu0 8
        %379 = vperm.xlu0 %378, %v222
        %v380 = vpop.permute.xlu0 %379
        %382 = vset.pattern.permute.xlu0 8
        %383 = vperm.xlu0 %382, %v223
        %v384 = vpop.permute.xlu0 %383
        %v386 = vmul.f32 %v221, %v380
        %v387 = vmul.f32 %v221, %v384
        %390 = vrot.lane.b32.xlu0 %v386, 120
        %v391 = vpop.permute.xlu0 %390
        %392 = vrot.lane.b32.xlu0 %v387, 120
        %v393 = vpop.permute.xlu0 %392
        %v396 = vadd.f32 %v376, %v391
        %v397 = vadd.f32 %v377, %v393
        %398 = vset.pattern.permute.xlu0 9
        %399 = vperm.xlu0 %398, %v222
        %v400 = vpop.permute.xlu0 %399
        %402 = vset.pattern.permute.xlu0 9
        %403 = vperm.xlu0 %402, %v223
        %v404 = vpop.permute.xlu0 %403
        %v406 = vmul.f32 %v221, %v400
        %v407 = vmul.f32 %v221, %v404
        %410 = vrot.lane.b32.xlu0 %v406, 119
        %v411 = vpop.permute.xlu0 %410
        %412 = vrot.lane.b32.xlu0 %v407, 119
        %v413 = vpop.permute.xlu0 %412
        %v416 = vadd.f32 %v396, %v411
        %v417 = vadd.f32 %v397, %v413
        %418 = vset.pattern.permute.xlu0 10
        %419 = vperm.xlu0 %418, %v222
        %v420 = vpop.permute.xlu0 %419
        %422 = vset.pattern.permute.xlu0 10
        %423 = vperm.xlu0 %422, %v223
        %v424 = vpop.permute.xlu0 %423
        %v426 = vmul.f32 %v221, %v420
        %v427 = vmul.f32 %v221, %v424
        %430 = vrot.lane.b32.xlu0 %v426, 118
        %v431 = vpop.permute.xlu0 %430
        %432 = vrot.lane.b32.xlu0 %v427, 118
        %v433 = vpop.permute.xlu0 %432
        %v436 = vadd.f32 %v416, %v431
        %v437 = vadd.f32 %v417, %v433
        %438 = vset.pattern.permute.xlu0 11
        %439 = vperm.xlu0 %438, %v222
        %v440 = vpop.permute.xlu0 %439
        %442 = vset.pattern.permute.xlu0 11
        %443 = vperm.xlu0 %442, %v223
        %v444 = vpop.permute.xlu0 %443
        %v446 = vmul.f32 %v221, %v440
        %v447 = vmul.f32 %v221, %v444
        %450 = vrot.lane.b32.xlu0 %v446, 117
        %v451 = vpop.permute.xlu0 %450
        %452 = vrot.lane.b32.xlu0 %v447, 117
        %v453 = vpop.permute.xlu0 %452
        %v456 = vadd.f32 %v436, %v451
        %v457 = vadd.f32 %v437, %v453
        %458 = vset.pattern.permute.xlu0 12
        %459 = vperm.xlu0 %458, %v222
        %v460 = vpop.permute.xlu0 %459
        %462 = vset.pattern.permute.xlu0 12
        %463 = vperm.xlu0 %462, %v223
        %v464 = vpop.permute.xlu0 %463
        %v466 = vmul.f32 %v221, %v460
        %v467 = vmul.f32 %v221, %v464
        %470 = vrot.lane.b32.xlu0 %v466, 116
        %v471 = vpop.permute.xlu0 %470
        %472 = vrot.lane.b32.xlu0 %v467, 116
        %v473 = vpop.permute.xlu0 %472
        %v476 = vadd.f32 %v456, %v471
        %v477 = vadd.f32 %v457, %v473
        %478 = vset.pattern.permute.xlu0 13
        %479 = vperm.xlu0 %478, %v222
        %v480 = vpop.permute.xlu0 %479
        %482 = vset.pattern.permute.xlu0 13
        %483 = vperm.xlu0 %482, %v223
        %v484 = vpop.permute.xlu0 %483
        %v486 = vmul.f32 %v221, %v480
        %v487 = vmul.f32 %v221, %v484
        %490 = vrot.lane.b32.xlu0 %v486, 115
        %v491 = vpop.permute.xlu0 %490
        %492 = vrot.lane.b32.xlu0 %v487, 115
        %v493 = vpop.permute.xlu0 %492
        %v496 = vadd.f32 %v476, %v491
        %v497 = vadd.f32 %v477, %v493
        %498 = vset.pattern.permute.xlu0 14
        %499 = vperm.xlu0 %498, %v222
        %v500 = vpop.permute.xlu0 %499
        %502 = vset.pattern.permute.xlu0 14
        %503 = vperm.xlu0 %502, %v223
        %v504 = vpop.permute.xlu0 %503
        %v506 = vmul.f32 %v221, %v500
        %v507 = vmul.f32 %v221, %v504
        %510 = vrot.lane.b32.xlu0 %v506, 114
        %v511 = vpop.permute.xlu0 %510
        %512 = vrot.lane.b32.xlu0 %v507, 114
        %v513 = vpop.permute.xlu0 %512
        %v516 = vadd.f32 %v496, %v511
        %v517 = vadd.f32 %v497, %v513
        %518 = vset.pattern.permute.xlu0 15
        %519 = vperm.xlu0 %518, %v222
        %v520 = vpop.permute.xlu0 %519
        %522 = vset.pattern.permute.xlu0 15
        %523 = vperm.xlu0 %522, %v223
        %v524 = vpop.permute.xlu0 %523
        %v526 = vmul.f32 %v221, %v520
        %v527 = vmul.f32 %v221, %v524
        %530 = vrot.lane.b32.xlu0 %v526, 113
        %v531 = vpop.permute.xlu0 %530
        %532 = vrot.lane.b32.xlu0 %v527, 113
        %v533 = vpop.permute.xlu0 %532
        %v536 = vadd.f32 %v516, %v531
        %v537 = vadd.f32 %v517, %v533
        %538 = vset.pattern.permute.xlu0 16
        %539 = vperm.xlu0 %538, %v222
        %v540 = vpop.permute.xlu0 %539
        %542 = vset.pattern.permute.xlu0 16
        %543 = vperm.xlu0 %542, %v223
        %v544 = vpop.permute.xlu0 %543
        %v546 = vmul.f32 %v221, %v540
        %v547 = vmul.f32 %v221, %v544
        %550 = vrot.lane.b32.xlu0 %v546, 112
        %v551 = vpop.permute.xlu0 %550
        %552 = vrot.lane.b32.xlu0 %v547, 112
        %v553 = vpop.permute.xlu0 %552
        %v556 = vadd.f32 %v536, %v551
        %v557 = vadd.f32 %v537, %v553
        %558 = vset.pattern.permute.xlu0 17
        %559 = vperm.xlu0 %558, %v222
        %v560 = vpop.permute.xlu0 %559
        %562 = vset.pattern.permute.xlu0 17
        %563 = vperm.xlu0 %562, %v223
        %v564 = vpop.permute.xlu0 %563
        %v566 = vmul.f32 %v221, %v560
        %v567 = vmul.f32 %v221, %v564
        %570 = vrot.lane.b32.xlu0 %v566, 111
        %v571 = vpop.permute.xlu0 %570
        %572 = vrot.lane.b32.xlu0 %v567, 111
        %v573 = vpop.permute.xlu0 %572
        %v576 = vadd.f32 %v556, %v571
        %v577 = vadd.f32 %v557, %v573
        %578 = vset.pattern.permute.xlu0 18
        %579 = vperm.xlu0 %578, %v222
        %v580 = vpop.permute.xlu0 %579
        %582 = vset.pattern.permute.xlu0 18
        %583 = vperm.xlu0 %582, %v223
        %v584 = vpop.permute.xlu0 %583
        %v586 = vmul.f32 %v221, %v580
        %v587 = vmul.f32 %v221, %v584
        %590 = vrot.lane.b32.xlu0 %v586, 110
        %v591 = vpop.permute.xlu0 %590
        %592 = vrot.lane.b32.xlu0 %v587, 110
        %v593 = vpop.permute.xlu0 %592
        %v596 = vadd.f32 %v576, %v591
        %v597 = vadd.f32 %v577, %v593
        %598 = vset.pattern.permute.xlu0 19
        %599 = vperm.xlu0 %598, %v222
        %v600 = vpop.permute.xlu0 %599
        %602 = vset.pattern.permute.xlu0 19
        %603 = vperm.xlu0 %602, %v223
        %v604 = vpop.permute.xlu0 %603
        %v606 = vmul.f32 %v221, %v600
        %v607 = vmul.f32 %v221, %v604
        %610 = vrot.lane.b32.xlu0 %v606, 109
        %v611 = vpop.permute.xlu0 %610
        %612 = vrot.lane.b32.xlu0 %v607, 109
        %v613 = vpop.permute.xlu0 %612
        %v616 = vadd.f32 %v596, %v611
        %v617 = vadd.f32 %v597, %v613
        %618 = vset.pattern.permute.xlu0 20
        %619 = vperm.xlu0 %618, %v222
        %v620 = vpop.permute.xlu0 %619
        %622 = vset.pattern.permute.xlu0 20
        %623 = vperm.xlu0 %622, %v223
        %v624 = vpop.permute.xlu0 %623
        %v626 = vmul.f32 %v221, %v620
        %v627 = vmul.f32 %v221, %v624
        %630 = vrot.lane.b32.xlu0 %v626, 108
        %v631 = vpop.permute.xlu0 %630
        %632 = vrot.lane.b32.xlu0 %v627, 108
        %v633 = vpop.permute.xlu0 %632
        %v636 = vadd.f32 %v616, %v631
        %v637 = vadd.f32 %v617, %v633
        %638 = vset.pattern.permute.xlu0 21
        %639 = vperm.xlu0 %638, %v222
        %v640 = vpop.permute.xlu0 %639
        %642 = vset.pattern.permute.xlu0 21
        %643 = vperm.xlu0 %642, %v223
        %v644 = vpop.permute.xlu0 %643
        %v646 = vmul.f32 %v221, %v640
        %v647 = vmul.f32 %v221, %v644
        %650 = vrot.lane.b32.xlu0 %v646, 107
        %v651 = vpop.permute.xlu0 %650
        %652 = vrot.lane.b32.xlu0 %v647, 107
        %v653 = vpop.permute.xlu0 %652
        %v656 = vadd.f32 %v636, %v651
        %v657 = vadd.f32 %v637, %v653
        %658 = vset.pattern.permute.xlu0 22
        %659 = vperm.xlu0 %658, %v222
        %v660 = vpop.permute.xlu0 %659
        %662 = vset.pattern.permute.xlu0 22
        %663 = vperm.xlu0 %662, %v223
        %v664 = vpop.permute.xlu0 %663
        %v666 = vmul.f32 %v221, %v660
        %v667 = vmul.f32 %v221, %v664
        %670 = vrot.lane.b32.xlu0 %v666, 106
        %v671 = vpop.permute.xlu0 %670
        %672 = vrot.lane.b32.xlu0 %v667, 106
        %v673 = vpop.permute.xlu0 %672
        %v676 = vadd.f32 %v656, %v671
        %v677 = vadd.f32 %v657, %v673
        %678 = vset.pattern.permute.xlu0 23
        %679 = vperm.xlu0 %678, %v222
        %v680 = vpop.permute.xlu0 %679
        %682 = vset.pattern.permute.xlu0 23
        %683 = vperm.xlu0 %682, %v223
        %v684 = vpop.permute.xlu0 %683
        %v686 = vmul.f32 %v221, %v680
        %v687 = vmul.f32 %v221, %v684
        %690 = vrot.lane.b32.xlu0 %v686, 105
        %v691 = vpop.permute.xlu0 %690
        %692 = vrot.lane.b32.xlu0 %v687, 105
        %v693 = vpop.permute.xlu0 %692
        %v696 = vadd.f32 %v676, %v691
        %v697 = vadd.f32 %v677, %v693
        %698 = vset.pattern.permute.xlu0 24
        %699 = vperm.xlu0 %698, %v222
        %v700 = vpop.permute.xlu0 %699
        %702 = vset.pattern.permute.xlu0 24
        %703 = vperm.xlu0 %702, %v223
        %v704 = vpop.permute.xlu0 %703
        %v706 = vmul.f32 %v221, %v700
        %v707 = vmul.f32 %v221, %v704
        %710 = vrot.lane.b32.xlu0 %v706, 104
        %v711 = vpop.permute.xlu0 %710
        %712 = vrot.lane.b32.xlu0 %v707, 104
        %v713 = vpop.permute.xlu0 %712
        %v716 = vadd.f32 %v696, %v711
        %v717 = vadd.f32 %v697, %v713
        %718 = vset.pattern.permute.xlu0 25
        %719 = vperm.xlu0 %718, %v222
        %v720 = vpop.permute.xlu0 %719
        %722 = vset.pattern.permute.xlu0 25
        %723 = vperm.xlu0 %722, %v223
        %v724 = vpop.permute.xlu0 %723
        %v726 = vmul.f32 %v221, %v720
        %v727 = vmul.f32 %v221, %v724
        %730 = vrot.lane.b32.xlu0 %v726, 103
        %v731 = vpop.permute.xlu0 %730
        %732 = vrot.lane.b32.xlu0 %v727, 103
        %v733 = vpop.permute.xlu0 %732
        %v736 = vadd.f32 %v716, %v731
        %v737 = vadd.f32 %v717, %v733
        %738 = vset.pattern.permute.xlu0 26
        %739 = vperm.xlu0 %738, %v222
        %v740 = vpop.permute.xlu0 %739
        %742 = vset.pattern.permute.xlu0 26
        %743 = vperm.xlu0 %742, %v223
        %v744 = vpop.permute.xlu0 %743
        %v746 = vmul.f32 %v221, %v740
        %v747 = vmul.f32 %v221, %v744
        %750 = vrot.lane.b32.xlu0 %v746, 102
        %v751 = vpop.permute.xlu0 %750
        %752 = vrot.lane.b32.xlu0 %v747, 102
        %v753 = vpop.permute.xlu0 %752
        %v756 = vadd.f32 %v736, %v751
        %v757 = vadd.f32 %v737, %v753
        %758 = vset.pattern.permute.xlu0 27
        %759 = vperm.xlu0 %758, %v222
        %v760 = vpop.permute.xlu0 %759
        %762 = vset.pattern.permute.xlu0 27
        %763 = vperm.xlu0 %762, %v223
        %v764 = vpop.permute.xlu0 %763
        %v766 = vmul.f32 %v221, %v760
        %v767 = vmul.f32 %v221, %v764
        %770 = vrot.lane.b32.xlu0 %v766, 101
        %v771 = vpop.permute.xlu0 %770
        %772 = vrot.lane.b32.xlu0 %v767, 101
        %v773 = vpop.permute.xlu0 %772
        %v776 = vadd.f32 %v756, %v771
        %v777 = vadd.f32 %v757, %v773
        %778 = vset.pattern.permute.xlu0 28
        %779 = vperm.xlu0 %778, %v222
        %v780 = vpop.permute.xlu0 %779
        %782 = vset.pattern.permute.xlu0 28
        %783 = vperm.xlu0 %782, %v223
        %v784 = vpop.permute.xlu0 %783
        %v786 = vmul.f32 %v221, %v780
        %v787 = vmul.f32 %v221, %v784
        %790 = vrot.lane.b32.xlu0 %v786, 100
        %v791 = vpop.permute.xlu0 %790
        %792 = vrot.lane.b32.xlu0 %v787, 100
        %v793 = vpop.permute.xlu0 %792
        %v796 = vadd.f32 %v776, %v791
        %v797 = vadd.f32 %v777, %v793
        %798 = vset.pattern.permute.xlu0 29
        %799 = vperm.xlu0 %798, %v222
        %v800 = vpop.permute.xlu0 %799
        %802 = vset.pattern.permute.xlu0 29
        %803 = vperm.xlu0 %802, %v223
        %v804 = vpop.permute.xlu0 %803
        %v806 = vmul.f32 %v221, %v800
        %v807 = vmul.f32 %v221, %v804
        %810 = vrot.lane.b32.xlu0 %v806, 99
        %v811 = vpop.permute.xlu0 %810
        %812 = vrot.lane.b32.xlu0 %v807, 99
        %v813 = vpop.permute.xlu0 %812
        %v816 = vadd.f32 %v796, %v811
        %v817 = vadd.f32 %v797, %v813
        %818 = vset.pattern.permute.xlu0 30
        %819 = vperm.xlu0 %818, %v222
        %v820 = vpop.permute.xlu0 %819
        %822 = vset.pattern.permute.xlu0 30
        %823 = vperm.xlu0 %822, %v223
        %v824 = vpop.permute.xlu0 %823
        %v826 = vmul.f32 %v221, %v820
        %v827 = vmul.f32 %v221, %v824
        %830 = vrot.lane.b32.xlu0 %v826, 98
        %v831 = vpop.permute.xlu0 %830
        %832 = vrot.lane.b32.xlu0 %v827, 98
        %v833 = vpop.permute.xlu0 %832
        %v836 = vadd.f32 %v816, %v831
        %v837 = vadd.f32 %v817, %v833
        %838 = vset.pattern.permute.xlu0 31
        %839 = vperm.xlu0 %838, %v222
        %v840 = vpop.permute.xlu0 %839
        %842 = vset.pattern.permute.xlu0 31
        %843 = vperm.xlu0 %842, %v223
        %v844 = vpop.permute.xlu0 %843
        %v846 = vmul.f32 %v221, %v840
        %v847 = vmul.f32 %v221, %v844
        %850 = vrot.lane.b32.xlu0 %v846, 97
        %v851 = vpop.permute.xlu0 %850
        %852 = vrot.lane.b32.xlu0 %v847, 97
        %v853 = vpop.permute.xlu0 %852
        %v856 = vadd.f32 %v836, %v851
        %v857 = vadd.f32 %v837, %v853
        %858 = vset.pattern.permute.xlu0 32
        %859 = vperm.xlu0 %858, %v222
        %v860 = vpop.permute.xlu0 %859
        %862 = vset.pattern.permute.xlu0 32
        %863 = vperm.xlu0 %862, %v223
        %v864 = vpop.permute.xlu0 %863
        %v866 = vmul.f32 %v221, %v860
        %v867 = vmul.f32 %v221, %v864
        %870 = vrot.lane.b32.xlu0 %v866, 96
        %v871 = vpop.permute.xlu0 %870
        %872 = vrot.lane.b32.xlu0 %v867, 96
        %v873 = vpop.permute.xlu0 %872
        %v876 = vadd.f32 %v856, %v871
        %v877 = vadd.f32 %v857, %v873
        %878 = vset.pattern.permute.xlu0 33
        %879 = vperm.xlu0 %878, %v222
        %v880 = vpop.permute.xlu0 %879
        %882 = vset.pattern.permute.xlu0 33
        %883 = vperm.xlu0 %882, %v223
        %v884 = vpop.permute.xlu0 %883
        %v886 = vmul.f32 %v221, %v880
        %v887 = vmul.f32 %v221, %v884
        %890 = vrot.lane.b32.xlu0 %v886, 95
        %v891 = vpop.permute.xlu0 %890
        %892 = vrot.lane.b32.xlu0 %v887, 95
        %v893 = vpop.permute.xlu0 %892
        %v896 = vadd.f32 %v876, %v891
        %v897 = vadd.f32 %v877, %v893
        %898 = vset.pattern.permute.xlu0 34
        %899 = vperm.xlu0 %898, %v222
        %v900 = vpop.permute.xlu0 %899
        %902 = vset.pattern.permute.xlu0 34
        %903 = vperm.xlu0 %902, %v223
        %v904 = vpop.permute.xlu0 %903
        %v906 = vmul.f32 %v221, %v900
        %v907 = vmul.f32 %v221, %v904
        %910 = vrot.lane.b32.xlu0 %v906, 94
        %v911 = vpop.permute.xlu0 %910
        %912 = vrot.lane.b32.xlu0 %v907, 94
        %v913 = vpop.permute.xlu0 %912
        %v916 = vadd.f32 %v896, %v911
        %v917 = vadd.f32 %v897, %v913
        %918 = vset.pattern.permute.xlu0 35
        %919 = vperm.xlu0 %918, %v222
        %v920 = vpop.permute.xlu0 %919
        %922 = vset.pattern.permute.xlu0 35
        %923 = vperm.xlu0 %922, %v223
        %v924 = vpop.permute.xlu0 %923
        %v926 = vmul.f32 %v221, %v920
        %v927 = vmul.f32 %v221, %v924
        %930 = vrot.lane.b32.xlu0 %v926, 93
        %v931 = vpop.permute.xlu0 %930
        %932 = vrot.lane.b32.xlu0 %v927, 93
        %v933 = vpop.permute.xlu0 %932
        %v936 = vadd.f32 %v916, %v931
        %v937 = vadd.f32 %v917, %v933
        %938 = vset.pattern.permute.xlu0 36
        %939 = vperm.xlu0 %938, %v222
        %v940 = vpop.permute.xlu0 %939
        %942 = vset.pattern.permute.xlu0 36
        %943 = vperm.xlu0 %942, %v223
        %v944 = vpop.permute.xlu0 %943
        %v946 = vmul.f32 %v221, %v940
        %v947 = vmul.f32 %v221, %v944
        %950 = vrot.lane.b32.xlu0 %v946, 92
        %v951 = vpop.permute.xlu0 %950
        %952 = vrot.lane.b32.xlu0 %v947, 92
        %v953 = vpop.permute.xlu0 %952
        %v956 = vadd.f32 %v936, %v951
        %v957 = vadd.f32 %v937, %v953
        %958 = vset.pattern.permute.xlu0 37
        %959 = vperm.xlu0 %958, %v222
        %v960 = vpop.permute.xlu0 %959
        %962 = vset.pattern.permute.xlu0 37
        %963 = vperm.xlu0 %962, %v223
        %v964 = vpop.permute.xlu0 %963
        %v966 = vmul.f32 %v221, %v960
        %v967 = vmul.f32 %v221, %v964
        %970 = vrot.lane.b32.xlu0 %v966, 91
        %v971 = vpop.permute.xlu0 %970
        %972 = vrot.lane.b32.xlu0 %v967, 91
        %v973 = vpop.permute.xlu0 %972
        %v976 = vadd.f32 %v956, %v971
        %v977 = vadd.f32 %v957, %v973
        %978 = vset.pattern.permute.xlu0 38
        %979 = vperm.xlu0 %978, %v222
        %v980 = vpop.permute.xlu0 %979
        %982 = vset.pattern.permute.xlu0 38
        %983 = vperm.xlu0 %982, %v223
        %v984 = vpop.permute.xlu0 %983
        %v986 = vmul.f32 %v221, %v980
        %v987 = vmul.f32 %v221, %v984
        %990 = vrot.lane.b32.xlu0 %v986, 90
        %v991 = vpop.permute.xlu0 %990
        %992 = vrot.lane.b32.xlu0 %v987, 90
        %v993 = vpop.permute.xlu0 %992
        %v996 = vadd.f32 %v976, %v991
        %v997 = vadd.f32 %v977, %v993
        %998 = vset.pattern.permute.xlu0 39
        %999 = vperm.xlu0 %998, %v222
        %v1000 = vpop.permute.xlu0 %999
        %1002 = vset.pattern.permute.xlu0 39
        %1003 = vperm.xlu0 %1002, %v223
        %v1004 = vpop.permute.xlu0 %1003
        %v1006 = vmul.f32 %v221, %v1000
        %v1007 = vmul.f32 %v221, %v1004
        %1010 = vrot.lane.b32.xlu0 %v1006, 89
        %v1011 = vpop.permute.xlu0 %1010
        %1012 = vrot.lane.b32.xlu0 %v1007, 89
        %v1013 = vpop.permute.xlu0 %1012
        %v1016 = vadd.f32 %v996, %v1011
        %v1017 = vadd.f32 %v997, %v1013
        %1018 = vset.pattern.permute.xlu0 40
        %1019 = vperm.xlu0 %1018, %v222
        %v1020 = vpop.permute.xlu0 %1019
        %1022 = vset.pattern.permute.xlu0 40
        %1023 = vperm.xlu0 %1022, %v223
        %v1024 = vpop.permute.xlu0 %1023
        %v1026 = vmul.f32 %v221, %v1020
        %v1027 = vmul.f32 %v221, %v1024
        %1030 = vrot.lane.b32.xlu0 %v1026, 88
        %v1031 = vpop.permute.xlu0 %1030
        %1032 = vrot.lane.b32.xlu0 %v1027, 88
        %v1033 = vpop.permute.xlu0 %1032
        %v1036 = vadd.f32 %v1016, %v1031
        %v1037 = vadd.f32 %v1017, %v1033
        %1038 = vset.pattern.permute.xlu0 41
        %1039 = vperm.xlu0 %1038, %v222
        %v1040 = vpop.permute.xlu0 %1039
        %1042 = vset.pattern.permute.xlu0 41
        %1043 = vperm.xlu0 %1042, %v223
        %v1044 = vpop.permute.xlu0 %1043
        %v1046 = vmul.f32 %v221, %v1040
        %v1047 = vmul.f32 %v221, %v1044
        %1050 = vrot.lane.b32.xlu0 %v1046, 87
        %v1051 = vpop.permute.xlu0 %1050
        %1052 = vrot.lane.b32.xlu0 %v1047, 87
        %v1053 = vpop.permute.xlu0 %1052
        %v1056 = vadd.f32 %v1036, %v1051
        %v1057 = vadd.f32 %v1037, %v1053
        %1058 = vset.pattern.permute.xlu0 42
        %1059 = vperm.xlu0 %1058, %v222
        %v1060 = vpop.permute.xlu0 %1059
        %1062 = vset.pattern.permute.xlu0 42
        %1063 = vperm.xlu0 %1062, %v223
        %v1064 = vpop.permute.xlu0 %1063
        %v1066 = vmul.f32 %v221, %v1060
        %v1067 = vmul.f32 %v221, %v1064
        %1070 = vrot.lane.b32.xlu0 %v1066, 86
        %v1071 = vpop.permute.xlu0 %1070
        %1072 = vrot.lane.b32.xlu0 %v1067, 86
        %v1073 = vpop.permute.xlu0 %1072
        %v1076 = vadd.f32 %v1056, %v1071
        %v1077 = vadd.f32 %v1057, %v1073
        %1078 = vset.pattern.permute.xlu0 43
        %1079 = vperm.xlu0 %1078, %v222
        %v1080 = vpop.permute.xlu0 %1079
        %1082 = vset.pattern.permute.xlu0 43
        %1083 = vperm.xlu0 %1082, %v223
        %v1084 = vpop.permute.xlu0 %1083
        %v1086 = vmul.f32 %v221, %v1080
        %v1087 = vmul.f32 %v221, %v1084
        %1090 = vrot.lane.b32.xlu0 %v1086, 85
        %v1091 = vpop.permute.xlu0 %1090
        %1092 = vrot.lane.b32.xlu0 %v1087, 85
        %v1093 = vpop.permute.xlu0 %1092
        %v1096 = vadd.f32 %v1076, %v1091
        %v1097 = vadd.f32 %v1077, %v1093
        %1098 = vset.pattern.permute.xlu0 44
        %1099 = vperm.xlu0 %1098, %v222
        %v1100 = vpop.permute.xlu0 %1099
        %1102 = vset.pattern.permute.xlu0 44
        %1103 = vperm.xlu0 %1102, %v223
        %v1104 = vpop.permute.xlu0 %1103
        %v1106 = vmul.f32 %v221, %v1100
        %v1107 = vmul.f32 %v221, %v1104
        %1110 = vrot.lane.b32.xlu0 %v1106, 84
        %v1111 = vpop.permute.xlu0 %1110
        %1112 = vrot.lane.b32.xlu0 %v1107, 84
        %v1113 = vpop.permute.xlu0 %1112
        %v1116 = vadd.f32 %v1096, %v1111
        %v1117 = vadd.f32 %v1097, %v1113
        %1118 = vset.pattern.permute.xlu0 45
        %1119 = vperm.xlu0 %1118, %v222
        %v1120 = vpop.permute.xlu0 %1119
        %1122 = vset.pattern.permute.xlu0 45
        %1123 = vperm.xlu0 %1122, %v223
        %v1124 = vpop.permute.xlu0 %1123
        %v1126 = vmul.f32 %v221, %v1120
        %v1127 = vmul.f32 %v221, %v1124
        %1130 = vrot.lane.b32.xlu0 %v1126, 83
        %v1131 = vpop.permute.xlu0 %1130
        %1132 = vrot.lane.b32.xlu0 %v1127, 83
        %v1133 = vpop.permute.xlu0 %1132
        %v1136 = vadd.f32 %v1116, %v1131
        %v1137 = vadd.f32 %v1117, %v1133
        %1138 = vset.pattern.permute.xlu0 46
        %1139 = vperm.xlu0 %1138, %v222
        %v1140 = vpop.permute.xlu0 %1139
        %1142 = vset.pattern.permute.xlu0 46
        %1143 = vperm.xlu0 %1142, %v223
        %v1144 = vpop.permute.xlu0 %1143
        %v1146 = vmul.f32 %v221, %v1140
        %v1147 = vmul.f32 %v221, %v1144
        %1150 = vrot.lane.b32.xlu0 %v1146, 82
        %v1151 = vpop.permute.xlu0 %1150
        %1152 = vrot.lane.b32.xlu0 %v1147, 82
        %v1153 = vpop.permute.xlu0 %1152
        %v1156 = vadd.f32 %v1136, %v1151
        %v1157 = vadd.f32 %v1137, %v1153
        %1158 = vset.pattern.permute.xlu0 47
        %1159 = vperm.xlu0 %1158, %v222
        %v1160 = vpop.permute.xlu0 %1159
        %1162 = vset.pattern.permute.xlu0 47
        %1163 = vperm.xlu0 %1162, %v223
        %v1164 = vpop.permute.xlu0 %1163
        %v1166 = vmul.f32 %v221, %v1160
        %v1167 = vmul.f32 %v221, %v1164
        %1170 = vrot.lane.b32.xlu0 %v1166, 81
        %v1171 = vpop.permute.xlu0 %1170
        %1172 = vrot.lane.b32.xlu0 %v1167, 81
        %v1173 = vpop.permute.xlu0 %1172
        %v1176 = vadd.f32 %v1156, %v1171
        %v1177 = vadd.f32 %v1157, %v1173
        %1178 = vset.pattern.permute.xlu0 48
        %1179 = vperm.xlu0 %1178, %v222
        %v1180 = vpop.permute.xlu0 %1179
        %1182 = vset.pattern.permute.xlu0 48
        %1183 = vperm.xlu0 %1182, %v223
        %v1184 = vpop.permute.xlu0 %1183
        %v1186 = vmul.f32 %v221, %v1180
        %v1187 = vmul.f32 %v221, %v1184
        %1190 = vrot.lane.b32.xlu0 %v1186, 80
        %v1191 = vpop.permute.xlu0 %1190
        %1192 = vrot.lane.b32.xlu0 %v1187, 80
        %v1193 = vpop.permute.xlu0 %1192
        %v1196 = vadd.f32 %v1176, %v1191
        %v1197 = vadd.f32 %v1177, %v1193
        %1198 = vset.pattern.permute.xlu0 49
        %1199 = vperm.xlu0 %1198, %v222
        %v1200 = vpop.permute.xlu0 %1199
        %1202 = vset.pattern.permute.xlu0 49
        %1203 = vperm.xlu0 %1202, %v223
        %v1204 = vpop.permute.xlu0 %1203
        %v1206 = vmul.f32 %v221, %v1200
        %v1207 = vmul.f32 %v221, %v1204
        %1210 = vrot.lane.b32.xlu0 %v1206, 79
        %v1211 = vpop.permute.xlu0 %1210
        %1212 = vrot.lane.b32.xlu0 %v1207, 79
        %v1213 = vpop.permute.xlu0 %1212
        %v1216 = vadd.f32 %v1196, %v1211
        %v1217 = vadd.f32 %v1197, %v1213
        %1218 = vset.pattern.permute.xlu0 50
        %1219 = vperm.xlu0 %1218, %v222
        %v1220 = vpop.permute.xlu0 %1219
        %1222 = vset.pattern.permute.xlu0 50
        %1223 = vperm.xlu0 %1222, %v223
        %v1224 = vpop.permute.xlu0 %1223
        %v1226 = vmul.f32 %v221, %v1220
        %v1227 = vmul.f32 %v221, %v1224
        %1230 = vrot.lane.b32.xlu0 %v1226, 78
        %v1231 = vpop.permute.xlu0 %1230
        %1232 = vrot.lane.b32.xlu0 %v1227, 78
        %v1233 = vpop.permute.xlu0 %1232
        %v1236 = vadd.f32 %v1216, %v1231
        %v1237 = vadd.f32 %v1217, %v1233
        %1238 = vset.pattern.permute.xlu0 51
        %1239 = vperm.xlu0 %1238, %v222
        %v1240 = vpop.permute.xlu0 %1239
        %1242 = vset.pattern.permute.xlu0 51
        %1243 = vperm.xlu0 %1242, %v223
        %v1244 = vpop.permute.xlu0 %1243
        %v1246 = vmul.f32 %v221, %v1240
        %v1247 = vmul.f32 %v221, %v1244
        %1250 = vrot.lane.b32.xlu0 %v1246, 77
        %v1251 = vpop.permute.xlu0 %1250
        %1252 = vrot.lane.b32.xlu0 %v1247, 77
        %v1253 = vpop.permute.xlu0 %1252
        %v1256 = vadd.f32 %v1236, %v1251
        %v1257 = vadd.f32 %v1237, %v1253
        %1258 = vset.pattern.permute.xlu0 52
        %1259 = vperm.xlu0 %1258, %v222
        %v1260 = vpop.permute.xlu0 %1259
        %1262 = vset.pattern.permute.xlu0 52
        %1263 = vperm.xlu0 %1262, %v223
        %v1264 = vpop.permute.xlu0 %1263
        %v1266 = vmul.f32 %v221, %v1260
        %v1267 = vmul.f32 %v221, %v1264
        %1270 = vrot.lane.b32.xlu0 %v1266, 76
        %v1271 = vpop.permute.xlu0 %1270
        %1272 = vrot.lane.b32.xlu0 %v1267, 76
        %v1273 = vpop.permute.xlu0 %1272
        %v1276 = vadd.f32 %v1256, %v1271
        %v1277 = vadd.f32 %v1257, %v1273
        %1278 = vset.pattern.permute.xlu0 53
        %1279 = vperm.xlu0 %1278, %v222
        %v1280 = vpop.permute.xlu0 %1279
        %1282 = vset.pattern.permute.xlu0 53
        %1283 = vperm.xlu0 %1282, %v223
        %v1284 = vpop.permute.xlu0 %1283
        %v1286 = vmul.f32 %v221, %v1280
        %v1287 = vmul.f32 %v221, %v1284
        %1290 = vrot.lane.b32.xlu0 %v1286, 75
        %v1291 = vpop.permute.xlu0 %1290
        %1292 = vrot.lane.b32.xlu0 %v1287, 75
        %v1293 = vpop.permute.xlu0 %1292
        %v1296 = vadd.f32 %v1276, %v1291
        %v1297 = vadd.f32 %v1277, %v1293
        %1298 = vset.pattern.permute.xlu0 54
        %1299 = vperm.xlu0 %1298, %v222
        %v1300 = vpop.permute.xlu0 %1299
        %1302 = vset.pattern.permute.xlu0 54
        %1303 = vperm.xlu0 %1302, %v223
        %v1304 = vpop.permute.xlu0 %1303
        %v1306 = vmul.f32 %v221, %v1300
        %v1307 = vmul.f32 %v221, %v1304
        %1310 = vrot.lane.b32.xlu0 %v1306, 74
        %v1311 = vpop.permute.xlu0 %1310
        %1312 = vrot.lane.b32.xlu0 %v1307, 74
        %v1313 = vpop.permute.xlu0 %1312
        %v1316 = vadd.f32 %v1296, %v1311
        %v1317 = vadd.f32 %v1297, %v1313
        %1318 = vset.pattern.permute.xlu0 55
        %1319 = vperm.xlu0 %1318, %v222
        %v1320 = vpop.permute.xlu0 %1319
        %1322 = vset.pattern.permute.xlu0 55
        %1323 = vperm.xlu0 %1322, %v223
        %v1324 = vpop.permute.xlu0 %1323
        %v1326 = vmul.f32 %v221, %v1320
        %v1327 = vmul.f32 %v221, %v1324
        %1330 = vrot.lane.b32.xlu0 %v1326, 73
        %v1331 = vpop.permute.xlu0 %1330
        %1332 = vrot.lane.b32.xlu0 %v1327, 73
        %v1333 = vpop.permute.xlu0 %1332
        %v1336 = vadd.f32 %v1316, %v1331
        %v1337 = vadd.f32 %v1317, %v1333
        %1338 = vset.pattern.permute.xlu0 56
        %1339 = vperm.xlu0 %1338, %v222
        %v1340 = vpop.permute.xlu0 %1339
        %1342 = vset.pattern.permute.xlu0 56
        %1343 = vperm.xlu0 %1342, %v223
        %v1344 = vpop.permute.xlu0 %1343
        %v1346 = vmul.f32 %v221, %v1340
        %v1347 = vmul.f32 %v221, %v1344
        %1350 = vrot.lane.b32.xlu0 %v1346, 72
        %v1351 = vpop.permute.xlu0 %1350
        %1352 = vrot.lane.b32.xlu0 %v1347, 72
        %v1353 = vpop.permute.xlu0 %1352
        %v1356 = vadd.f32 %v1336, %v1351
        %v1357 = vadd.f32 %v1337, %v1353
        %1358 = vset.pattern.permute.xlu0 57
        %1359 = vperm.xlu0 %1358, %v222
        %v1360 = vpop.permute.xlu0 %1359
        %1362 = vset.pattern.permute.xlu0 57
        %1363 = vperm.xlu0 %1362, %v223
        %v1364 = vpop.permute.xlu0 %1363
        %v1366 = vmul.f32 %v221, %v1360
        %v1367 = vmul.f32 %v221, %v1364
        %1370 = vrot.lane.b32.xlu0 %v1366, 71
        %v1371 = vpop.permute.xlu0 %1370
        %1372 = vrot.lane.b32.xlu0 %v1367, 71
        %v1373 = vpop.permute.xlu0 %1372
        %v1376 = vadd.f32 %v1356, %v1371
        %v1377 = vadd.f32 %v1357, %v1373
        %1378 = vset.pattern.permute.xlu0 58
        %1379 = vperm.xlu0 %1378, %v222
        %v1380 = vpop.permute.xlu0 %1379
        %1382 = vset.pattern.permute.xlu0 58
        %1383 = vperm.xlu0 %1382, %v223
        %v1384 = vpop.permute.xlu0 %1383
        %v1386 = vmul.f32 %v221, %v1380
        %v1387 = vmul.f32 %v221, %v1384
        %1390 = vrot.lane.b32.xlu0 %v1386, 70
        %v1391 = vpop.permute.xlu0 %1390
        %1392 = vrot.lane.b32.xlu0 %v1387, 70
        %v1393 = vpop.permute.xlu0 %1392
        %v1396 = vadd.f32 %v1376, %v1391
        %v1397 = vadd.f32 %v1377, %v1393
        %1398 = vset.pattern.permute.xlu0 59
        %1399 = vperm.xlu0 %1398, %v222
        %v1400 = vpop.permute.xlu0 %1399
        %1402 = vset.pattern.permute.xlu0 59
        %1403 = vperm.xlu0 %1402, %v223
        %v1404 = vpop.permute.xlu0 %1403
        %v1406 = vmul.f32 %v221, %v1400
        %v1407 = vmul.f32 %v221, %v1404
        %1410 = vrot.lane.b32.xlu0 %v1406, 69
        %v1411 = vpop.permute.xlu0 %1410
        %1412 = vrot.lane.b32.xlu0 %v1407, 69
        %v1413 = vpop.permute.xlu0 %1412
        %v1416 = vadd.f32 %v1396, %v1411
        %v1417 = vadd.f32 %v1397, %v1413
        %1418 = vset.pattern.permute.xlu0 60
        %1419 = vperm.xlu0 %1418, %v222
        %v1420 = vpop.permute.xlu0 %1419
        %1422 = vset.pattern.permute.xlu0 60
        %1423 = vperm.xlu0 %1422, %v223
        %v1424 = vpop.permute.xlu0 %1423
        %v1426 = vmul.f32 %v221, %v1420
        %v1427 = vmul.f32 %v221, %v1424
        %1430 = vrot.lane.b32.xlu0 %v1426, 68
        %v1431 = vpop.permute.xlu0 %1430
        %1432 = vrot.lane.b32.xlu0 %v1427, 68
        %v1433 = vpop.permute.xlu0 %1432
        %v1436 = vadd.f32 %v1416, %v1431
        %v1437 = vadd.f32 %v1417, %v1433
        %1438 = vset.pattern.permute.xlu0 61
        %1439 = vperm.xlu0 %1438, %v222
        %v1440 = vpop.permute.xlu0 %1439
        %1442 = vset.pattern.permute.xlu0 61
        %1443 = vperm.xlu0 %1442, %v223
        %v1444 = vpop.permute.xlu0 %1443
        %v1446 = vmul.f32 %v221, %v1440
        %v1447 = vmul.f32 %v221, %v1444
        %1450 = vrot.lane.b32.xlu0 %v1446, 67
        %v1451 = vpop.permute.xlu0 %1450
        %1452 = vrot.lane.b32.xlu0 %v1447, 67
        %v1453 = vpop.permute.xlu0 %1452
        %v1456 = vadd.f32 %v1436, %v1451
        %v1457 = vadd.f32 %v1437, %v1453
        %1458 = vset.pattern.permute.xlu0 62
        %1459 = vperm.xlu0 %1458, %v222
        %v1460 = vpop.permute.xlu0 %1459
        %1462 = vset.pattern.permute.xlu0 62
        %1463 = vperm.xlu0 %1462, %v223
        %v1464 = vpop.permute.xlu0 %1463
        %v1466 = vmul.f32 %v221, %v1460
        %v1467 = vmul.f32 %v221, %v1464
        %1470 = vrot.lane.b32.xlu0 %v1466, 66
        %v1471 = vpop.permute.xlu0 %1470
        %1472 = vrot.lane.b32.xlu0 %v1467, 66
        %v1473 = vpop.permute.xlu0 %1472
        %v1476 = vadd.f32 %v1456, %v1471
        %v1477 = vadd.f32 %v1457, %v1473
        %1478 = vset.pattern.permute.xlu0 63
        %1479 = vperm.xlu0 %1478, %v222
        %v1480 = vpop.permute.xlu0 %1479
        %1482 = vset.pattern.permute.xlu0 63
        %1483 = vperm.xlu0 %1482, %v223
        %v1484 = vpop.permute.xlu0 %1483
        %v1486 = vmul.f32 %v221, %v1480
        %v1487 = vmul.f32 %v221, %v1484
        %1490 = vrot.lane.b32.xlu0 %v1486, 65
        %v1491 = vpop.permute.xlu0 %1490
        %1492 = vrot.lane.b32.xlu0 %v1487, 65
        %v1493 = vpop.permute.xlu0 %1492
        %v1496 = vadd.f32 %v1476, %v1491
        %v1497 = vadd.f32 %v1477, %v1493
        %1498 = vset.pattern.permute.xlu0 64
        %1499 = vperm.xlu0 %1498, %v222
        %v1500 = vpop.permute.xlu0 %1499
        %1502 = vset.pattern.permute.xlu0 64
        %1503 = vperm.xlu0 %1502, %v223
        %v1504 = vpop.permute.xlu0 %1503
        %v1506 = vmul.f32 %v221, %v1500
        %v1507 = vmul.f32 %v221, %v1504
        %1510 = vrot.lane.b32.xlu0 %v1506, 64
        %v1511 = vpop.permute.xlu0 %1510
        %1512 = vrot.lane.b32.xlu0 %v1507, 64
        %v1513 = vpop.permute.xlu0 %1512
        %v1516 = vadd.f32 %v1496, %v1511
        %v1517 = vadd.f32 %v1497, %v1513
        %1518 = vset.pattern.permute.xlu0 65
        %1519 = vperm.xlu0 %1518, %v222
        %v1520 = vpop.permute.xlu0 %1519
        %1522 = vset.pattern.permute.xlu0 65
        %1523 = vperm.xlu0 %1522, %v223
        %v1524 = vpop.permute.xlu0 %1523
        %v1526 = vmul.f32 %v221, %v1520
        %v1527 = vmul.f32 %v221, %v1524
        %1530 = vrot.lane.b32.xlu0 %v1526, 63
        %v1531 = vpop.permute.xlu0 %1530
        %1532 = vrot.lane.b32.xlu0 %v1527, 63
        %v1533 = vpop.permute.xlu0 %1532
        %v1536 = vadd.f32 %v1516, %v1531
        %v1537 = vadd.f32 %v1517, %v1533
        %1538 = vset.pattern.permute.xlu0 66
        %1539 = vperm.xlu0 %1538, %v222
        %v1540 = vpop.permute.xlu0 %1539
        %1542 = vset.pattern.permute.xlu0 66
        %1543 = vperm.xlu0 %1542, %v223
        %v1544 = vpop.permute.xlu0 %1543
        %v1546 = vmul.f32 %v221, %v1540
        %v1547 = vmul.f32 %v221, %v1544
        %1550 = vrot.lane.b32.xlu0 %v1546, 62
        %v1551 = vpop.permute.xlu0 %1550
        %1552 = vrot.lane.b32.xlu0 %v1547, 62
        %v1553 = vpop.permute.xlu0 %1552
        %v1556 = vadd.f32 %v1536, %v1551
        %v1557 = vadd.f32 %v1537, %v1553
        %1558 = vset.pattern.permute.xlu0 67
        %1559 = vperm.xlu0 %1558, %v222
        %v1560 = vpop.permute.xlu0 %1559
        %1562 = vset.pattern.permute.xlu0 67
        %1563 = vperm.xlu0 %1562, %v223
        %v1564 = vpop.permute.xlu0 %1563
        %v1566 = vmul.f32 %v221, %v1560
        %v1567 = vmul.f32 %v221, %v1564
        %1570 = vrot.lane.b32.xlu0 %v1566, 61
        %v1571 = vpop.permute.xlu0 %1570
        %1572 = vrot.lane.b32.xlu0 %v1567, 61
        %v1573 = vpop.permute.xlu0 %1572
        %v1576 = vadd.f32 %v1556, %v1571
        %v1577 = vadd.f32 %v1557, %v1573
        %1578 = vset.pattern.permute.xlu0 68
        %1579 = vperm.xlu0 %1578, %v222
        %v1580 = vpop.permute.xlu0 %1579
        %1582 = vset.pattern.permute.xlu0 68
        %1583 = vperm.xlu0 %1582, %v223
        %v1584 = vpop.permute.xlu0 %1583
        %v1586 = vmul.f32 %v221, %v1580
        %v1587 = vmul.f32 %v221, %v1584
        %1590 = vrot.lane.b32.xlu0 %v1586, 60
        %v1591 = vpop.permute.xlu0 %1590
        %1592 = vrot.lane.b32.xlu0 %v1587, 60
        %v1593 = vpop.permute.xlu0 %1592
        %v1596 = vadd.f32 %v1576, %v1591
        %v1597 = vadd.f32 %v1577, %v1593
        %1598 = vset.pattern.permute.xlu0 69
        %1599 = vperm.xlu0 %1598, %v222
        %v1600 = vpop.permute.xlu0 %1599
        %1602 = vset.pattern.permute.xlu0 69
        %1603 = vperm.xlu0 %1602, %v223
        %v1604 = vpop.permute.xlu0 %1603
        %v1606 = vmul.f32 %v221, %v1600
        %v1607 = vmul.f32 %v221, %v1604
        %1610 = vrot.lane.b32.xlu0 %v1606, 59
        %v1611 = vpop.permute.xlu0 %1610
        %1612 = vrot.lane.b32.xlu0 %v1607, 59
        %v1613 = vpop.permute.xlu0 %1612
        %v1616 = vadd.f32 %v1596, %v1611
        %v1617 = vadd.f32 %v1597, %v1613
        %1618 = vset.pattern.permute.xlu0 70
        %1619 = vperm.xlu0 %1618, %v222
        %v1620 = vpop.permute.xlu0 %1619
        %1622 = vset.pattern.permute.xlu0 70
        %1623 = vperm.xlu0 %1622, %v223
        %v1624 = vpop.permute.xlu0 %1623
        %v1626 = vmul.f32 %v221, %v1620
        %v1627 = vmul.f32 %v221, %v1624
        %1630 = vrot.lane.b32.xlu0 %v1626, 58
        %v1631 = vpop.permute.xlu0 %1630
        %1632 = vrot.lane.b32.xlu0 %v1627, 58
        %v1633 = vpop.permute.xlu0 %1632
        %v1636 = vadd.f32 %v1616, %v1631
        %v1637 = vadd.f32 %v1617, %v1633
        %1638 = vset.pattern.permute.xlu0 71
        %1639 = vperm.xlu0 %1638, %v222
        %v1640 = vpop.permute.xlu0 %1639
        %1642 = vset.pattern.permute.xlu0 71
        %1643 = vperm.xlu0 %1642, %v223
        %v1644 = vpop.permute.xlu0 %1643
        %v1646 = vmul.f32 %v221, %v1640
        %v1647 = vmul.f32 %v221, %v1644
        %1650 = vrot.lane.b32.xlu0 %v1646, 57
        %v1651 = vpop.permute.xlu0 %1650
        %1652 = vrot.lane.b32.xlu0 %v1647, 57
        %v1653 = vpop.permute.xlu0 %1652
        %v1656 = vadd.f32 %v1636, %v1651
        %v1657 = vadd.f32 %v1637, %v1653
        %1658 = vset.pattern.permute.xlu0 72
        %1659 = vperm.xlu0 %1658, %v222
        %v1660 = vpop.permute.xlu0 %1659
        %1662 = vset.pattern.permute.xlu0 72
        %1663 = vperm.xlu0 %1662, %v223
        %v1664 = vpop.permute.xlu0 %1663
        %v1666 = vmul.f32 %v221, %v1660
        %v1667 = vmul.f32 %v221, %v1664
        %1670 = vrot.lane.b32.xlu0 %v1666, 56
        %v1671 = vpop.permute.xlu0 %1670
        %1672 = vrot.lane.b32.xlu0 %v1667, 56
        %v1673 = vpop.permute.xlu0 %1672
        %v1676 = vadd.f32 %v1656, %v1671
        %v1677 = vadd.f32 %v1657, %v1673
        %1678 = vset.pattern.permute.xlu0 73
        %1679 = vperm.xlu0 %1678, %v222
        %v1680 = vpop.permute.xlu0 %1679
        %1682 = vset.pattern.permute.xlu0 73
        %1683 = vperm.xlu0 %1682, %v223
        %v1684 = vpop.permute.xlu0 %1683
        %v1686 = vmul.f32 %v221, %v1680
        %v1687 = vmul.f32 %v221, %v1684
        %1690 = vrot.lane.b32.xlu0 %v1686, 55
        %v1691 = vpop.permute.xlu0 %1690
        %1692 = vrot.lane.b32.xlu0 %v1687, 55
        %v1693 = vpop.permute.xlu0 %1692
        %v1696 = vadd.f32 %v1676, %v1691
        %v1697 = vadd.f32 %v1677, %v1693
        %1698 = vset.pattern.permute.xlu0 74
        %1699 = vperm.xlu0 %1698, %v222
        %v1700 = vpop.permute.xlu0 %1699
        %1702 = vset.pattern.permute.xlu0 74
        %1703 = vperm.xlu0 %1702, %v223
        %v1704 = vpop.permute.xlu0 %1703
        %v1706 = vmul.f32 %v221, %v1700
        %v1707 = vmul.f32 %v221, %v1704
        %1710 = vrot.lane.b32.xlu0 %v1706, 54
        %v1711 = vpop.permute.xlu0 %1710
        %1712 = vrot.lane.b32.xlu0 %v1707, 54
        %v1713 = vpop.permute.xlu0 %1712
        %v1716 = vadd.f32 %v1696, %v1711
        %v1717 = vadd.f32 %v1697, %v1713
        %1718 = vset.pattern.permute.xlu0 75
        %1719 = vperm.xlu0 %1718, %v222
        %v1720 = vpop.permute.xlu0 %1719
        %1722 = vset.pattern.permute.xlu0 75
        %1723 = vperm.xlu0 %1722, %v223
        %v1724 = vpop.permute.xlu0 %1723
        %v1726 = vmul.f32 %v221, %v1720
        %v1727 = vmul.f32 %v221, %v1724
        %1730 = vrot.lane.b32.xlu0 %v1726, 53
        %v1731 = vpop.permute.xlu0 %1730
        %1732 = vrot.lane.b32.xlu0 %v1727, 53
        %v1733 = vpop.permute.xlu0 %1732
        %v1736 = vadd.f32 %v1716, %v1731
        %v1737 = vadd.f32 %v1717, %v1733
        %1738 = vset.pattern.permute.xlu0 76
        %1739 = vperm.xlu0 %1738, %v222
        %v1740 = vpop.permute.xlu0 %1739
        %1742 = vset.pattern.permute.xlu0 76
        %1743 = vperm.xlu0 %1742, %v223
        %v1744 = vpop.permute.xlu0 %1743
        %v1746 = vmul.f32 %v221, %v1740
        %v1747 = vmul.f32 %v221, %v1744
        %1750 = vrot.lane.b32.xlu0 %v1746, 52
        %v1751 = vpop.permute.xlu0 %1750
        %1752 = vrot.lane.b32.xlu0 %v1747, 52
        %v1753 = vpop.permute.xlu0 %1752
        %v1756 = vadd.f32 %v1736, %v1751
        %v1757 = vadd.f32 %v1737, %v1753
        %1758 = vset.pattern.permute.xlu0 77
        %1759 = vperm.xlu0 %1758, %v222
        %v1760 = vpop.permute.xlu0 %1759
        %1762 = vset.pattern.permute.xlu0 77
        %1763 = vperm.xlu0 %1762, %v223
        %v1764 = vpop.permute.xlu0 %1763
        %v1766 = vmul.f32 %v221, %v1760
        %v1767 = vmul.f32 %v221, %v1764
        %1770 = vrot.lane.b32.xlu0 %v1766, 51
        %v1771 = vpop.permute.xlu0 %1770
        %1772 = vrot.lane.b32.xlu0 %v1767, 51
        %v1773 = vpop.permute.xlu0 %1772
        %v1776 = vadd.f32 %v1756, %v1771
        %v1777 = vadd.f32 %v1757, %v1773
        %1778 = vset.pattern.permute.xlu0 78
        %1779 = vperm.xlu0 %1778, %v222
        %v1780 = vpop.permute.xlu0 %1779
        %1782 = vset.pattern.permute.xlu0 78
        %1783 = vperm.xlu0 %1782, %v223
        %v1784 = vpop.permute.xlu0 %1783
        %v1786 = vmul.f32 %v221, %v1780
        %v1787 = vmul.f32 %v221, %v1784
        %1790 = vrot.lane.b32.xlu0 %v1786, 50
        %v1791 = vpop.permute.xlu0 %1790
        %1792 = vrot.lane.b32.xlu0 %v1787, 50
        %v1793 = vpop.permute.xlu0 %1792
        %v1796 = vadd.f32 %v1776, %v1791
        %v1797 = vadd.f32 %v1777, %v1793
        %1798 = vset.pattern.permute.xlu0 79
        %1799 = vperm.xlu0 %1798, %v222
        %v1800 = vpop.permute.xlu0 %1799
        %1802 = vset.pattern.permute.xlu0 79
        %1803 = vperm.xlu0 %1802, %v223
        %v1804 = vpop.permute.xlu0 %1803
        %v1806 = vmul.f32 %v221, %v1800
        %v1807 = vmul.f32 %v221, %v1804
        %1810 = vrot.lane.b32.xlu0 %v1806, 49
        %v1811 = vpop.permute.xlu0 %1810
        %1812 = vrot.lane.b32.xlu0 %v1807, 49
        %v1813 = vpop.permute.xlu0 %1812
        %v1816 = vadd.f32 %v1796, %v1811
        %v1817 = vadd.f32 %v1797, %v1813
        %1818 = vset.pattern.permute.xlu0 80
        %1819 = vperm.xlu0 %1818, %v222
        %v1820 = vpop.permute.xlu0 %1819
        %1822 = vset.pattern.permute.xlu0 80
        %1823 = vperm.xlu0 %1822, %v223
        %v1824 = vpop.permute.xlu0 %1823
        %v1826 = vmul.f32 %v221, %v1820
        %v1827 = vmul.f32 %v221, %v1824
        %1830 = vrot.lane.b32.xlu0 %v1826, 48
        %v1831 = vpop.permute.xlu0 %1830
        %1832 = vrot.lane.b32.xlu0 %v1827, 48
        %v1833 = vpop.permute.xlu0 %1832
        %v1836 = vadd.f32 %v1816, %v1831
        %v1837 = vadd.f32 %v1817, %v1833
        %1838 = vset.pattern.permute.xlu0 81
        %1839 = vperm.xlu0 %1838, %v222
        %v1840 = vpop.permute.xlu0 %1839
        %1842 = vset.pattern.permute.xlu0 81
        %1843 = vperm.xlu0 %1842, %v223
        %v1844 = vpop.permute.xlu0 %1843
        %v1846 = vmul.f32 %v221, %v1840
        %v1847 = vmul.f32 %v221, %v1844
        %1850 = vrot.lane.b32.xlu0 %v1846, 47
        %v1851 = vpop.permute.xlu0 %1850
        %1852 = vrot.lane.b32.xlu0 %v1847, 47
        %v1853 = vpop.permute.xlu0 %1852
        %v1856 = vadd.f32 %v1836, %v1851
        %v1857 = vadd.f32 %v1837, %v1853
        %1858 = vset.pattern.permute.xlu0 82
        %1859 = vperm.xlu0 %1858, %v222
        %v1860 = vpop.permute.xlu0 %1859
        %1862 = vset.pattern.permute.xlu0 82
        %1863 = vperm.xlu0 %1862, %v223
        %v1864 = vpop.permute.xlu0 %1863
        %v1866 = vmul.f32 %v221, %v1860
        %v1867 = vmul.f32 %v221, %v1864
        %1870 = vrot.lane.b32.xlu0 %v1866, 46
        %v1871 = vpop.permute.xlu0 %1870
        %1872 = vrot.lane.b32.xlu0 %v1867, 46
        %v1873 = vpop.permute.xlu0 %1872
        %v1876 = vadd.f32 %v1856, %v1871
        %v1877 = vadd.f32 %v1857, %v1873
        %1878 = vset.pattern.permute.xlu0 83
        %1879 = vperm.xlu0 %1878, %v222
        %v1880 = vpop.permute.xlu0 %1879
        %1882 = vset.pattern.permute.xlu0 83
        %1883 = vperm.xlu0 %1882, %v223
        %v1884 = vpop.permute.xlu0 %1883
        %v1886 = vmul.f32 %v221, %v1880
        %v1887 = vmul.f32 %v221, %v1884
        %1890 = vrot.lane.b32.xlu0 %v1886, 45
        %v1891 = vpop.permute.xlu0 %1890
        %1892 = vrot.lane.b32.xlu0 %v1887, 45
        %v1893 = vpop.permute.xlu0 %1892
        %v1896 = vadd.f32 %v1876, %v1891
        %v1897 = vadd.f32 %v1877, %v1893
        %1898 = vset.pattern.permute.xlu0 84
        %1899 = vperm.xlu0 %1898, %v222
        %v1900 = vpop.permute.xlu0 %1899
        %1902 = vset.pattern.permute.xlu0 84
        %1903 = vperm.xlu0 %1902, %v223
        %v1904 = vpop.permute.xlu0 %1903
        %v1906 = vmul.f32 %v221, %v1900
        %v1907 = vmul.f32 %v221, %v1904
        %1910 = vrot.lane.b32.xlu0 %v1906, 44
        %v1911 = vpop.permute.xlu0 %1910
        %1912 = vrot.lane.b32.xlu0 %v1907, 44
        %v1913 = vpop.permute.xlu0 %1912
        %v1916 = vadd.f32 %v1896, %v1911
        %v1917 = vadd.f32 %v1897, %v1913
        %1918 = vset.pattern.permute.xlu0 85
        %1919 = vperm.xlu0 %1918, %v222
        %v1920 = vpop.permute.xlu0 %1919
        %1922 = vset.pattern.permute.xlu0 85
        %1923 = vperm.xlu0 %1922, %v223
        %v1924 = vpop.permute.xlu0 %1923
        %v1926 = vmul.f32 %v221, %v1920
        %v1927 = vmul.f32 %v221, %v1924
        %1930 = vrot.lane.b32.xlu0 %v1926, 43
        %v1931 = vpop.permute.xlu0 %1930
        %1932 = vrot.lane.b32.xlu0 %v1927, 43
        %v1933 = vpop.permute.xlu0 %1932
        %v1936 = vadd.f32 %v1916, %v1931
        %v1937 = vadd.f32 %v1917, %v1933
        %1938 = vset.pattern.permute.xlu0 86
        %1939 = vperm.xlu0 %1938, %v222
        %v1940 = vpop.permute.xlu0 %1939
        %1942 = vset.pattern.permute.xlu0 86
        %1943 = vperm.xlu0 %1942, %v223
        %v1944 = vpop.permute.xlu0 %1943
        %v1946 = vmul.f32 %v221, %v1940
        %v1947 = vmul.f32 %v221, %v1944
        %1950 = vrot.lane.b32.xlu0 %v1946, 42
        %v1951 = vpop.permute.xlu0 %1950
        %1952 = vrot.lane.b32.xlu0 %v1947, 42
        %v1953 = vpop.permute.xlu0 %1952
        %v1956 = vadd.f32 %v1936, %v1951
        %v1957 = vadd.f32 %v1937, %v1953
        %1958 = vset.pattern.permute.xlu0 87
        %1959 = vperm.xlu0 %1958, %v222
        %v1960 = vpop.permute.xlu0 %1959
        %1962 = vset.pattern.permute.xlu0 87
        %1963 = vperm.xlu0 %1962, %v223
        %v1964 = vpop.permute.xlu0 %1963
        %v1966 = vmul.f32 %v221, %v1960
        %v1967 = vmul.f32 %v221, %v1964
        %1970 = vrot.lane.b32.xlu0 %v1966, 41
        %v1971 = vpop.permute.xlu0 %1970
        %1972 = vrot.lane.b32.xlu0 %v1967, 41
        %v1973 = vpop.permute.xlu0 %1972
        %v1976 = vadd.f32 %v1956, %v1971
        %v1977 = vadd.f32 %v1957, %v1973
        %1978 = vset.pattern.permute.xlu0 88
        %1979 = vperm.xlu0 %1978, %v222
        %v1980 = vpop.permute.xlu0 %1979
        %1982 = vset.pattern.permute.xlu0 88
        %1983 = vperm.xlu0 %1982, %v223
        %v1984 = vpop.permute.xlu0 %1983
        %v1986 = vmul.f32 %v221, %v1980
        %v1987 = vmul.f32 %v221, %v1984
        %1990 = vrot.lane.b32.xlu0 %v1986, 40
        %v1991 = vpop.permute.xlu0 %1990
        %1992 = vrot.lane.b32.xlu0 %v1987, 40
        %v1993 = vpop.permute.xlu0 %1992
        %v1996 = vadd.f32 %v1976, %v1991
        %v1997 = vadd.f32 %v1977, %v1993
        %1998 = vset.pattern.permute.xlu0 89
        %1999 = vperm.xlu0 %1998, %v222
        %v2000 = vpop.permute.xlu0 %1999
        %2002 = vset.pattern.permute.xlu0 89
        %2003 = vperm.xlu0 %2002, %v223
        %v2004 = vpop.permute.xlu0 %2003
        %v2006 = vmul.f32 %v221, %v2000
        %v2007 = vmul.f32 %v221, %v2004
        %2010 = vrot.lane.b32.xlu0 %v2006, 39
        %v2011 = vpop.permute.xlu0 %2010
        %2012 = vrot.lane.b32.xlu0 %v2007, 39
        %v2013 = vpop.permute.xlu0 %2012
        %v2016 = vadd.f32 %v1996, %v2011
        %v2017 = vadd.f32 %v1997, %v2013
        %2018 = vset.pattern.permute.xlu0 90
        %2019 = vperm.xlu0 %2018, %v222
        %v2020 = vpop.permute.xlu0 %2019
        %2022 = vset.pattern.permute.xlu0 90
        %2023 = vperm.xlu0 %2022, %v223
        %v2024 = vpop.permute.xlu0 %2023
        %v2026 = vmul.f32 %v221, %v2020
        %v2027 = vmul.f32 %v221, %v2024
        %2030 = vrot.lane.b32.xlu0 %v2026, 38
        %v2031 = vpop.permute.xlu0 %2030
        %2032 = vrot.lane.b32.xlu0 %v2027, 38
        %v2033 = vpop.permute.xlu0 %2032
        %v2036 = vadd.f32 %v2016, %v2031
        %v2037 = vadd.f32 %v2017, %v2033
        %2038 = vset.pattern.permute.xlu0 91
        %2039 = vperm.xlu0 %2038, %v222
        %v2040 = vpop.permute.xlu0 %2039
        %2042 = vset.pattern.permute.xlu0 91
        %2043 = vperm.xlu0 %2042, %v223
        %v2044 = vpop.permute.xlu0 %2043
        %v2046 = vmul.f32 %v221, %v2040
        %v2047 = vmul.f32 %v221, %v2044
        %2050 = vrot.lane.b32.xlu0 %v2046, 37
        %v2051 = vpop.permute.xlu0 %2050
        %2052 = vrot.lane.b32.xlu0 %v2047, 37
        %v2053 = vpop.permute.xlu0 %2052
        %v2056 = vadd.f32 %v2036, %v2051
        %v2057 = vadd.f32 %v2037, %v2053
        %2058 = vset.pattern.permute.xlu0 92
        %2059 = vperm.xlu0 %2058, %v222
        %v2060 = vpop.permute.xlu0 %2059
        %2062 = vset.pattern.permute.xlu0 92
        %2063 = vperm.xlu0 %2062, %v223
        %v2064 = vpop.permute.xlu0 %2063
        %v2066 = vmul.f32 %v221, %v2060
        %v2067 = vmul.f32 %v221, %v2064
        %2070 = vrot.lane.b32.xlu0 %v2066, 36
        %v2071 = vpop.permute.xlu0 %2070
        %2072 = vrot.lane.b32.xlu0 %v2067, 36
        %v2073 = vpop.permute.xlu0 %2072
        %v2076 = vadd.f32 %v2056, %v2071
        %v2077 = vadd.f32 %v2057, %v2073
        %2078 = vset.pattern.permute.xlu0 93
        %2079 = vperm.xlu0 %2078, %v222
        %v2080 = vpop.permute.xlu0 %2079
        %2082 = vset.pattern.permute.xlu0 93
        %2083 = vperm.xlu0 %2082, %v223
        %v2084 = vpop.permute.xlu0 %2083
        %v2086 = vmul.f32 %v221, %v2080
        %v2087 = vmul.f32 %v221, %v2084
        %2090 = vrot.lane.b32.xlu0 %v2086, 35
        %v2091 = vpop.permute.xlu0 %2090
        %2092 = vrot.lane.b32.xlu0 %v2087, 35
        %v2093 = vpop.permute.xlu0 %2092
        %v2096 = vadd.f32 %v2076, %v2091
        %v2097 = vadd.f32 %v2077, %v2093
        %2098 = vset.pattern.permute.xlu0 94
        %2099 = vperm.xlu0 %2098, %v222
        %v2100 = vpop.permute.xlu0 %2099
        %2102 = vset.pattern.permute.xlu0 94
        %2103 = vperm.xlu0 %2102, %v223
        %v2104 = vpop.permute.xlu0 %2103
        %v2106 = vmul.f32 %v221, %v2100
        %v2107 = vmul.f32 %v221, %v2104
        %2110 = vrot.lane.b32.xlu0 %v2106, 34
        %v2111 = vpop.permute.xlu0 %2110
        %2112 = vrot.lane.b32.xlu0 %v2107, 34
        %v2113 = vpop.permute.xlu0 %2112
        %v2116 = vadd.f32 %v2096, %v2111
        %v2117 = vadd.f32 %v2097, %v2113
        %2118 = vset.pattern.permute.xlu0 95
        %2119 = vperm.xlu0 %2118, %v222
        %v2120 = vpop.permute.xlu0 %2119
        %2122 = vset.pattern.permute.xlu0 95
        %2123 = vperm.xlu0 %2122, %v223
        %v2124 = vpop.permute.xlu0 %2123
        %v2126 = vmul.f32 %v221, %v2120
        %v2127 = vmul.f32 %v221, %v2124
        %2130 = vrot.lane.b32.xlu0 %v2126, 33
        %v2131 = vpop.permute.xlu0 %2130
        %2132 = vrot.lane.b32.xlu0 %v2127, 33
        %v2133 = vpop.permute.xlu0 %2132
        %v2136 = vadd.f32 %v2116, %v2131
        %v2137 = vadd.f32 %v2117, %v2133
        %2138 = vset.pattern.permute.xlu0 96
        %2139 = vperm.xlu0 %2138, %v222
        %v2140 = vpop.permute.xlu0 %2139
        %2142 = vset.pattern.permute.xlu0 96
        %2143 = vperm.xlu0 %2142, %v223
        %v2144 = vpop.permute.xlu0 %2143
        %v2146 = vmul.f32 %v221, %v2140
        %v2147 = vmul.f32 %v221, %v2144
        %2150 = vrot.lane.b32.xlu0 %v2146, 32
        %v2151 = vpop.permute.xlu0 %2150
        %2152 = vrot.lane.b32.xlu0 %v2147, 32
        %v2153 = vpop.permute.xlu0 %2152
        %v2156 = vadd.f32 %v2136, %v2151
        %v2157 = vadd.f32 %v2137, %v2153
        %2158 = vset.pattern.permute.xlu0 97
        %2159 = vperm.xlu0 %2158, %v222
        %v2160 = vpop.permute.xlu0 %2159
        %2162 = vset.pattern.permute.xlu0 97
        %2163 = vperm.xlu0 %2162, %v223
        %v2164 = vpop.permute.xlu0 %2163
        %v2166 = vmul.f32 %v221, %v2160
        %v2167 = vmul.f32 %v221, %v2164
        %2170 = vrot.lane.b32.xlu0 %v2166, 31
        %v2171 = vpop.permute.xlu0 %2170
        %2172 = vrot.lane.b32.xlu0 %v2167, 31
        %v2173 = vpop.permute.xlu0 %2172
        %v2176 = vadd.f32 %v2156, %v2171
        %v2177 = vadd.f32 %v2157, %v2173
        %2178 = vset.pattern.permute.xlu0 98
        %2179 = vperm.xlu0 %2178, %v222
        %v2180 = vpop.permute.xlu0 %2179
        %2182 = vset.pattern.permute.xlu0 98
        %2183 = vperm.xlu0 %2182, %v223
        %v2184 = vpop.permute.xlu0 %2183
        %v2186 = vmul.f32 %v221, %v2180
        %v2187 = vmul.f32 %v221, %v2184
        %2190 = vrot.lane.b32.xlu0 %v2186, 30
        %v2191 = vpop.permute.xlu0 %2190
        %2192 = vrot.lane.b32.xlu0 %v2187, 30
        %v2193 = vpop.permute.xlu0 %2192
        %v2196 = vadd.f32 %v2176, %v2191
        %v2197 = vadd.f32 %v2177, %v2193
        %2198 = vset.pattern.permute.xlu0 99
        %2199 = vperm.xlu0 %2198, %v222
        %v2200 = vpop.permute.xlu0 %2199
        %2202 = vset.pattern.permute.xlu0 99
        %2203 = vperm.xlu0 %2202, %v223
        %v2204 = vpop.permute.xlu0 %2203
        %v2206 = vmul.f32 %v221, %v2200
        %v2207 = vmul.f32 %v221, %v2204
        %2210 = vrot.lane.b32.xlu0 %v2206, 29
        %v2211 = vpop.permute.xlu0 %2210
        %2212 = vrot.lane.b32.xlu0 %v2207, 29
        %v2213 = vpop.permute.xlu0 %2212
        %v2216 = vadd.f32 %v2196, %v2211
        %v2217 = vadd.f32 %v2197, %v2213
        %2218 = vset.pattern.permute.xlu0 100
        %2219 = vperm.xlu0 %2218, %v222
        %v2220 = vpop.permute.xlu0 %2219
        %2222 = vset.pattern.permute.xlu0 100
        %2223 = vperm.xlu0 %2222, %v223
        %v2224 = vpop.permute.xlu0 %2223
        %v2226 = vmul.f32 %v221, %v2220
        %v2227 = vmul.f32 %v221, %v2224
        %2230 = vrot.lane.b32.xlu0 %v2226, 28
        %v2231 = vpop.permute.xlu0 %2230
        %2232 = vrot.lane.b32.xlu0 %v2227, 28
        %v2233 = vpop.permute.xlu0 %2232
        %v2236 = vadd.f32 %v2216, %v2231
        %v2237 = vadd.f32 %v2217, %v2233
        %2238 = vset.pattern.permute.xlu0 101
        %2239 = vperm.xlu0 %2238, %v222
        %v2240 = vpop.permute.xlu0 %2239
        %2242 = vset.pattern.permute.xlu0 101
        %2243 = vperm.xlu0 %2242, %v223
        %v2244 = vpop.permute.xlu0 %2243
        %v2246 = vmul.f32 %v221, %v2240
        %v2247 = vmul.f32 %v221, %v2244
        %2250 = vrot.lane.b32.xlu0 %v2246, 27
        %v2251 = vpop.permute.xlu0 %2250
        %2252 = vrot.lane.b32.xlu0 %v2247, 27
        %v2253 = vpop.permute.xlu0 %2252
        %v2256 = vadd.f32 %v2236, %v2251
        %v2257 = vadd.f32 %v2237, %v2253
        %2258 = vset.pattern.permute.xlu0 102
        %2259 = vperm.xlu0 %2258, %v222
        %v2260 = vpop.permute.xlu0 %2259
        %2262 = vset.pattern.permute.xlu0 102
        %2263 = vperm.xlu0 %2262, %v223
        %v2264 = vpop.permute.xlu0 %2263
        %v2266 = vmul.f32 %v221, %v2260
        %v2267 = vmul.f32 %v221, %v2264
        %2270 = vrot.lane.b32.xlu0 %v2266, 26
        %v2271 = vpop.permute.xlu0 %2270
        %2272 = vrot.lane.b32.xlu0 %v2267, 26
        %v2273 = vpop.permute.xlu0 %2272
        %v2276 = vadd.f32 %v2256, %v2271
        %v2277 = vadd.f32 %v2257, %v2273
        %2278 = vset.pattern.permute.xlu0 103
        %2279 = vperm.xlu0 %2278, %v222
        %v2280 = vpop.permute.xlu0 %2279
        %2282 = vset.pattern.permute.xlu0 103
        %2283 = vperm.xlu0 %2282, %v223
        %v2284 = vpop.permute.xlu0 %2283
        %v2286 = vmul.f32 %v221, %v2280
        %v2287 = vmul.f32 %v221, %v2284
        %2290 = vrot.lane.b32.xlu0 %v2286, 25
        %v2291 = vpop.permute.xlu0 %2290
        %2292 = vrot.lane.b32.xlu0 %v2287, 25
        %v2293 = vpop.permute.xlu0 %2292
        %v2296 = vadd.f32 %v2276, %v2291
        %v2297 = vadd.f32 %v2277, %v2293
        %2298 = vset.pattern.permute.xlu0 104
        %2299 = vperm.xlu0 %2298, %v222
        %v2300 = vpop.permute.xlu0 %2299
        %2302 = vset.pattern.permute.xlu0 104
        %2303 = vperm.xlu0 %2302, %v223
        %v2304 = vpop.permute.xlu0 %2303
        %v2306 = vmul.f32 %v221, %v2300
        %v2307 = vmul.f32 %v221, %v2304
        %2310 = vrot.lane.b32.xlu0 %v2306, 24
        %v2311 = vpop.permute.xlu0 %2310
        %2312 = vrot.lane.b32.xlu0 %v2307, 24
        %v2313 = vpop.permute.xlu0 %2312
        %v2316 = vadd.f32 %v2296, %v2311
        %v2317 = vadd.f32 %v2297, %v2313
        %2318 = vset.pattern.permute.xlu0 105
        %2319 = vperm.xlu0 %2318, %v222
        %v2320 = vpop.permute.xlu0 %2319
        %2322 = vset.pattern.permute.xlu0 105
        %2323 = vperm.xlu0 %2322, %v223
        %v2324 = vpop.permute.xlu0 %2323
        %v2326 = vmul.f32 %v221, %v2320
        %v2327 = vmul.f32 %v221, %v2324
        %2330 = vrot.lane.b32.xlu0 %v2326, 23
        %v2331 = vpop.permute.xlu0 %2330
        %2332 = vrot.lane.b32.xlu0 %v2327, 23
        %v2333 = vpop.permute.xlu0 %2332
        %v2336 = vadd.f32 %v2316, %v2331
        %v2337 = vadd.f32 %v2317, %v2333
        %2338 = vset.pattern.permute.xlu0 106
        %2339 = vperm.xlu0 %2338, %v222
        %v2340 = vpop.permute.xlu0 %2339
        %2342 = vset.pattern.permute.xlu0 106
        %2343 = vperm.xlu0 %2342, %v223
        %v2344 = vpop.permute.xlu0 %2343
        %v2346 = vmul.f32 %v221, %v2340
        %v2347 = vmul.f32 %v221, %v2344
        %2350 = vrot.lane.b32.xlu0 %v2346, 22
        %v2351 = vpop.permute.xlu0 %2350
        %2352 = vrot.lane.b32.xlu0 %v2347, 22
        %v2353 = vpop.permute.xlu0 %2352
        %v2356 = vadd.f32 %v2336, %v2351
        %v2357 = vadd.f32 %v2337, %v2353
        %2358 = vset.pattern.permute.xlu0 107
        %2359 = vperm.xlu0 %2358, %v222
        %v2360 = vpop.permute.xlu0 %2359
        %2362 = vset.pattern.permute.xlu0 107
        %2363 = vperm.xlu0 %2362, %v223
        %v2364 = vpop.permute.xlu0 %2363
        %v2366 = vmul.f32 %v221, %v2360
        %v2367 = vmul.f32 %v221, %v2364
        %2370 = vrot.lane.b32.xlu0 %v2366, 21
        %v2371 = vpop.permute.xlu0 %2370
        %2372 = vrot.lane.b32.xlu0 %v2367, 21
        %v2373 = vpop.permute.xlu0 %2372
        %v2376 = vadd.f32 %v2356, %v2371
        %v2377 = vadd.f32 %v2357, %v2373
        %2378 = vset.pattern.permute.xlu0 108
        %2379 = vperm.xlu0 %2378, %v222
        %v2380 = vpop.permute.xlu0 %2379
        %2382 = vset.pattern.permute.xlu0 108
        %2383 = vperm.xlu0 %2382, %v223
        %v2384 = vpop.permute.xlu0 %2383
        %v2386 = vmul.f32 %v221, %v2380
        %v2387 = vmul.f32 %v221, %v2384
        %2390 = vrot.lane.b32.xlu0 %v2386, 20
        %v2391 = vpop.permute.xlu0 %2390
        %2392 = vrot.lane.b32.xlu0 %v2387, 20
        %v2393 = vpop.permute.xlu0 %2392
        %v2396 = vadd.f32 %v2376, %v2391
        %v2397 = vadd.f32 %v2377, %v2393
        %2398 = vset.pattern.permute.xlu0 109
        %2399 = vperm.xlu0 %2398, %v222
        %v2400 = vpop.permute.xlu0 %2399
        %2402 = vset.pattern.permute.xlu0 109
        %2403 = vperm.xlu0 %2402, %v223
        %v2404 = vpop.permute.xlu0 %2403
        %v2406 = vmul.f32 %v221, %v2400
        %v2407 = vmul.f32 %v221, %v2404
        %2410 = vrot.lane.b32.xlu0 %v2406, 19
        %v2411 = vpop.permute.xlu0 %2410
        %2412 = vrot.lane.b32.xlu0 %v2407, 19
        %v2413 = vpop.permute.xlu0 %2412
        %v2416 = vadd.f32 %v2396, %v2411
        %v2417 = vadd.f32 %v2397, %v2413
        %2418 = vset.pattern.permute.xlu0 110
        %2419 = vperm.xlu0 %2418, %v222
        %v2420 = vpop.permute.xlu0 %2419
        %2422 = vset.pattern.permute.xlu0 110
        %2423 = vperm.xlu0 %2422, %v223
        %v2424 = vpop.permute.xlu0 %2423
        %v2426 = vmul.f32 %v221, %v2420
        %v2427 = vmul.f32 %v221, %v2424
        %2430 = vrot.lane.b32.xlu0 %v2426, 18
        %v2431 = vpop.permute.xlu0 %2430
        %2432 = vrot.lane.b32.xlu0 %v2427, 18
        %v2433 = vpop.permute.xlu0 %2432
        %v2436 = vadd.f32 %v2416, %v2431
        %v2437 = vadd.f32 %v2417, %v2433
        %2438 = vset.pattern.permute.xlu0 111
        %2439 = vperm.xlu0 %2438, %v222
        %v2440 = vpop.permute.xlu0 %2439
        %2442 = vset.pattern.permute.xlu0 111
        %2443 = vperm.xlu0 %2442, %v223
        %v2444 = vpop.permute.xlu0 %2443
        %v2446 = vmul.f32 %v221, %v2440
        %v2447 = vmul.f32 %v221, %v2444
        %2450 = vrot.lane.b32.xlu0 %v2446, 17
        %v2451 = vpop.permute.xlu0 %2450
        %2452 = vrot.lane.b32.xlu0 %v2447, 17
        %v2453 = vpop.permute.xlu0 %2452
        %v2456 = vadd.f32 %v2436, %v2451
        %v2457 = vadd.f32 %v2437, %v2453
        %2458 = vset.pattern.permute.xlu0 112
        %2459 = vperm.xlu0 %2458, %v222
        %v2460 = vpop.permute.xlu0 %2459
        %2462 = vset.pattern.permute.xlu0 112
        %2463 = vperm.xlu0 %2462, %v223
        %v2464 = vpop.permute.xlu0 %2463
        %v2466 = vmul.f32 %v221, %v2460
        %v2467 = vmul.f32 %v221, %v2464
        %2470 = vrot.lane.b32.xlu0 %v2466, 16
        %v2471 = vpop.permute.xlu0 %2470
        %2472 = vrot.lane.b32.xlu0 %v2467, 16
        %v2473 = vpop.permute.xlu0 %2472
        %v2476 = vadd.f32 %v2456, %v2471
        %v2477 = vadd.f32 %v2457, %v2473
        %2478 = vset.pattern.permute.xlu0 113
        %2479 = vperm.xlu0 %2478, %v222
        %v2480 = vpop.permute.xlu0 %2479
        %2482 = vset.pattern.permute.xlu0 113
        %2483 = vperm.xlu0 %2482, %v223
        %v2484 = vpop.permute.xlu0 %2483
        %v2486 = vmul.f32 %v221, %v2480
        %v2487 = vmul.f32 %v221, %v2484
        %2490 = vrot.lane.b32.xlu0 %v2486, 15
        %v2491 = vpop.permute.xlu0 %2490
        %2492 = vrot.lane.b32.xlu0 %v2487, 15
        %v2493 = vpop.permute.xlu0 %2492
        %v2496 = vadd.f32 %v2476, %v2491
        %v2497 = vadd.f32 %v2477, %v2493
        %2498 = vset.pattern.permute.xlu0 114
        %2499 = vperm.xlu0 %2498, %v222
        %v2500 = vpop.permute.xlu0 %2499
        %2502 = vset.pattern.permute.xlu0 114
        %2503 = vperm.xlu0 %2502, %v223
        %v2504 = vpop.permute.xlu0 %2503
        %v2506 = vmul.f32 %v221, %v2500
        %v2507 = vmul.f32 %v221, %v2504
        %2510 = vrot.lane.b32.xlu0 %v2506, 14
        %v2511 = vpop.permute.xlu0 %2510
        %2512 = vrot.lane.b32.xlu0 %v2507, 14
        %v2513 = vpop.permute.xlu0 %2512
        %v2516 = vadd.f32 %v2496, %v2511
        %v2517 = vadd.f32 %v2497, %v2513
        %2518 = vset.pattern.permute.xlu0 115
        %2519 = vperm.xlu0 %2518, %v222
        %v2520 = vpop.permute.xlu0 %2519
        %2522 = vset.pattern.permute.xlu0 115
        %2523 = vperm.xlu0 %2522, %v223
        %v2524 = vpop.permute.xlu0 %2523
        %v2526 = vmul.f32 %v221, %v2520
        %v2527 = vmul.f32 %v221, %v2524
        %2530 = vrot.lane.b32.xlu0 %v2526, 13
        %v2531 = vpop.permute.xlu0 %2530
        %2532 = vrot.lane.b32.xlu0 %v2527, 13
        %v2533 = vpop.permute.xlu0 %2532
        %v2536 = vadd.f32 %v2516, %v2531
        %v2537 = vadd.f32 %v2517, %v2533
        %2538 = vset.pattern.permute.xlu0 116
        %2539 = vperm.xlu0 %2538, %v222
        %v2540 = vpop.permute.xlu0 %2539
        %2542 = vset.pattern.permute.xlu0 116
        %2543 = vperm.xlu0 %2542, %v223
        %v2544 = vpop.permute.xlu0 %2543
        %v2546 = vmul.f32 %v221, %v2540
        %v2547 = vmul.f32 %v221, %v2544
        %2550 = vrot.lane.b32.xlu0 %v2546, 12
        %v2551 = vpop.permute.xlu0 %2550
        %2552 = vrot.lane.b32.xlu0 %v2547, 12
        %v2553 = vpop.permute.xlu0 %2552
        %v2556 = vadd.f32 %v2536, %v2551
        %v2557 = vadd.f32 %v2537, %v2553
        %2558 = vset.pattern.permute.xlu0 117
        %2559 = vperm.xlu0 %2558, %v222
        %v2560 = vpop.permute.xlu0 %2559
        %2562 = vset.pattern.permute.xlu0 117
        %2563 = vperm.xlu0 %2562, %v223
        %v2564 = vpop.permute.xlu0 %2563
        %v2566 = vmul.f32 %v221, %v2560
        %v2567 = vmul.f32 %v221, %v2564
        %2570 = vrot.lane.b32.xlu0 %v2566, 11
        %v2571 = vpop.permute.xlu0 %2570
        %2572 = vrot.lane.b32.xlu0 %v2567, 11
        %v2573 = vpop.permute.xlu0 %2572
        %v2576 = vadd.f32 %v2556, %v2571
        %v2577 = vadd.f32 %v2557, %v2573
        %2578 = vset.pattern.permute.xlu0 118
        %2579 = vperm.xlu0 %2578, %v222
        %v2580 = vpop.permute.xlu0 %2579
        %2582 = vset.pattern.permute.xlu0 118
        %2583 = vperm.xlu0 %2582, %v223
        %v2584 = vpop.permute.xlu0 %2583
        %v2586 = vmul.f32 %v221, %v2580
        %v2587 = vmul.f32 %v221, %v2584
        %2590 = vrot.lane.b32.xlu0 %v2586, 10
        %v2591 = vpop.permute.xlu0 %2590
        %2592 = vrot.lane.b32.xlu0 %v2587, 10
        %v2593 = vpop.permute.xlu0 %2592
        %v2596 = vadd.f32 %v2576, %v2591
        %v2597 = vadd.f32 %v2577, %v2593
        %2598 = vset.pattern.permute.xlu0 119
        %2599 = vperm.xlu0 %2598, %v222
        %v2600 = vpop.permute.xlu0 %2599
        %2602 = vset.pattern.permute.xlu0 119
        %2603 = vperm.xlu0 %2602, %v223
        %v2604 = vpop.permute.xlu0 %2603
        %v2606 = vmul.f32 %v221, %v2600
        %v2607 = vmul.f32 %v221, %v2604
        %2610 = vrot.lane.b32.xlu0 %v2606, 9
        %v2611 = vpop.permute.xlu0 %2610
        %2612 = vrot.lane.b32.xlu0 %v2607, 9
        %v2613 = vpop.permute.xlu0 %2612
        %v2616 = vadd.f32 %v2596, %v2611
        %v2617 = vadd.f32 %v2597, %v2613
        %2618 = vset.pattern.permute.xlu0 120
        %2619 = vperm.xlu0 %2618, %v222
        %v2620 = vpop.permute.xlu0 %2619
        %2622 = vset.pattern.permute.xlu0 120
        %2623 = vperm.xlu0 %2622, %v223
        %v2624 = vpop.permute.xlu0 %2623
        %v2626 = vmul.f32 %v221, %v2620
        %v2627 = vmul.f32 %v221, %v2624
        %2630 = vrot.lane.b32.xlu0 %v2626, 8
        %v2631 = vpop.permute.xlu0 %2630
        %2632 = vrot.lane.b32.xlu0 %v2627, 8
        %v2633 = vpop.permute.xlu0 %2632
        %v2636 = vadd.f32 %v2616, %v2631
        %v2637 = vadd.f32 %v2617, %v2633
        %2638 = vset.pattern.permute.xlu0 121
        %2639 = vperm.xlu0 %2638, %v222
        %v2640 = vpop.permute.xlu0 %2639
        %2642 = vset.pattern.permute.xlu0 121
        %2643 = vperm.xlu0 %2642, %v223
        %v2644 = vpop.permute.xlu0 %2643
        %v2646 = vmul.f32 %v221, %v2640
        %v2647 = vmul.f32 %v221, %v2644
        %2650 = vrot.lane.b32.xlu0 %v2646, 7
        %v2651 = vpop.permute.xlu0 %2650
        %2652 = vrot.lane.b32.xlu0 %v2647, 7
        %v2653 = vpop.permute.xlu0 %2652
        %v2654 = vrot.slane %v2651, 4
        %v2655 = vrot.slane %v2653, 4
        %vm2656 = vcmask 56320
        %v2657 = vsel %vm2656, %v2651, %v2654
        %v2658 = vsel %vm2656, %v2653, %v2655
        %v2661 = vadd.f32 %v2636, %v2657
        %v2662 = vadd.f32 %v2637, %v2658
        %2663 = vset.pattern.permute.xlu0 122
        %2664 = vperm.xlu0 %2663, %v222
        %v2665 = vpop.permute.xlu0 %2664
        %2667 = vset.pattern.permute.xlu0 122
        %2668 = vperm.xlu0 %2667, %v223
        %v2669 = vpop.permute.xlu0 %2668
        %v2671 = vmul.f32 %v221, %v2665
        %v2672 = vmul.f32 %v221, %v2669
        %2675 = vrot.lane.b32.xlu0 %v2671, 6
        %v2676 = vpop.permute.xlu0 %2675
        %2677 = vrot.lane.b32.xlu0 %v2672, 6
        %v2678 = vpop.permute.xlu0 %2677
        %v2679 = vrot.slane %v2676, 4
        %v2680 = vrot.slane %v2678, 4
        %vm2681 = vcmask 48128
        %v2682 = vsel %vm2681, %v2676, %v2679
        %v2683 = vsel %vm2681, %v2678, %v2680
        %v2686 = vadd.f32 %v2661, %v2682
        %v2687 = vadd.f32 %v2662, %v2683
        %2688 = vset.pattern.permute.xlu0 123
        %2689 = vperm.xlu0 %2688, %v222
        %v2690 = vpop.permute.xlu0 %2689
        %2692 = vset.pattern.permute.xlu0 123
        %2693 = vperm.xlu0 %2692, %v223
        %v2694 = vpop.permute.xlu0 %2693
        %v2696 = vmul.f32 %v221, %v2690
        %v2697 = vmul.f32 %v221, %v2694
        %2700 = vrot.lane.b32.xlu0 %v2696, 5
        %v2701 = vpop.permute.xlu0 %2700
        %2702 = vrot.lane.b32.xlu0 %v2697, 5
        %v2703 = vpop.permute.xlu0 %2702
        %v2704 = vrot.slane %v2701, 4
        %v2705 = vrot.slane %v2703, 4
        %vm2706 = vcmask 39936
        %v2707 = vsel %vm2706, %v2701, %v2704
        %v2708 = vsel %vm2706, %v2703, %v2705
        %v2711 = vadd.f32 %v2686, %v2707
        %v2712 = vadd.f32 %v2687, %v2708
        %2713 = vset.pattern.permute.xlu0 124
        %2714 = vperm.xlu0 %2713, %v222
        %v2715 = vpop.permute.xlu0 %2714
        %2717 = vset.pattern.permute.xlu0 124
        %2718 = vperm.xlu0 %2717, %v223
        %v2719 = vpop.permute.xlu0 %2718
        %v2721 = vmul.f32 %v221, %v2715
        %v2722 = vmul.f32 %v221, %v2719
        %2725 = vrot.lane.b32.xlu0 %v2721, 4
        %v2726 = vpop.permute.xlu0 %2725
        %2727 = vrot.lane.b32.xlu0 %v2722, 4
        %v2728 = vpop.permute.xlu0 %2727
        %v2729 = vrot.slane %v2726, 4
        %v2730 = vrot.slane %v2728, 4
        %vm2731 = vcmask 31744
        %v2732 = vsel %vm2731, %v2726, %v2729
        %v2733 = vsel %vm2731, %v2728, %v2730
        %v2736 = vadd.f32 %v2711, %v2732
        %v2737 = vadd.f32 %v2712, %v2733
        %2738 = vset.pattern.permute.xlu0 125
        %2739 = vperm.xlu0 %2738, %v222
        %v2740 = vpop.permute.xlu0 %2739
        %2742 = vset.pattern.permute.xlu0 125
        %2743 = vperm.xlu0 %2742, %v223
        %v2744 = vpop.permute.xlu0 %2743
        %v2746 = vmul.f32 %v221, %v2740
        %v2747 = vmul.f32 %v221, %v2744
        %2750 = vrot.lane.b32.xlu0 %v2746, 3
        %v2751 = vpop.permute.xlu0 %2750
        %2752 = vrot.lane.b32.xlu0 %v2747, 3
        %v2753 = vpop.permute.xlu0 %2752
        %v2754 = vrot.slane %v2751, 4
        %v2755 = vrot.slane %v2753, 4
        %vm2756 = vcmask 23552
        %v2757 = vsel %vm2756, %v2751, %v2754
        %v2758 = vsel %vm2756, %v2753, %v2755
        %v2761 = vadd.f32 %v2736, %v2757
        %v2762 = vadd.f32 %v2737, %v2758
        %2763 = vset.pattern.permute.xlu0 126
        %2764 = vperm.xlu0 %2763, %v222
        %v2765 = vpop.permute.xlu0 %2764
        %2767 = vset.pattern.permute.xlu0 126
        %2768 = vperm.xlu0 %2767, %v223
        %v2769 = vpop.permute.xlu0 %2768
        %v2771 = vmul.f32 %v221, %v2765
        %v2772 = vmul.f32 %v221, %v2769
        %2775 = vrot.lane.b32.xlu0 %v2771, 2
        %v2776 = vpop.permute.xlu0 %2775
        %2777 = vrot.lane.b32.xlu0 %v2772, 2
        %v2778 = vpop.permute.xlu0 %2777
        %v2779 = vrot.slane %v2776, 4
        %v2780 = vrot.slane %v2778, 4
        %vm2781 = vcmask 15360
        %v2782 = vsel %vm2781, %v2776, %v2779
        %v2783 = vsel %vm2781, %v2778, %v2780
        %v2786 = vadd.f32 %v2761, %v2782
        %v2787 = vadd.f32 %v2762, %v2783
        %2788 = vset.pattern.permute.xlu0 127
        %2789 = vperm.xlu0 %2788, %v222
        %v2790 = vpop.permute.xlu0 %2789
        %2792 = vset.pattern.permute.xlu0 127
        %2793 = vperm.xlu0 %2792, %v223
        %v2794 = vpop.permute.xlu0 %2793
        %v2796 = vmul.f32 %v221, %v2790
        %v2797 = vmul.f32 %v221, %v2794
        %2800 = vrot.lane.b32.xlu0 %v2796, 1
        %v2801 = vpop.permute.xlu0 %2800
        %2802 = vrot.lane.b32.xlu0 %v2797, 1
        %v2803 = vpop.permute.xlu0 %2802
        %v2804 = vrot.slane %v2801, 4
        %v2805 = vrot.slane %v2803, 4
        %vm2806 = vcmask 7168
        %v2807 = vsel %vm2806, %v2801, %v2804
        %v2808 = vsel %vm2806, %v2803, %v2805
        %v2811 = vadd.f32 %v2786, %v2807
        %v2812 = vadd.f32 %v2787, %v2808
        %vm2813 = vcmask 60416
        %2814 = vst.msk [vmem:[%s215] sm:$0xf] %vm2813, %v2811
        %2815 = vst.msk [vmem:[%s215 + $0x4] sm:$0xf] %vm2813, %v2812
        %v2816 = vsel %vm2813, %v2811, 0.0
        %2817 = vadd.xlane.f32.xlu0 %v2816
        %v2818 = vpop.xlane.xlu0 %2817
        %v2819 = vsel %vm2813, %v2812, 0.0
        %2820 = vadd.xlane.f32.xlu0 %v2819
        %v2821 = vpop.xlane.xlu0 %2820
        %v2824 = vlaneseq
        %v2825 = vand.u32 %v2824, 127
        %v2826 = vperm.slane %v2818, %v2825
        %v2827 = vperm.slane %v2821, %v2825
        %vm2828 = vcmask 1041409
        %v2829 = vsel %vm2828, %v2827, %v2826
        %vm2831 = vcmask 25600
        %2832 = vst.msk [vmem:[%s220] sm:$0x3] %vm2831, %v2829
        %v2833 = vmul.f32 %v2811, %v2811
        %v2834 = vmul.f32 %v2812, %v2812
        %v2835 = vsel %vm2813, %v2833, 0.0
        %2836 = vadd.xlane.f32.xlu0 %v2835
        %v2837 = vpop.xlane.xlu0 %2836
        %v2838 = vsel %vm2813, %v2834, 0.0
        %2839 = vadd.xlane.f32.xlu0 %v2838
        %v2840 = vpop.xlane.xlu0 %2839
        %v2843 = vperm.slane %v2837, %v2825
        %v2844 = vperm.slane %v2840, %v2825
        %v2845 = vsel %vm2828, %v2844, %v2843
        %s2847 = scalar_lea.vmem %s220, 2
        %2848 = vst.msk [vmem:[%s2847] sm:$0x3] %vm2831, %v2845
        %p2849 = scmp.lt.s32.totalorder %s19, 1
        %s2850 = scalar_select %p2849, %s19, 1
        %s2851 = smul.addr %s2850, 2
        %s2852 = smul.addr %s2851, 4
        %s2853 = scalar_lea.vmem %s2, %s2852
        %p2854 = scmp.lt.s32.totalorder %s19, 1
        %s2855 = scalar_select %p2854, %s19, 1
        %s2856 = smul.addr %s2855, 2
        %s2857 = smul.addr %s2856, 2
        %s2858 = scalar_lea.vmem %s3, %s2857
        // Predicated region
        $region37: #{feature_layer_forward.2} parent=27 // pred_check
          %p2859 = pneg %p84
        $region38: #{feature_layer_forward.2} parent=27 // pred_check_branch
          %2861 = sbr.rel (%p2859) target = $region40
        $region39: #{feature_layer_forward.2} parent=27 // pred_region
          _
        $region40: #{feature_layer_forward.2} parent=27 // pred_fallthru
          _
        // Predicated region
        $region41: #{feature_layer_forward.2} parent=27 // pred_check
          %p2862 = pneg %p110
        $region42: #{feature_layer_forward.2} parent=27 // pred_check_branch
          %2864 = sbr.rel (%p2862) target = $region44
        $region43: #{feature_layer_forward.2} parent=27 // pred_region
          _
        $region44: #{feature_layer_forward.2} parent=27 // pred_fallthru
          _
      $region28: #{feature_layer_forward.2} parent=5 // pred_fallthru
        _
      %p2865 = scmp.le.s32.totalorder 2, %s14
      // Predicated region
      $region45: #{feature_layer_forward.2} parent=5 // pred_check
        %p2866 = pneg %p2865
      $region46: #{feature_layer_forward.2} parent=5 // pred_check_branch
        %2868 = sbr.rel (%p2866) target = $region48
      $region47: #{feature_layer_forward.2} parent=5 // pred_region
        %s2869 = ssub.s32 %s14, 2
        // Predicated region
        $region49: #{feature_layer_forward.2} parent=47 // pred_check
          %p2870 = pneg %p90
        $region50: #{feature_layer_forward.2} parent=47 // pred_check_branch
          %2872 = sbr.rel (%p2870) target = $region52
        $region51: #{feature_layer_forward.2} parent=47 // pred_region
          %p2873 = scmp.lt.s32.totalorder %s20, 1
          %s2874 = scalar_select %p2873, %s20, 1
          %s2875 = smul.addr %s2874, 2
          %s2876 = smul.addr %s2875, 4
          %s2877 = scalar_lea.vmem %s2, %s2876
        $region52: #{feature_layer_forward.2} parent=47 // pred_fallthru
          _
        // Predicated region
        $region53: #{feature_layer_forward.2} parent=47 // pred_check
          %p2878 = pneg %p116
        $region54: #{feature_layer_forward.2} parent=47 // pred_check_branch
          %2880 = sbr.rel (%p2878) target = $region56
        $region55: #{feature_layer_forward.2} parent=47 // pred_region
          %p2881 = scmp.lt.s32.totalorder %s20, 1
          %s2882 = scalar_select %p2881, %s20, 1
          %s2883 = smul.addr %s2882, 2
          %s2884 = smul.addr %s2883, 2
          %s2885 = scalar_lea.vmem %s3, %s2884
        $region56: #{feature_layer_forward.2} parent=47 // pred_fallthru
          _
      $region48: #{feature_layer_forward.2} parent=5 // pred_fallthru
        _
    $region6: #{feature_layer_forward.2} parent=1 // loop_footer
      %s18 = sadd.s32 1, %s14
    $region7: #{feature_layer_forward.2} parent=1 // loop_footer_branch
      %13 = sbr.rel target = $region3
    $region8: #{feature_layer_forward.2} parent=1 // loop_exit
      _
    %2886 = vsyncpa [#allocation3], 1
    %s2887 = scalar_lea.sflag [#allocation3], 1
    %2888 = vsyncpa %s2887, 1
    %2889 = vsyncpa [#allocation5], 1

</llo_original>
